<compile_context>
chip_gen: v7x
topology: tpu7x:2x2x1
jax: 0.10.0
libtpu: 0.0.40
codegen_flags: <defaults>
</compile_context>

<pallas_src>
import functools

import jax
import jax.numpy as jnp
from jax import lax
from jax.experimental import pallas as pl
from jax.experimental.pallas import tpu as pltpu


HEAD_NAMES = ("item", "action", "color", "size")


# -----------------------------------------------------------------------------
# Fused bidirectional LSTM layer kernel (whole sequence inside one kernel call)
# -----------------------------------------------------------------------------
def _bilstm_kernel(x_ref, win_ref, whh_ref, b_ref, len_ref, out_ref,
                   gx_ref, h_ref, c_ref, *, seq_len, hidden, emit_seq):
    T, B, D = x_ref.shape
    H = hidden
    G = 4 * H

    # Fused input projection for BOTH directions over all timesteps:
    #   (T*B, D) @ (D, 8H), bf16 operands, f32 accumulation on the MXU.
    x_all = x_ref[...].astype(jnp.bfloat16).reshape(T * B, D)
    gx = jnp.dot(x_all, win_ref[...], preferred_element_type=jnp.float32)
    gx_ref[...] = (gx + b_ref[...]).reshape(T, B, 2 * G)

    # Stacked state: rows [:B] = forward direction, rows [B:] = backward direction.
    h_ref[...] = jnp.zeros_like(h_ref)
    c_ref[...] = jnp.zeros_like(c_ref)

    lens = len_ref[...]                                                 # (B, 1) int32
    lens2 = jnp.concatenate([lens, lens], axis=0)                       # (2B, 1)
    is_fwd_row = jax.lax.broadcasted_iota(jnp.int32, (2 * B, 1), 0) < B  # (2B, 1) bool

    # Hoist recurrent weights out of the loop (loaded once, kept in vregs).
    w_f = whh_ref[0]                                                    # (H, 4H)
    w_b = whh_ref[1]                                                    # (H, 4H)

    def step(s, carry):
        t_f = s
        t_b = seq_len - 1 - s

        h = h_ref[...]                                                  # (2B, H)
        c = c_ref[...]                                                  # (2B, H)

        # Two small recurrent dots, back-to-back on the MXU.
        rec_f = jnp.dot(h[:B], w_f, preferred_element_type=jnp.float32)  # (B, 4H)
        rec_b = jnp.dot(h[B:], w_b, preferred_element_type=jnp.float32)  # (B, 4H)

        gx_f = gx_ref[t_f]                                              # (B, 8H)
        gx_b = gx_ref[t_b]                                              # (B, 8H)

        # Stack the two directions along the sublane axis: (2B, 4H).
        gates = jnp.concatenate([gx_f[:, :G] + rec_f,
                                 gx_b[:, G:] + rec_b], axis=0)

        # Gate order (i, f, o, g): one sigmoid slab, one tanh slab.
        sig = jax.nn.sigmoid(gates[:, :3 * H])                          # (2B, 3H)
        g = jnp.tanh(gates[:, 3 * H:])                                  # (2B, H)
        i_g = sig[:, :H]
        f_g = sig[:, H:2 * H]
        o_g = sig[:, 2 * H:]

        c_new = f_g * c + i_g * g
        h_new = o_g * jnp.tanh(c_new)

        # pack_padded_sequence semantics: only valid positions update the state.
        t_vec = jnp.where(is_fwd_row, t_f, t_b)                         # (2B, 1)
        mask = t_vec < lens2                                            # (2B, 1) bool
        h_ref[...] = jnp.where(mask, h_new, h)
        c_ref[...] = jnp.where(mask, c_new, c)

        if emit_seq:
            # fwd output at time t_f, bwd output at time t_b; padded steps are 0.
            out_ref[t_f, :, :H] = jnp.where(t_f < lens, h_new[:B], 0.0)
            out_ref[t_b, :, H:] = jnp.where(t_b < lens, h_new[B:], 0.0)
        return carry

    lax.fori_loop(0, seq_len, step, 0, unroll=True)

    if not emit_seq:
        # Final hidden = cat(h_fwd_final, h_bwd_final) == torch.cat(h[-2], h[-1]).
        out_ref[...] = jnp.concatenate([h_ref[:B], h_ref[B:]], axis=-1)


def bilstm_layer(x_tbd, w_in, w_hh, b, lengths, hidden, *, emit_seq):
    T, B, D = x_tbd.shape
    H = hidden
    kernel = functools.partial(_bilstm_kernel, seq_len=T, hidden=H, emit_seq=emit_seq)
    vmem = pl.BlockSpec(memory_space=pltpu.MemorySpace.VMEM)
    if emit_seq:
        out_shape = jax.ShapeDtypeStruct((T, B, 2 * H), jnp.float32)
    else:
        out_shape = jax.ShapeDtypeStruct((B, 2 * H), jnp.float32)
    return pl.pallas_call(
        kernel,
        out_shape=out_shape,
        in_specs=[vmem] * 5,
        out_specs=vmem,
        scratch_shapes=[pltpu.VMEM((T, B, 8 * H), jnp.float32),   # gx (both directions)
                        pltpu.VMEM((2 * B, H), jnp.float32),      # stacked h
                        pltpu.VMEM((2 * B, H), jnp.float32)],     # stacked c
    )(x_tbd, w_in, w_hh, b, lengths)


# -----------------------------------------------------------------------------
# Four linear heads fused into one padded matmul + lane-sliced softmaxes
# -----------------------------------------------------------------------------
def _heads_kernel(h_ref, w_ref, b_ref, o_ref, *, offsets, sizes):
    B = h_ref.shape[0]
    padded = o_ref.shape[1]
    logits = jnp.dot(h_ref[...], w_ref[...],
                     preferred_element_type=jnp.float32) + b_ref[...]   # (B, padded)
    parts = []
    for off, n in zip(offsets, sizes):
        z = logits[:, off:off + n]
        z = z - jnp.max(z, axis=-1, keepdims=True)
        e = jnp.exp(z)
        inv = pl.reciprocal(jnp.sum(e, axis=-1, keepdims=True), approx=True)
        parts.append(e * inv)
    used = sum(sizes)
    if padded > used:
        parts.append(jnp.zeros((B, padded - used), jnp.float32))
    o_ref[...] = jnp.concatenate(parts, axis=-1)                        # lane-dense store


def heads_forward(hidden, w_all, b_all, sizes):
    B = hidden.shape[0]
    padded = w_all.shape[1]
    offsets, off = [], 0
    for n in sizes:
        offsets.append(off)
        off += n
    kernel = functools.partial(_heads_kernel, offsets=tuple(offsets), sizes=tuple(sizes))
    vmem = pl.BlockSpec(memory_space=pltpu.MemorySpace.VMEM)
    return pl.pallas_call(
        kernel,
        out_shape=jax.ShapeDtypeStruct((B, padded), jnp.float32),
        in_specs=[vmem] * 3,
        out_specs=vmem,
    )(hidden, w_all, b_all)


# -----------------------------------------------------------------------------
# Full classifier forward (glue in plain JAX, hot paths in Pallas)
# -----------------------------------------------------------------------------
def classifier_forward(params, text, text_lengths, *, hidden_dim, n_layers, output_dims):
    # Embedding lookup (data-dependent gather) — plain JAX.
    emb = params["embedding"][text]                            # (B, T, E)
    x = jnp.transpose(emb, (1, 0, 2)).astype(jnp.float32)      # time-major (T, B, E)
    lengths = text_lengths.astype(jnp.int32).reshape(-1, 1)    # (B, 1)

    for layer in range(n_layers):
        w_in, w_hh, b = params["lstm"][layer]
        last = layer == n_layers - 1
        # Non-last layers emit the (T, B, 2H) sequence (input to the next layer);
        # the last layer emits only the (B, 2H) final hidden state.
        x = bilstm_layer(x, w_in, w_hh, b, lengths, hidden_dim, emit_seq=not last)

    hidden = x                                                 # (B, 2H)

    sizes = tuple(output_dims[n] for n in HEAD_NAMES)
    probs = heads_forward(hidden, params["heads_w"], params["heads_b"], sizes)
    outs, off = [], 0
    for n in sizes:
        outs.append(probs[:, off:off + n])
        off += n
    return outs


# -----------------------------------------------------------------------------
# Deterministic parameter init (shapes follow nn.Embedding / nn.LSTM / nn.Linear)
# -----------------------------------------------------------------------------
def _reorder_ifgo_to_ifog(w, H):
    # PyTorch nn.LSTM packs gates as (i, f, g, o) along the 4H axis; the kernel
    # wants (i, f, o, g) so sigmoid/tanh each cover one contiguous slab.
    return jnp.concatenate([w[..., :2 * H], w[..., 3 * H:], w[..., 2 * H:3 * H]], axis=-1)


def init_params(key, vocab_size, embedding_dim, hidden_dim, output_dims, n_layers):
    H = hidden_dim
    keys = iter(jax.random.split(key, 1 + 8 * n_layers + 2 * len(HEAD_NAMES)))

    def unif(k, shape, scale):
        return jax.random.uniform(k, shape, jnp.float32, -scale, scale)

    params = {"embedding": jax.random.normal(next(keys), (vocab_size, embedding_dim),
                                             jnp.float32)}

    s = 1.0 / (H ** 0.5)
    layers = []
    for layer in range(n_layers):
        d_in = embedding_dim if layer == 0 else 2 * H
        w_in_dirs, w_hh_dirs, b_dirs = [], [], []
        for _ in ("fwd", "bwd"):
            # Generated in (transposed) PyTorch layout, then gate-permuted for the kernel.
            w_ih = _reorder_ifgo_to_ifog(unif(next(keys), (d_in, 4 * H), s), H)
            w_hh = _reorder_ifgo_to_ifog(unif(next(keys), (H, 4 * H), s), H)
            b_ih = unif(next(keys), (1, 4 * H), s)
            b_hh = unif(next(keys), (1, 4 * H), s)
            w_in_dirs.append(w_ih)
            w_hh_dirs.append(w_hh)
            b_dirs.append(_reorder_ifgo_to_ifog(b_ih + b_hh, H))
        layers.append((
            jnp.concatenate(w_in_dirs, axis=1).astype(jnp.bfloat16),  # (D, 8H)  bf16 MXU operand
            jnp.stack(w_hh_dirs, axis=0),                             # (2, H, 4H) f32
            jnp.concatenate(b_dirs, axis=1),                          # (1, 8H)  f32 (= b_ih + b_hh)
        ))
    params["lstm"] = layers

    # Heads: one (2H, padded) weight slab (padded to 128 lanes) holding all four heads.
    s2 = 1.0 / ((2 * H) ** 0.5)
    sizes = [output_dims[n] for n in HEAD_NAMES]
    total = sum(sizes)
    padded = ((total + 127) // 128) * 128
    w_all = jnp.zeros((2 * H, padded), jnp.float32)
    b_all = jnp.zeros((1, padded), jnp.float32)
    off = 0
    for n in sizes:
        w_all = w_all.at[:, off:off + n].set(unif(next(keys), (2 * H, n), s2))
        b_all = b_all.at[:, off:off + n].set(unif(next(keys), (1, n), s2))
        off += n
    params["heads_w"] = w_all
    params["heads_b"] = b_all
    return params


if __name__ == "__main__":
    vocab_size = 50
    embedding_dim = 64
    hidden_dim = 32
    n_layers = 2
    output_dims = {"item": 8, "action": 4, "color": 6, "size": 3}

    B, T = 2, 8
    key = jax.random.PRNGKey(0)
    k_text, k_params = jax.random.split(key)

    text = jax.random.randint(k_text, (B, T), 0, vocab_size, dtype=jnp.int32)
    # pack_padded_sequence (enforce_sorted=True) expects descending lengths
    text_lengths = jnp.array([8, 5], dtype=jnp.int32)

    params = init_params(k_params, vocab_size, embedding_dim, hidden_dim,
                         output_dims, n_layers)

    outs = classifier_forward(params, text, text_lengths, hidden_dim=hidden_dim,
                              n_layers=n_layers, output_dims=output_dims)
    outs = jax.block_until_ready(outs)

    # Sanity: each head output is (B, n_classes) and rows sum to ~1 (softmax with
    # approximate reciprocal on the EUP).
    for name, o in zip(HEAD_NAMES, outs):
        assert o.shape == (B, output_dims[name]), (name, o.shape)
        assert jnp.allclose(jnp.sum(o, axis=1), 1.0, atol=1e-2), name

    print("KERNEL_OK")
</pallas_src>

<mosaic_0001>
module attributes {stable_mosaic.version = 11 : i64} {
  func.func @_bilstm_kernel(%arg0: memref<8x2x64xf32, #tpu.memory_space<vmem>>, %arg1: memref<64x256xbf16, #tpu.memory_space<vmem>>, %arg2: memref<2x32x128xf32, #tpu.memory_space<vmem>>, %arg3: memref<1x256xf32, #tpu.memory_space<vmem>>, %arg4: memref<2x1xi32, #tpu.memory_space<vmem>>, %arg5: memref<8x2x64xf32, #tpu.memory_space<vmem>>, %arg6: memref<8x2x256xf32, #tpu.memory_space<vmem>>, %arg7: memref<4x32xf32, #tpu.memory_space<vmem>>, %arg8: memref<4x32xf32, #tpu.memory_space<vmem>>) attributes {dimension_semantics = [], scalar_prefetch = 0 : i64, scratch_operands = 3 : i64, tpu.core_type = #tpu.core_type<tc>} {
    %c0 = arith.constant 0 : index
    %c0_0 = arith.constant 0 : index
    %c0_1 = arith.constant 0 : index
    %0 = vector.load %arg0[%c0, %c0_0, %c0_1] : memref<8x2x64xf32, #tpu.memory_space<vmem>>, vector<8x2x64xf32>
    %1 = arith.truncf %0 : vector<8x2x64xf32> to vector<8x2x64xbf16>
    %2 = vector.shape_cast %1 : vector<8x2x64xbf16> to vector<16x64xbf16>
    %c0_2 = arith.constant 0 : index
    %c0_3 = arith.constant 0 : index
    %3 = vector.load %arg1[%c0_2, %c0_3] : memref<64x256xbf16, #tpu.memory_space<vmem>>, vector<64x256xbf16>
    %cst = arith.constant dense<0.000000e+00> : vector<16x256xf32>
    %4 = tpu.matmul %2, %3, %cst {dimension_numbers = #tpu.dot_dimension_numbers<[1], [0], [0], [1], [0, 0, 1, 1], [], []>} : vector<16x64xbf16>, vector<64x256xbf16>, vector<16x256xf32> -> vector<16x256xf32>
    %c0_4 = arith.constant 0 : index
    %c0_5 = arith.constant 0 : index
    %5 = vector.load %arg3[%c0_4, %c0_5] : memref<1x256xf32, #tpu.memory_space<vmem>>, vector<1x256xf32>
    %6 = vector.broadcast %5 : vector<1x256xf32> to vector<16x256xf32>
    %7 = arith.addf %4, %6 : vector<16x256xf32>
    %8 = vector.shape_cast %7 : vector<16x256xf32> to vector<8x2x256xf32>
    %c0_6 = arith.constant 0 : index
    %c0_7 = arith.constant 0 : index
    %c0_8 = arith.constant 0 : index
    %9 = vector.load %arg6[%c0_6, %c0_7, %c0_8] : memref<8x2x256xf32, #tpu.memory_space<vmem>>, vector<8x2x256xf32>
    tpu.vector_store %arg6[%c0_6, %c0_7, %c0_8], %8 {strides = array<i32>} : memref<8x2x256xf32, #tpu.memory_space<vmem>>, vector<8x2x256xf32>,
    %cst_9 = arith.constant 0.000000e+00 : f32
    %10 = vector.broadcast %cst_9 : f32 to vector<4x32xf32>
    %c0_10 = arith.constant 0 : index
    %c0_11 = arith.constant 0 : index
    %11 = vector.load %arg7[%c0_10, %c0_11] : memref<4x32xf32, #tpu.memory_space<vmem>>, vector<4x32xf32>
    tpu.vector_store %arg7[%c0_10, %c0_11], %10 {strides = array<i32>} : memref<4x32xf32, #tpu.memory_space<vmem>>, vector<4x32xf32>,
    %cst_12 = arith.constant 0.000000e+00 : f32
    %12 = vector.broadcast %cst_12 : f32 to vector<4x32xf32>
    %c0_13 = arith.constant 0 : index
    %c0_14 = arith.constant 0 : index
    %13 = vector.load %arg8[%c0_13, %c0_14] : memref<4x32xf32, #tpu.memory_space<vmem>>, vector<4x32xf32>
    tpu.vector_store %arg8[%c0_13, %c0_14], %12 {strides = array<i32>} : memref<4x32xf32, #tpu.memory_space<vmem>>, vector<4x32xf32>,
    %c0_15 = arith.constant 0 : index
    %c0_16 = arith.constant 0 : index
    %14 = vector.load %arg4[%c0_15, %c0_16] : memref<2x1xi32, #tpu.memory_space<vmem>>, vector<2x1xi32>
    %15 = tpu.concatenate %14, %14 in 0 : vector<2x1xi32>, vector<2x1xi32> -> vector<4x1xi32>
    %16 = tpu.iota {dimensions = array<i32: 0>} : vector<4x1xi32>
    %c2_i32 = arith.constant 2 : i32
    %17 = vector.broadcast %c2_i32 : i32 to vector<4x1xi32>
    %18 = arith.cmpi slt, %16, %17 : vector<4x1xi32>
    %c0_17 = arith.constant 0 : index
    %c0_18 = arith.constant 0 : index
    %c0_19 = arith.constant 0 : index
    %19 = vector.load %arg2[%c0_17, %c0_18, %c0_19] : memref<2x32x128xf32, #tpu.memory_space<vmem>>, vector<1x32x128xf32>
    %20 = vector.shape_cast %19 : vector<1x32x128xf32> to vector<32x128xf32>
    %c1 = arith.constant 1 : index
    %c0_20 = arith.constant 0 : index
    %c0_21 = arith.constant 0 : index
    %21 = vector.load %arg2[%c1, %c0_20, %c0_21] : memref<2x32x128xf32, #tpu.memory_space<vmem>>, vector<1x32x128xf32>
    %22 = vector.shape_cast %21 : vector<1x32x128xf32> to vector<32x128xf32>
    %c0_i32 = arith.constant 0 : i32
    %c7_i32 = arith.constant 7 : i32
    %23 = arith.subi %c7_i32, %c0_i32 : i32
    %c0_22 = arith.constant 0 : index
    %c0_23 = arith.constant 0 : index
    %24 = vector.load %arg7[%c0_22, %c0_23] : memref<4x32xf32, #tpu.memory_space<vmem>>, vector<4x32xf32>
    %c0_24 = arith.constant 0 : index
    %c0_25 = arith.constant 0 : index
    %25 = vector.load %arg8[%c0_24, %c0_25] : memref<4x32xf32, #tpu.memory_space<vmem>>, vector<4x32xf32>
    %26 = vector.extract_strided_slice %24 {offsets = [0, 0], sizes = [2, 32], strides = [1, 1]} : vector<4x32xf32> to vector<2x32xf32>
    %cst_26 = arith.constant dense<0.000000e+00> : vector<2x128xf32>
    %27 = tpu.matmul %26, %20, %cst_26 {dimension_numbers = #tpu.dot_dimension_numbers<[1], [0], [0], [1], [0, 0, 1, 1], [], []>} : vector<2x32xf32>, vector<32x128xf32>, vector<2x128xf32> -> vector<2x128xf32>
    %28 = vector.extract_strided_slice %24 {offsets = [2, 0], sizes = [2, 32], strides = [1, 1]} : vector<4x32xf32> to vector<2x32xf32>
    %cst_27 = arith.constant dense<0.000000e+00> : vector<2x128xf32>
    %29 = tpu.matmul %28, %22, %cst_27 {dimension_numbers = #tpu.dot_dimension_numbers<[1], [0], [0], [1], [0, 0, 1, 1], [], []>} : vector<2x32xf32>, vector<32x128xf32>, vector<2x128xf32> -> vector<2x128xf32>
    %30 = arith.index_cast %c0_i32 : i32 to index
    %c0_28 = arith.constant 0 : index
    %c0_29 = arith.constant 0 : index
    %31 = vector.load %arg6[%30, %c0_28, %c0_29] : memref<8x2x256xf32, #tpu.memory_space<vmem>>, vector<1x2x256xf32>
    %32 = vector.shape_cast %31 : vector<1x2x256xf32> to vector<2x256xf32>
    %33 = arith.index_cast %23 : i32 to index
    %c0_30 = arith.constant 0 : index
    %c0_31 = arith.constant 0 : index
    %34 = vector.load %arg6[%33, %c0_30, %c0_31] : memref<8x2x256xf32, #tpu.memory_space<vmem>>, vector<1x2x256xf32>
    %35 = vector.shape_cast %34 : vector<1x2x256xf32> to vector<2x256xf32>
    %36 = vector.extract_strided_slice %32 {offsets = [0, 0], sizes = [2, 128], strides = [1, 1]} : vector<2x256xf32> to vector<2x128xf32>
    %37 = arith.addf %36, %27 : vector<2x128xf32>
    %38 = vector.extract_strided_slice %35 {offsets = [0, 128], sizes = [2, 128], strides = [1, 1]} : vector<2x256xf32> to vector<2x128xf32>
    %39 = arith.addf %38, %29 : vector<2x128xf32>
    %40 = tpu.concatenate %37, %39 in 0 : vector<2x128xf32>, vector<2x128xf32> -> vector<4x128xf32>
    %41 = vector.extract_strided_slice %40 {offsets = [0, 0], sizes = [4, 96], strides = [1, 1]} : vector<4x128xf32> to vector<4x96xf32>
    %42 = arith.negf %41 : vector<4x96xf32>
    %43 = math.exp %42 : vector<4x96xf32>
    %cst_32 = arith.constant 1.000000e+00 : f32
    %44 = vector.broadcast %cst_32 : f32 to vector<4x96xf32>
    %45 = arith.addf %44, %43 : vector<4x96xf32>
    %46 = arith.divf %44, %45 : vector<4x96xf32>
    %47 = vector.extract_strided_slice %40 {offsets = [0, 96], sizes = [4, 32], strides = [1, 1]} : vector<4x128xf32> to vector<4x32xf32>
    %48 = math.tanh %47 : vector<4x32xf32>
    %49 = vector.extract_strided_slice %46 {offsets = [0, 0], sizes = [4, 32], strides = [1, 1]} : vector<4x96xf32> to vector<4x32xf32>
    %50 = vector.extract_strided_slice %46 {offsets = [0, 32], sizes = [4, 32], strides = [1, 1]} : vector<4x96xf32> to vector<4x32xf32>
    %51 = vector.extract_strided_slice %46 {offsets = [0, 64], sizes = [4, 32], strides = [1, 1]} : vector<4x96xf32> to vector<4x32xf32>
    %52 = arith.mulf %50, %25 : vector<4x32xf32>
    %53 = arith.mulf %49, %48 : vector<4x32xf32>
    %54 = arith.addf %52, %53 : vector<4x32xf32>
    %55 = math.tanh %54 : vector<4x32xf32>
    %56 = arith.mulf %51, %55 : vector<4x32xf32>
    %57 = vector.broadcast %c0_i32 : i32 to vector<4x1xi32>
    %58 = vector.broadcast %23 : i32 to vector<4x1xi32>
    %59 = arith.select %18, %57, %58 : vector<4x1xi1>, vector<4x1xi32>
    %60 = arith.cmpi slt, %59, %15 : vector<4x1xi32>
    %61 = vector.shape_cast %60 : vector<4x1xi1> to vector<4x1xi1>
    %62 = vector.broadcast %61 : vector<4x1xi1> to vector<4x32xi1>
    %63 = arith.select %62, %56, %24 : vector<4x32xi1>, vector<4x32xf32>
    %c0_33 = arith.constant 0 : index
    %c0_34 = arith.constant 0 : index
    %64 = vector.load %arg7[%c0_33, %c0_34] : memref<4x32xf32, #tpu.memory_space<vmem>>, vector<4x32xf32>
    tpu.vector_store %arg7[%c0_33, %c0_34], %63 {strides = array<i32>} : memref<4x32xf32, #tpu.memory_space<vmem>>, vector<4x32xf32>,
    %65 = vector.shape_cast %60 : vector<4x1xi1> to vector<4x1xi1>
    %66 = vector.broadcast %65 : vector<4x1xi1> to vector<4x32xi1>
    %67 = arith.select %66, %54, %25 : vector<4x32xi1>, vector<4x32xf32>
    %c0_35 = arith.constant 0 : index
    %c0_36 = arith.constant 0 : index
    %68 = vector.load %arg8[%c0_35, %c0_36] : memref<4x32xf32, #tpu.memory_space<vmem>>, vector<4x32xf32>
    tpu.vector_store %arg8[%c0_35, %c0_36], %67 {strides = array<i32>} : memref<4x32xf32, #tpu.memory_space<vmem>>, vector<4x32xf32>,
    %69 = vector.broadcast %c0_i32 : i32 to vector<2x1xi32>
    %70 = arith.cmpi slt, %69, %14 : vector<2x1xi32>
    %71 = vector.extract_strided_slice %56 {offsets = [0, 0], sizes = [2, 32], strides = [1, 1]} : vector<4x32xf32> to vector<2x32xf32>
    %cst_37 = arith.constant 0.000000e+00 : f32
    %72 = vector.shape_cast %70 : vector<2x1xi1> to vector<2x1xi1>
    %73 = vector.broadcast %72 : vector<2x1xi1> to vector<2x32xi1>
    %74 = vector.broadcast %cst_37 : f32 to vector<2x32xf32>
    %75 = arith.select %73, %71, %74 : vector<2x32xi1>, vector<2x32xf32>
    %76 = arith.index_cast %c0_i32 : i32 to index
    %c0_38 = arith.constant 0 : index
    %c0_39 = arith.constant 0 : index
    %77 = vector.load %arg5[%76, %c0_38, %c0_39] : memref<8x2x64xf32, #tpu.memory_space<vmem>>, vector<1x2x32xf32>
    %78 = vector.shape_cast %77 : vector<1x2x32xf32> to vector<2x32xf32>
    %79 = vector.shape_cast %75 : vector<2x32xf32> to vector<1x2x32xf32>
    tpu.vector_store %arg5[%76, %c0_38, %c0_39], %79 {strides = array<i32>} : memref<8x2x64xf32, #tpu.memory_space<vmem>>, vector<1x2x32xf32>,
    %80 = vector.broadcast %23 : i32 to vector<2x1xi32>
    %81 = arith.cmpi slt, %80, %14 : vector<2x1xi32>
    %82 = vector.extract_strided_slice %56 {offsets = [2, 0], sizes = [2, 32], strides = [1, 1]} : vector<4x32xf32> to vector<2x32xf32>
    %cst_40 = arith.constant 0.000000e+00 : f32
    %83 = vector.shape_cast %81 : vector<2x1xi1> to vector<2x1xi1>
    %84 = vector.broadcast %83 : vector<2x1xi1> to vector<2x32xi1>
    %85 = vector.broadcast %cst_40 : f32 to vector<2x32xf32>
    %86 = arith.select %84, %82, %85 : vector<2x32xi1>, vector<2x32xf32>
    %87 = arith.index_cast %23 : i32 to index
    %c0_41 = arith.constant 0 : index
    %c32 = arith.constant 32 : index
    %88 = vector.load %arg5[%87, %c0_41, %c32] : memref<8x2x64xf32, #tpu.memory_space<vmem>>, vector<1x2x32xf32>
    %89 = vector.shape_cast %88 : vector<1x2x32xf32> to vector<2x32xf32>
    %90 = vector.shape_cast %86 : vector<2x32xf32> to vector<1x2x32xf32>
    tpu.vector_store %arg5[%87, %c0_41, %c32], %90 {strides = array<i32>} : memref<8x2x64xf32, #tpu.memory_space<vmem>>, vector<1x2x32xf32>,
    %c1_i32 = arith.constant 1 : i32
    %c7_i32_42 = arith.constant 7 : i32
    %91 = arith.subi %c7_i32_42, %c1_i32 : i32
    %c0_43 = arith.constant 0 : index
    %c0_44 = arith.constant 0 : index
    %92 = vector.load %arg7[%c0_43, %c0_44] : memref<4x32xf32, #tpu.memory_space<vmem>>, vector<4x32xf32>
    %c0_45 = arith.constant 0 : index
    %c0_46 = arith.constant 0 : index
    %93 = vector.load %arg8[%c0_45, %c0_46] : memref<4x32xf32, #tpu.memory_space<vmem>>, vector<4x32xf32>
    %94 = vector.extract_strided_slice %92 {offsets = [0, 0], sizes = [2, 32], strides = [1, 1]} : vector<4x32xf32> to vector<2x32xf32>
    %cst_47 = arith.constant dense<0.000000e+00> : vector<2x128xf32>
    %95 = tpu.matmul %94, %20, %cst_47 {dimension_numbers = #tpu.dot_dimension_numbers<[1], [0], [0], [1], [0, 0, 1, 1], [], []>} : vector<2x32xf32>, vector<32x128xf32>, vector<2x128xf32> -> vector<2x128xf32>
    %96 = vector.extract_strided_slice %92 {offsets = [2, 0], sizes = [2, 32], strides = [1, 1]} : vector<4x32xf32> to vector<2x32xf32>
    %cst_48 = arith.constant dense<0.000000e+00> : vector<2x128xf32>
    %97 = tpu.matmul %96, %22, %cst_48 {dimension_numbers = #tpu.dot_dimension_numbers<[1], [0], [0], [1], [0, 0, 1, 1], [], []>} : vector<2x32xf32>, vector<32x128xf32>, vector<2x128xf32> -> vector<2x128xf32>
    %98 = arith.index_cast %c1_i32 : i32 to index
    %c0_49 = arith.constant 0 : index
    %c0_50 = arith.constant 0 : index
    %99 = vector.load %arg6[%98, %c0_49, %c0_50] : memref<8x2x256xf32, #tpu.memory_space<vmem>>, vector<1x2x256xf32>
    %100 = vector.shape_cast %99 : vector<1x2x256xf32> to vector<2x256xf32>
    %101 = arith.index_cast %91 : i32 to index
    %c0_51 = arith.constant 0 : index
    %c0_52 = arith.constant 0 : index
    %102 = vector.load %arg6[%101, %c0_51, %c0_52] : memref<8x2x256xf32, #tpu.memory_space<vmem>>, vector<1x2x256xf32>
    %103 = vector.shape_cast %102 : vector<1x2x256xf32> to vector<2x256xf32>
    %104 = vector.extract_strided_slice %100 {offsets = [0, 0], sizes = [2, 128], strides = [1, 1]} : vector<2x256xf32> to vector<2x128xf32>
    %105 = arith.addf %104, %95 : vector<2x128xf32>
    %106 = vector.extract_strided_slice %103 {offsets = [0, 128], sizes = [2, 128], strides = [1, 1]} : vector<2x256xf32> to vector<2x128xf32>
    %107 = arith.addf %106, %97 : vector<2x128xf32>
    %108 = tpu.concatenate %105, %107 in 0 : vector<2x128xf32>, vector<2x128xf32> -> vector<4x128xf32>
    %109 = vector.extract_strided_slice %108 {offsets = [0, 0], sizes = [4, 96], strides = [1, 1]} : vector<4x128xf32> to vector<4x96xf32>
    %110 = arith.negf %109 : vector<4x96xf32>
    %111 = math.exp %110 : vector<4x96xf32>
    %cst_53 = arith.constant 1.000000e+00 : f32
    %112 = vector.broadcast %cst_53 : f32 to vector<4x96xf32>
    %113 = arith.addf %112, %111 : vector<4x96xf32>
    %114 = arith.divf %112, %113 : vector<4x96xf32>
    %115 = vector.extract_strided_slice %108 {offsets = [0, 96], sizes = [4, 32], strides = [1, 1]} : vector<4x128xf32> to vector<4x32xf32>
    %116 = math.tanh %115 : vector<4x32xf32>
    %117 = vector.extract_strided_slice %114 {offsets = [0, 0], sizes = [4, 32], strides = [1, 1]} : vector<4x96xf32> to vector<4x32xf32>
    %118 = vector.extract_strided_slice %114 {offsets = [0, 32], sizes = [4, 32], strides = [1, 1]} : vector<4x96xf32> to vector<4x32xf32>
    %119 = vector.extract_strided_slice %114 {offsets = [0, 64], sizes = [4, 32], strides = [1, 1]} : vector<4x96xf32> to vector<4x32xf32>
    %120 = arith.mulf %118, %93 : vector<4x32xf32>
    %121 = arith.mulf %117, %116 : vector<4x32xf32>
    %122 = arith.addf %120, %121 : vector<4x32xf32>
    %123 = math.tanh %122 : vector<4x32xf32>
    %124 = arith.mulf %119, %123 : vector<4x32xf32>
    %125 = vector.broadcast %c1_i32 : i32 to vector<4x1xi32>
    %126 = vector.broadcast %91 : i32 to vector<4x1xi32>
    %127 = arith.select %18, %125, %126 : vector<4x1xi1>, vector<4x1xi32>
    %128 = arith.cmpi slt, %127, %15 : vector<4x1xi32>
    %129 = vector.shape_cast %128 : vector<4x1xi1> to vector<4x1xi1>
    %130 = vector.broadcast %129 : vector<4x1xi1> to vector<4x32xi1>
    %131 = arith.select %130, %124, %92 : vector<4x32xi1>, vector<4x32xf32>
    %c0_54 = arith.constant 0 : index
    %c0_55 = arith.constant 0 : index
    %132 = vector.load %arg7[%c0_54, %c0_55] : memref<4x32xf32, #tpu.memory_space<vmem>>, vector<4x32xf32>
    tpu.vector_store %arg7[%c0_54, %c0_55], %131 {strides = array<i32>} : memref<4x32xf32, #tpu.memory_space<vmem>>, vector<4x32xf32>,
    %133 = vector.shape_cast %128 : vector<4x1xi1> to vector<4x1xi1>
    %134 = vector.broadcast %133 : vector<4x1xi1> to vector<4x32xi1>
    %135 = arith.select %134, %122, %93 : vector<4x32xi1>, vector<4x32xf32>
    %c0_56 = arith.constant 0 : index
    %c0_57 = arith.constant 0 : index
    %136 = vector.load %arg8[%c0_56, %c0_57] : memref<4x32xf32, #tpu.memory_space<vmem>>, vector<4x32xf32>
    tpu.vector_store %arg8[%c0_56, %c0_57], %135 {strides = array<i32>} : memref<4x32xf32, #tpu.memory_space<vmem>>, vector<4x32xf32>,
    %137 = vector.broadcast %c1_i32 : i32 to vector<2x1xi32>
    %138 = arith.cmpi slt, %137, %14 : vector<2x1xi32>
    %139 = vector.extract_strided_slice %124 {offsets = [0, 0], sizes = [2, 32], strides = [1, 1]} : vector<4x32xf32> to vector<2x32xf32>
    %cst_58 = arith.constant 0.000000e+00 : f32
    %140 = vector.shape_cast %138 : vector<2x1xi1> to vector<2x1xi1>
    %141 = vector.broadcast %140 : vector<2x1xi1> to vector<2x32xi1>
    %142 = vector.broadcast %cst_58 : f32 to vector<2x32xf32>
    %143 = arith.select %141, %139, %142 : vector<2x32xi1>, vector<2x32xf32>
    %144 = arith.index_cast %c1_i32 : i32 to index
    %c0_59 = arith.constant 0 : index
    %c0_60 = arith.constant 0 : index
    %145 = vector.load %arg5[%144, %c0_59, %c0_60] : memref<8x2x64xf32, #tpu.memory_space<vmem>>, vector<1x2x32xf32>
    %146 = vector.shape_cast %145 : vector<1x2x32xf32> to vector<2x32xf32>
    %147 = vector.shape_cast %143 : vector<2x32xf32> to vector<1x2x32xf32>
    tpu.vector_store %arg5[%144, %c0_59, %c0_60], %147 {strides = array<i32>} : memref<8x2x64xf32, #tpu.memory_space<vmem>>, vector<1x2x32xf32>,
    %148 = vector.broadcast %91 : i32 to vector<2x1xi32>
    %149 = arith.cmpi slt, %148, %14 : vector<2x1xi32>
    %150 = vector.extract_strided_slice %124 {offsets = [2, 0], sizes = [2, 32], strides = [1, 1]} : vector<4x32xf32> to vector<2x32xf32>
    %cst_61 = arith.constant 0.000000e+00 : f32
    %151 = vector.shape_cast %149 : vector<2x1xi1> to vector<2x1xi1>
    %152 = vector.broadcast %151 : vector<2x1xi1> to vector<2x32xi1>
    %153 = vector.broadcast %cst_61 : f32 to vector<2x32xf32>
    %154 = arith.select %152, %150, %153 : vector<2x32xi1>, vector<2x32xf32>
    %155 = arith.index_cast %91 : i32 to index
    %c0_62 = arith.constant 0 : index
    %c32_63 = arith.constant 32 : index
    %156 = vector.load %arg5[%155, %c0_62, %c32_63] : memref<8x2x64xf32, #tpu.memory_space<vmem>>, vector<1x2x32xf32>
    %157 = vector.shape_cast %156 : vector<1x2x32xf32> to vector<2x32xf32>
    %158 = vector.shape_cast %154 : vector<2x32xf32> to vector<1x2x32xf32>
    tpu.vector_store %arg5[%155, %c0_62, %c32_63], %158 {strides = array<i32>} : memref<8x2x64xf32, #tpu.memory_space<vmem>>, vector<1x2x32xf32>,
    %c2_i32_64 = arith.constant 2 : i32
    %c7_i32_65 = arith.constant 7 : i32
    %159 = arith.subi %c7_i32_65, %c2_i32_64 : i32
    %c0_66 = arith.constant 0 : index
    %c0_67 = arith.constant 0 : index
    %160 = vector.load %arg7[%c0_66, %c0_67] : memref<4x32xf32, #tpu.memory_space<vmem>>, vector<4x32xf32>
    %c0_68 = arith.constant 0 : index
    %c0_69 = arith.constant 0 : index
    %161 = vector.load %arg8[%c0_68, %c0_69] : memref<4x32xf32, #tpu.memory_space<vmem>>, vector<4x32xf32>
    %162 = vector.extract_strided_slice %160 {offsets = [0, 0], sizes = [2, 32], strides = [1, 1]} : vector<4x32xf32> to vector<2x32xf32>
    %cst_70 = arith.constant dense<0.000000e+00> : vector<2x128xf32>
    %163 = tpu.matmul %162, %20, %cst_70 {dimension_numbers = #tpu.dot_dimension_numbers<[1], [0], [0], [1], [0, 0, 1, 1], [], []>} : vector<2x32xf32>, vector<32x128xf32>, vector<2x128xf32> -> vector<2x128xf32>
    %164 = vector.extract_strided_slice %160 {offsets = [2, 0], sizes = [2, 32], strides = [1, 1]} : vector<4x32xf32> to vector<2x32xf32>
    %cst_71 = arith.constant dense<0.000000e+00> : vector<2x128xf32>
    %165 = tpu.matmul %164, %22, %cst_71 {dimension_numbers = #tpu.dot_dimension_numbers<[1], [0], [0], [1], [0, 0, 1, 1], [], []>} : vector<2x32xf32>, vector<32x128xf32>, vector<2x128xf32> -> vector<2x128xf32>
    %166 = arith.index_cast %c2_i32_64 : i32 to index
    %c0_72 = arith.constant 0 : index
    %c0_73 = arith.constant 0 : index
    %167 = vector.load %arg6[%166, %c0_72, %c0_73] : memref<8x2x256xf32, #tpu.memory_space<vmem>>, vector<1x2x256xf32>
    %168 = vector.shape_cast %167 : vector<1x2x256xf32> to vector<2x256xf32>
    %169 = arith.index_cast %159 : i32 to index
    %c0_74 = arith.constant 0 : index
    %c0_75 = arith.constant 0 : index
    %170 = vector.load %arg6[%169, %c0_74, %c0_75] : memref<8x2x256xf32, #tpu.memory_space<vmem>>, vector<1x2x256xf32>
    %171 = vector.shape_cast %170 : vector<1x2x256xf32> to vector<2x256xf32>
    %172 = vector.extract_strided_slice %168 {offsets = [0, 0], sizes = [2, 128], strides = [1, 1]} : vector<2x256xf32> to vector<2x128xf32>
    %173 = arith.addf %172, %163 : vector<2x128xf32>
    %174 = vector.extract_strided_slice %171 {offsets = [0, 128], sizes = [2, 128], strides = [1, 1]} : vector<2x256xf32> to vector<2x128xf32>
    %175 = arith.addf %174, %165 : vector<2x128xf32>
    %176 = tpu.concatenate %173, %175 in 0 : vector<2x128xf32>, vector<2x128xf32> -> vector<4x128xf32>
    %177 = vector.extract_strided_slice %176 {offsets = [0, 0], sizes = [4, 96], strides = [1, 1]} : vector<4x128xf32> to vector<4x96xf32>
    %178 = arith.negf %177 : vector<4x96xf32>
    %179 = math.exp %178 : vector<4x96xf32>
    %cst_76 = arith.constant 1.000000e+00 : f32
    %180 = vector.broadcast %cst_76 : f32 to vector<4x96xf32>
    %181 = arith.addf %180, %179 : vector<4x96xf32>
    %182 = arith.divf %180, %181 : vector<4x96xf32>
    %183 = vector.extract_strided_slice %176 {offsets = [0, 96], sizes = [4, 32], strides = [1, 1]} : vector<4x128xf32> to vector<4x32xf32>
    %184 = math.tanh %183 : vector<4x32xf32>
    %185 = vector.extract_strided_slice %182 {offsets = [0, 0], sizes = [4, 32], strides = [1, 1]} : vector<4x96xf32> to vector<4x32xf32>
    %186 = vector.extract_strided_slice %182 {offsets = [0, 32], sizes = [4, 32], strides = [1, 1]} : vector<4x96xf32> to vector<4x32xf32>
    %187 = vector.extract_strided_slice %182 {offsets = [0, 64], sizes = [4, 32], strides = [1, 1]} : vector<4x96xf32> to vector<4x32xf32>
    %188 = arith.mulf %186, %161 : vector<4x32xf32>
    %189 = arith.mulf %185, %184 : vector<4x32xf32>
    %190 = arith.addf %188, %189 : vector<4x32xf32>
    %191 = math.tanh %190 : vector<4x32xf32>
    %192 = arith.mulf %187, %191 : vector<4x32xf32>
    %193 = vector.broadcast %c2_i32_64 : i32 to vector<4x1xi32>
    %194 = vector.broadcast %159 : i32 to vector<4x1xi32>
    %195 = arith.select %18, %193, %194 : vector<4x1xi1>, vector<4x1xi32>
    %196 = arith.cmpi slt, %195, %15 : vector<4x1xi32>
    %197 = vector.shape_cast %196 : vector<4x1xi1> to vector<4x1xi1>
    %198 = vector.broadcast %197 : vector<4x1xi1> to vector<4x32xi1>
    %199 = arith.select %198, %192, %160 : vector<4x32xi1>, vector<4x32xf32>
    %c0_77 = arith.constant 0 : index
    %c0_78 = arith.constant 0 : index
    %200 = vector.load %arg7[%c0_77, %c0_78] : memref<4x32xf32, #tpu.memory_space<vmem>>, vector<4x32xf32>
    tpu.vector_store %arg7[%c0_77, %c0_78], %199 {strides = array<i32>} : memref<4x32xf32, #tpu.memory_space<vmem>>, vector<4x32xf32>,
    %201 = vector.shape_cast %196 : vector<4x1xi1> to vector<4x1xi1>
    %202 = vector.broadcast %201 : vector<4x1xi1> to vector<4x32xi1>
    %203 = arith.select %202, %190, %161 : vector<4x32xi1>, vector<4x32xf32>
    %c0_79 = arith.constant 0 : index
    %c0_80 = arith.constant 0 : index
    %204 = vector.load %arg8[%c0_79, %c0_80] : memref<4x32xf32, #tpu.memory_space<vmem>>, vector<4x32xf32>
    tpu.vector_store %arg8[%c0_79, %c0_80], %203 {strides = array<i32>} : memref<4x32xf32, #tpu.memory_space<vmem>>, vector<4x32xf32>,
    %205 = vector.broadcast %c2_i32_64 : i32 to vector<2x1xi32>
    %206 = arith.cmpi slt, %205, %14 : vector<2x1xi32>
    %207 = vector.extract_strided_slice %192 {offsets = [0, 0], sizes = [2, 32], strides = [1, 1]} : vector<4x32xf32> to vector<2x32xf32>
    %cst_81 = arith.constant 0.000000e+00 : f32
    %208 = vector.shape_cast %206 : vector<2x1xi1> to vector<2x1xi1>
    %209 = vector.broadcast %208 : vector<2x1xi1> to vector<2x32xi1>
    %210 = vector.broadcast %cst_81 : f32 to vector<2x32xf32>
    %211 = arith.select %209, %207, %210 : vector<2x32xi1>, vector<2x32xf32>
    %212 = arith.index_cast %c2_i32_64 : i32 to index
    %c0_82 = arith.constant 0 : index
    %c0_83 = arith.constant 0 : index
    %213 = vector.load %arg5[%212, %c0_82, %c0_83] : memref<8x2x64xf32, #tpu.memory_space<vmem>>, vector<1x2x32xf32>
    %214 = vector.shape_cast %213 : vector<1x2x32xf32> to vector<2x32xf32>
    %215 = vector.shape_cast %211 : vector<2x32xf32> to vector<1x2x32xf32>
    tpu.vector_store %arg5[%212, %c0_82, %c0_83], %215 {strides = array<i32>} : memref<8x2x64xf32, #tpu.memory_space<vmem>>, vector<1x2x32xf32>,
    %216 = vector.broadcast %159 : i32 to vector<2x1xi32>
    %217 = arith.cmpi slt, %216, %14 : vector<2x1xi32>
    %218 = vector.extract_strided_slice %192 {offsets = [2, 0], sizes = [2, 32], strides = [1, 1]} : vector<4x32xf32> to vector<2x32xf32>
    %cst_84 = arith.constant 0.000000e+00 : f32
    %219 = vector.shape_cast %217 : vector<2x1xi1> to vector<2x1xi1>
    %220 = vector.broadcast %219 : vector<2x1xi1> to vector<2x32xi1>
    %221 = vector.broadcast %cst_84 : f32 to vector<2x32xf32>
    %222 = arith.select %220, %218, %221 : vector<2x32xi1>, vector<2x32xf32>
    %223 = arith.index_cast %159 : i32 to index
    %c0_85 = arith.constant 0 : index
    %c32_86 = arith.constant 32 : index
    %224 = vector.load %arg5[%223, %c0_85, %c32_86] : memref<8x2x64xf32, #tpu.memory_space<vmem>>, vector<1x2x32xf32>
    %225 = vector.shape_cast %224 : vector<1x2x32xf32> to vector<2x32xf32>
    %226 = vector.shape_cast %222 : vector<2x32xf32> to vector<1x2x32xf32>
    tpu.vector_store %arg5[%223, %c0_85, %c32_86], %226 {strides = array<i32>} : memref<8x2x64xf32, #tpu.memory_space<vmem>>, vector<1x2x32xf32>,
    %c3_i32 = arith.constant 3 : i32
    %c7_i32_87 = arith.constant 7 : i32
    %227 = arith.subi %c7_i32_87, %c3_i32 : i32
    %c0_88 = arith.constant 0 : index
    %c0_89 = arith.constant 0 : index
    %228 = vector.load %arg7[%c0_88, %c0_89] : memref<4x32xf32, #tpu.memory_space<vmem>>, vector<4x32xf32>
    %c0_90 = arith.constant 0 : index
    %c0_91 = arith.constant 0 : index
    %229 = vector.load %arg8[%c0_90, %c0_91] : memref<4x32xf32, #tpu.memory_space<vmem>>, vector<4x32xf32>
    %230 = vector.extract_strided_slice %228 {offsets = [0, 0], sizes = [2, 32], strides = [1, 1]} : vector<4x32xf32> to vector<2x32xf32>
    %cst_92 = arith.constant dense<0.000000e+00> : vector<2x128xf32>
    %231 = tpu.matmul %230, %20, %cst_92 {dimension_numbers = #tpu.dot_dimension_numbers<[1], [0], [0], [1], [0, 0, 1, 1], [], []>} : vector<2x32xf32>, vector<32x128xf32>, vector<2x128xf32> -> vector<2x128xf32>
    %232 = vector.extract_strided_slice %228 {offsets = [2, 0], sizes = [2, 32], strides = [1, 1]} : vector<4x32xf32> to vector<2x32xf32>
    %cst_93 = arith.constant dense<0.000000e+00> : vector<2x128xf32>
    %233 = tpu.matmul %232, %22, %cst_93 {dimension_numbers = #tpu.dot_dimension_numbers<[1], [0], [0], [1], [0, 0, 1, 1], [], []>} : vector<2x32xf32>, vector<32x128xf32>, vector<2x128xf32> -> vector<2x128xf32>
    %234 = arith.index_cast %c3_i32 : i32 to index
    %c0_94 = arith.constant 0 : index
    %c0_95 = arith.constant 0 : index
    %235 = vector.load %arg6[%234, %c0_94, %c0_95] : memref<8x2x256xf32, #tpu.memory_space<vmem>>, vector<1x2x256xf32>
    %236 = vector.shape_cast %235 : vector<1x2x256xf32> to vector<2x256xf32>
    %237 = arith.index_cast %227 : i32 to index
    %c0_96 = arith.constant 0 : index
    %c0_97 = arith.constant 0 : index
    %238 = vector.load %arg6[%237, %c0_96, %c0_97] : memref<8x2x256xf32, #tpu.memory_space<vmem>>, vector<1x2x256xf32>
    %239 = vector.shape_cast %238 : vector<1x2x256xf32> to vector<2x256xf32>
    %240 = vector.extract_strided_slice %236 {offsets = [0, 0], sizes = [2, 128], strides = [1, 1]} : vector<2x256xf32> to vector<2x128xf32>
    %241 = arith.addf %240, %231 : vector<2x128xf32>
    %242 = vector.extract_strided_slice %239 {offsets = [0, 128], sizes = [2, 128], strides = [1, 1]} : vector<2x256xf32> to vector<2x128xf32>
    %243 = arith.addf %242, %233 : vector<2x128xf32>
    %244 = tpu.concatenate %241, %243 in 0 : vector<2x128xf32>, vector<2x128xf32> -> vector<4x128xf32>
    %245 = vector.extract_strided_slice %244 {offsets = [0, 0], sizes = [4, 96], strides = [1, 1]} : vector<4x128xf32> to vector<4x96xf32>
    %246 = arith.negf %245 : vector<4x96xf32>
    %247 = math.exp %246 : vector<4x96xf32>
    %cst_98 = arith.constant 1.000000e+00 : f32
    %248 = vector.broadcast %cst_98 : f32 to vector<4x96xf32>
    %249 = arith.addf %248, %247 : vector<4x96xf32>
    %250 = arith.divf %248, %249 : vector<4x96xf32>
    %251 = vector.extract_strided_slice %244 {offsets = [0, 96], sizes = [4, 32], strides = [1, 1]} : vector<4x128xf32> to vector<4x32xf32>
    %252 = math.tanh %251 : vector<4x32xf32>
    %253 = vector.extract_strided_slice %250 {offsets = [0, 0], sizes = [4, 32], strides = [1, 1]} : vector<4x96xf32> to vector<4x32xf32>
    %254 = vector.extract_strided_slice %250 {offsets = [0, 32], sizes = [4, 32], strides = [1, 1]} : vector<4x96xf32> to vector<4x32xf32>
    %255 = vector.extract_strided_slice %250 {offsets = [0, 64], sizes = [4, 32], strides = [1, 1]} : vector<4x96xf32> to vector<4x32xf32>
    %256 = arith.mulf %254, %229 : vector<4x32xf32>
    %257 = arith.mulf %253, %252 : vector<4x32xf32>
    %258 = arith.addf %256, %257 : vector<4x32xf32>
    %259 = math.tanh %258 : vector<4x32xf32>
    %260 = arith.mulf %255, %259 : vector<4x32xf32>
    %261 = vector.broadcast %c3_i32 : i32 to vector<4x1xi32>
    %262 = vector.broadcast %227 : i32 to vector<4x1xi32>
    %263 = arith.select %18, %261, %262 : vector<4x1xi1>, vector<4x1xi32>
    %264 = arith.cmpi slt, %263, %15 : vector<4x1xi32>
    %265 = vector.shape_cast %264 : vector<4x1xi1> to vector<4x1xi1>
    %266 = vector.broadcast %265 : vector<4x1xi1> to vector<4x32xi1>
    %267 = arith.select %266, %260, %228 : vector<4x32xi1>, vector<4x32xf32>
    %c0_99 = arith.constant 0 : index
    %c0_100 = arith.constant 0 : index
    %268 = vector.load %arg7[%c0_99, %c0_100] : memref<4x32xf32, #tpu.memory_space<vmem>>, vector<4x32xf32>
    tpu.vector_store %arg7[%c0_99, %c0_100], %267 {strides = array<i32>} : memref<4x32xf32, #tpu.memory_space<vmem>>, vector<4x32xf32>,
    %269 = vector.shape_cast %264 : vector<4x1xi1> to vector<4x1xi1>
    %270 = vector.broadcast %269 : vector<4x1xi1> to vector<4x32xi1>
    %271 = arith.select %270, %258, %229 : vector<4x32xi1>, vector<4x32xf32>
    %c0_101 = arith.constant 0 : index
    %c0_102 = arith.constant 0 : index
    %272 = vector.load %arg8[%c0_101, %c0_102] : memref<4x32xf32, #tpu.memory_space<vmem>>, vector<4x32xf32>
    tpu.vector_store %arg8[%c0_101, %c0_102], %271 {strides = array<i32>} : memref<4x32xf32, #tpu.memory_space<vmem>>, vector<4x32xf32>,
    %273 = vector.broadcast %c3_i32 : i32 to vector<2x1xi32>
    %274 = arith.cmpi slt, %273, %14 : vector<2x1xi32>
    %275 = vector.extract_strided_slice %260 {offsets = [0, 0], sizes = [2, 32], strides = [1, 1]} : vector<4x32xf32> to vector<2x32xf32>
    %cst_103 = arith.constant 0.000000e+00 : f32
    %276 = vector.shape_cast %274 : vector<2x1xi1> to vector<2x1xi1>
    %277 = vector.broadcast %276 : vector<2x1xi1> to vector<2x32xi1>
    %278 = vector.broadcast %cst_103 : f32 to vector<2x32xf32>
    %279 = arith.select %277, %275, %278 : vector<2x32xi1>, vector<2x32xf32>
    %280 = arith.index_cast %c3_i32 : i32 to index
    %c0_104 = arith.constant 0 : index
    %c0_105 = arith.constant 0 : index
    %281 = vector.load %arg5[%280, %c0_104, %c0_105] : memref<8x2x64xf32, #tpu.memory_space<vmem>>, vector<1x2x32xf32>
    %282 = vector.shape_cast %281 : vector<1x2x32xf32> to vector<2x32xf32>
    %283 = vector.shape_cast %279 : vector<2x32xf32> to vector<1x2x32xf32>
    tpu.vector_store %arg5[%280, %c0_104, %c0_105], %283 {strides = array<i32>} : memref<8x2x64xf32, #tpu.memory_space<vmem>>, vector<1x2x32xf32>,
    %284 = vector.broadcast %227 : i32 to vector<2x1xi32>
    %285 = arith.cmpi slt, %284, %14 : vector<2x1xi32>
    %286 = vector.extract_strided_slice %260 {offsets = [2, 0], sizes = [2, 32], strides = [1, 1]} : vector<4x32xf32> to vector<2x32xf32>
    %cst_106 = arith.constant 0.000000e+00 : f32
    %287 = vector.shape_cast %285 : vector<2x1xi1> to vector<2x1xi1>
    %288 = vector.broadcast %287 : vector<2x1xi1> to vector<2x32xi1>
    %289 = vector.broadcast %cst_106 : f32 to vector<2x32xf32>
    %290 = arith.select %288, %286, %289 : vector<2x32xi1>, vector<2x32xf32>
    %291 = arith.index_cast %227 : i32 to index
    %c0_107 = arith.constant 0 : index
    %c32_108 = arith.constant 32 : index
    %292 = vector.load %arg5[%291, %c0_107, %c32_108] : memref<8x2x64xf32, #tpu.memory_space<vmem>>, vector<1x2x32xf32>
    %293 = vector.shape_cast %292 : vector<1x2x32xf32> to vector<2x32xf32>
    %294 = vector.shape_cast %290 : vector<2x32xf32> to vector<1x2x32xf32>
    tpu.vector_store %arg5[%291, %c0_107, %c32_108], %294 {strides = array<i32>} : memref<8x2x64xf32, #tpu.memory_space<vmem>>, vector<1x2x32xf32>,
    %c4_i32 = arith.constant 4 : i32
    %c7_i32_109 = arith.constant 7 : i32
    %295 = arith.subi %c7_i32_109, %c4_i32 : i32
    %c0_110 = arith.constant 0 : index
    %c0_111 = arith.constant 0 : index
    %296 = vector.load %arg7[%c0_110, %c0_111] : memref<4x32xf32, #tpu.memory_space<vmem>>, vector<4x32xf32>
    %c0_112 = arith.constant 0 : index
    %c0_113 = arith.constant 0 : index
    %297 = vector.load %arg8[%c0_112, %c0_113] : memref<4x32xf32, #tpu.memory_space<vmem>>, vector<4x32xf32>
    %298 = vector.extract_strided_slice %296 {offsets = [0, 0], sizes = [2, 32], strides = [1, 1]} : vector<4x32xf32> to vector<2x32xf32>
    %cst_114 = arith.constant dense<0.000000e+00> : vector<2x128xf32>
    %299 = tpu.matmul %298, %20, %cst_114 {dimension_numbers = #tpu.dot_dimension_numbers<[1], [0], [0], [1], [0, 0, 1, 1], [], []>} : vector<2x32xf32>, vector<32x128xf32>, vector<2x128xf32> -> vector<2x128xf32>
    %300 = vector.extract_strided_slice %296 {offsets = [2, 0], sizes = [2, 32], strides = [1, 1]} : vector<4x32xf32> to vector<2x32xf32>
    %cst_115 = arith.constant dense<0.000000e+00> : vector<2x128xf32>
    %301 = tpu.matmul %300, %22, %cst_115 {dimension_numbers = #tpu.dot_dimension_numbers<[1], [0], [0], [1], [0, 0, 1, 1], [], []>} : vector<2x32xf32>, vector<32x128xf32>, vector<2x128xf32> -> vector<2x128xf32>
    %302 = arith.index_cast %c4_i32 : i32 to index
    %c0_116 = arith.constant 0 : index
    %c0_117 = arith.constant 0 : index
    %303 = vector.load %arg6[%302, %c0_116, %c0_117] : memref<8x2x256xf32, #tpu.memory_space<vmem>>, vector<1x2x256xf32>
    %304 = vector.shape_cast %303 : vector<1x2x256xf32> to vector<2x256xf32>
    %305 = arith.index_cast %295 : i32 to index
    %c0_118 = arith.constant 0 : index
    %c0_119 = arith.constant 0 : index
    %306 = vector.load %arg6[%305, %c0_118, %c0_119] : memref<8x2x256xf32, #tpu.memory_space<vmem>>, vector<1x2x256xf32>
    %307 = vector.shape_cast %306 : vector<1x2x256xf32> to vector<2x256xf32>
    %308 = vector.extract_strided_slice %304 {offsets = [0, 0], sizes = [2, 128], strides = [1, 1]} : vector<2x256xf32> to vector<2x128xf32>
    %309 = arith.addf %308, %299 : vector<2x128xf32>
    %310 = vector.extract_strided_slice %307 {offsets = [0, 128], sizes = [2, 128], strides = [1, 1]} : vector<2x256xf32> to vector<2x128xf32>
    %311 = arith.addf %310, %301 : vector<2x128xf32>
    %312 = tpu.concatenate %309, %311 in 0 : vector<2x128xf32>, vector<2x128xf32> -> vector<4x128xf32>
    %313 = vector.extract_strided_slice %312 {offsets = [0, 0], sizes = [4, 96], strides = [1, 1]} : vector<4x128xf32> to vector<4x96xf32>
    %314 = arith.negf %313 : vector<4x96xf32>
    %315 = math.exp %314 : vector<4x96xf32>
    %cst_120 = arith.constant 1.000000e+00 : f32
    %316 = vector.broadcast %cst_120 : f32 to vector<4x96xf32>
    %317 = arith.addf %316, %315 : vector<4x96xf32>
    %318 = arith.divf %316, %317 : vector<4x96xf32>
    %319 = vector.extract_strided_slice %312 {offsets = [0, 96], sizes = [4, 32], strides = [1, 1]} : vector<4x128xf32> to vector<4x32xf32>
    %320 = math.tanh %319 : vector<4x32xf32>
    %321 = vector.extract_strided_slice %318 {offsets = [0, 0], sizes = [4, 32], strides = [1, 1]} : vector<4x96xf32> to vector<4x32xf32>
    %322 = vector.extract_strided_slice %318 {offsets = [0, 32], sizes = [4, 32], strides = [1, 1]} : vector<4x96xf32> to vector<4x32xf32>
    %323 = vector.extract_strided_slice %318 {offsets = [0, 64], sizes = [4, 32], strides = [1, 1]} : vector<4x96xf32> to vector<4x32xf32>
    %324 = arith.mulf %322, %297 : vector<4x32xf32>
    %325 = arith.mulf %321, %320 : vector<4x32xf32>
    %326 = arith.addf %324, %325 : vector<4x32xf32>
    %327 = math.tanh %326 : vector<4x32xf32>
    %328 = arith.mulf %323, %327 : vector<4x32xf32>
    %329 = vector.broadcast %c4_i32 : i32 to vector<4x1xi32>
    %330 = vector.broadcast %295 : i32 to vector<4x1xi32>
    %331 = arith.select %18, %329, %330 : vector<4x1xi1>, vector<4x1xi32>
    %332 = arith.cmpi slt, %331, %15 : vector<4x1xi32>
    %333 = vector.shape_cast %332 : vector<4x1xi1> to vector<4x1xi1>
    %334 = vector.broadcast %333 : vector<4x1xi1> to vector<4x32xi1>
    %335 = arith.select %334, %328, %296 : vector<4x32xi1>, vector<4x32xf32>
    %c0_121 = arith.constant 0 : index
    %c0_122 = arith.constant 0 : index
    %336 = vector.load %arg7[%c0_121, %c0_122] : memref<4x32xf32, #tpu.memory_space<vmem>>, vector<4x32xf32>
    tpu.vector_store %arg7[%c0_121, %c0_122], %335 {strides = array<i32>} : memref<4x32xf32, #tpu.memory_space<vmem>>, vector<4x32xf32>,
    %337 = vector.shape_cast %332 : vector<4x1xi1> to vector<4x1xi1>
    %338 = vector.broadcast %337 : vector<4x1xi1> to vector<4x32xi1>
    %339 = arith.select %338, %326, %297 : vector<4x32xi1>, vector<4x32xf32>
    %c0_123 = arith.constant 0 : index
    %c0_124 = arith.constant 0 : index
    %340 = vector.load %arg8[%c0_123, %c0_124] : memref<4x32xf32, #tpu.memory_space<vmem>>, vector<4x32xf32>
    tpu.vector_store %arg8[%c0_123, %c0_124], %339 {strides = array<i32>} : memref<4x32xf32, #tpu.memory_space<vmem>>, vector<4x32xf32>,
    %341 = vector.broadcast %c4_i32 : i32 to vector<2x1xi32>
    %342 = arith.cmpi slt, %341, %14 : vector<2x1xi32>
    %343 = vector.extract_strided_slice %328 {offsets = [0, 0], sizes = [2, 32], strides = [1, 1]} : vector<4x32xf32> to vector<2x32xf32>
    %cst_125 = arith.constant 0.000000e+00 : f32
    %344 = vector.shape_cast %342 : vector<2x1xi1> to vector<2x1xi1>
    %345 = vector.broadcast %344 : vector<2x1xi1> to vector<2x32xi1>
    %346 = vector.broadcast %cst_125 : f32 to vector<2x32xf32>
    %347 = arith.select %345, %343, %346 : vector<2x32xi1>, vector<2x32xf32>
    %348 = arith.index_cast %c4_i32 : i32 to index
    %c0_126 = arith.constant 0 : index
    %c0_127 = arith.constant 0 : index
    %349 = vector.load %arg5[%348, %c0_126, %c0_127] : memref<8x2x64xf32, #tpu.memory_space<vmem>>, vector<1x2x32xf32>
    %350 = vector.shape_cast %349 : vector<1x2x32xf32> to vector<2x32xf32>
    %351 = vector.shape_cast %347 : vector<2x32xf32> to vector<1x2x32xf32>
    tpu.vector_store %arg5[%348, %c0_126, %c0_127], %351 {strides = array<i32>} : memref<8x2x64xf32, #tpu.memory_space<vmem>>, vector<1x2x32xf32>,
    %352 = vector.broadcast %295 : i32 to vector<2x1xi32>
    %353 = arith.cmpi slt, %352, %14 : vector<2x1xi32>
    %354 = vector.extract_strided_slice %328 {offsets = [2, 0], sizes = [2, 32], strides = [1, 1]} : vector<4x32xf32> to vector<2x32xf32>
    %cst_128 = arith.constant 0.000000e+00 : f32
    %355 = vector.shape_cast %353 : vector<2x1xi1> to vector<2x1xi1>
    %356 = vector.broadcast %355 : vector<2x1xi1> to vector<2x32xi1>
    %357 = vector.broadcast %cst_128 : f32 to vector<2x32xf32>
    %358 = arith.select %356, %354, %357 : vector<2x32xi1>, vector<2x32xf32>
    %359 = arith.index_cast %295 : i32 to index
    %c0_129 = arith.constant 0 : index
    %c32_130 = arith.constant 32 : index
    %360 = vector.load %arg5[%359, %c0_129, %c32_130] : memref<8x2x64xf32, #tpu.memory_space<vmem>>, vector<1x2x32xf32>
    %361 = vector.shape_cast %360 : vector<1x2x32xf32> to vector<2x32xf32>
    %362 = vector.shape_cast %358 : vector<2x32xf32> to vector<1x2x32xf32>
    tpu.vector_store %arg5[%359, %c0_129, %c32_130], %362 {strides = array<i32>} : memref<8x2x64xf32, #tpu.memory_space<vmem>>, vector<1x2x32xf32>,
    %c5_i32 = arith.constant 5 : i32
    %c7_i32_131 = arith.constant 7 : i32
    %363 = arith.subi %c7_i32_131, %c5_i32 : i32
    %c0_132 = arith.constant 0 : index
    %c0_133 = arith.constant 0 : index
    %364 = vector.load %arg7[%c0_132, %c0_133] : memref<4x32xf32, #tpu.memory_space<vmem>>, vector<4x32xf32>
    %c0_134 = arith.constant 0 : index
    %c0_135 = arith.constant 0 : index
    %365 = vector.load %arg8[%c0_134, %c0_135] : memref<4x32xf32, #tpu.memory_space<vmem>>, vector<4x32xf32>
    %366 = vector.extract_strided_slice %364 {offsets = [0, 0], sizes = [2, 32], strides = [1, 1]} : vector<4x32xf32> to vector<2x32xf32>
    %cst_136 = arith.constant dense<0.000000e+00> : vector<2x128xf32>
    %367 = tpu.matmul %366, %20, %cst_136 {dimension_numbers = #tpu.dot_dimension_numbers<[1], [0], [0], [1], [0, 0, 1, 1], [], []>} : vector<2x32xf32>, vector<32x128xf32>, vector<2x128xf32> -> vector<2x128xf32>
    %368 = vector.extract_strided_slice %364 {offsets = [2, 0], sizes = [2, 32], strides = [1, 1]} : vector<4x32xf32> to vector<2x32xf32>
    %cst_137 = arith.constant dense<0.000000e+00> : vector<2x128xf32>
    %369 = tpu.matmul %368, %22, %cst_137 {dimension_numbers = #tpu.dot_dimension_numbers<[1], [0], [0], [1], [0, 0, 1, 1], [], []>} : vector<2x32xf32>, vector<32x128xf32>, vector<2x128xf32> -> vector<2x128xf32>
    %370 = arith.index_cast %c5_i32 : i32 to index
    %c0_138 = arith.constant 0 : index
    %c0_139 = arith.constant 0 : index
    %371 = vector.load %arg6[%370, %c0_138, %c0_139] : memref<8x2x256xf32, #tpu.memory_space<vmem>>, vector<1x2x256xf32>
    %372 = vector.shape_cast %371 : vector<1x2x256xf32> to vector<2x256xf32>
    %373 = arith.index_cast %363 : i32 to index
    %c0_140 = arith.constant 0 : index
    %c0_141 = arith.constant 0 : index
    %374 = vector.load %arg6[%373, %c0_140, %c0_141] : memref<8x2x256xf32, #tpu.memory_space<vmem>>, vector<1x2x256xf32>
    %375 = vector.shape_cast %374 : vector<1x2x256xf32> to vector<2x256xf32>
    %376 = vector.extract_strided_slice %372 {offsets = [0, 0], sizes = [2, 128], strides = [1, 1]} : vector<2x256xf32> to vector<2x128xf32>
    %377 = arith.addf %376, %367 : vector<2x128xf32>
    %378 = vector.extract_strided_slice %375 {offsets = [0, 128], sizes = [2, 128], strides = [1, 1]} : vector<2x256xf32> to vector<2x128xf32>
    %379 = arith.addf %378, %369 : vector<2x128xf32>
    %380 = tpu.concatenate %377, %379 in 0 : vector<2x128xf32>, vector<2x128xf32> -> vector<4x128xf32>
    %381 = vector.extract_strided_slice %380 {offsets = [0, 0], sizes = [4, 96], strides = [1, 1]} : vector<4x128xf32> to vector<4x96xf32>
    %382 = arith.negf %381 : vector<4x96xf32>
    %383 = math.exp %382 : vector<4x96xf32>
    %cst_142 = arith.constant 1.000000e+00 : f32
    %384 = vector.broadcast %cst_142 : f32 to vector<4x96xf32>
    %385 = arith.addf %384, %383 : vector<4x96xf32>
    %386 = arith.divf %384, %385 : vector<4x96xf32>
    %387 = vector.extract_strided_slice %380 {offsets = [0, 96], sizes = [4, 32], strides = [1, 1]} : vector<4x128xf32> to vector<4x32xf32>
    %388 = math.tanh %387 : vector<4x32xf32>
    %389 = vector.extract_strided_slice %386 {offsets = [0, 0], sizes = [4, 32], strides = [1, 1]} : vector<4x96xf32> to vector<4x32xf32>
    %390 = vector.extract_strided_slice %386 {offsets = [0, 32], sizes = [4, 32], strides = [1, 1]} : vector<4x96xf32> to vector<4x32xf32>
    %391 = vector.extract_strided_slice %386 {offsets = [0, 64], sizes = [4, 32], strides = [1, 1]} : vector<4x96xf32> to vector<4x32xf32>
    %392 = arith.mulf %390, %365 : vector<4x32xf32>
    %393 = arith.mulf %389, %388 : vector<4x32xf32>
    %394 = arith.addf %392, %393 : vector<4x32xf32>
    %395 = math.tanh %394 : vector<4x32xf32>
    %396 = arith.mulf %391, %395 : vector<4x32xf32>
    %397 = vector.broadcast %c5_i32 : i32 to vector<4x1xi32>
    %398 = vector.broadcast %363 : i32 to vector<4x1xi32>
    %399 = arith.select %18, %397, %398 : vector<4x1xi1>, vector<4x1xi32>
    %400 = arith.cmpi slt, %399, %15 : vector<4x1xi32>
    %401 = vector.shape_cast %400 : vector<4x1xi1> to vector<4x1xi1>
    %402 = vector.broadcast %401 : vector<4x1xi1> to vector<4x32xi1>
    %403 = arith.select %402, %396, %364 : vector<4x32xi1>, vector<4x32xf32>
    %c0_143 = arith.constant 0 : index
    %c0_144 = arith.constant 0 : index
    %404 = vector.load %arg7[%c0_143, %c0_144] : memref<4x32xf32, #tpu.memory_space<vmem>>, vector<4x32xf32>
    tpu.vector_store %arg7[%c0_143, %c0_144], %403 {strides = array<i32>} : memref<4x32xf32, #tpu.memory_space<vmem>>, vector<4x32xf32>,
    %405 = vector.shape_cast %400 : vector<4x1xi1> to vector<4x1xi1>
    %406 = vector.broadcast %405 : vector<4x1xi1> to vector<4x32xi1>
    %407 = arith.select %406, %394, %365 : vector<4x32xi1>, vector<4x32xf32>
    %c0_145 = arith.constant 0 : index
    %c0_146 = arith.constant 0 : index
    %408 = vector.load %arg8[%c0_145, %c0_146] : memref<4x32xf32, #tpu.memory_space<vmem>>, vector<4x32xf32>
    tpu.vector_store %arg8[%c0_145, %c0_146], %407 {strides = array<i32>} : memref<4x32xf32, #tpu.memory_space<vmem>>, vector<4x32xf32>,
    %409 = vector.broadcast %c5_i32 : i32 to vector<2x1xi32>
    %410 = arith.cmpi slt, %409, %14 : vector<2x1xi32>
    %411 = vector.extract_strided_slice %396 {offsets = [0, 0], sizes = [2, 32], strides = [1, 1]} : vector<4x32xf32> to vector<2x32xf32>
    %cst_147 = arith.constant 0.000000e+00 : f32
    %412 = vector.shape_cast %410 : vector<2x1xi1> to vector<2x1xi1>
    %413 = vector.broadcast %412 : vector<2x1xi1> to vector<2x32xi1>
    %414 = vector.broadcast %cst_147 : f32 to vector<2x32xf32>
    %415 = arith.select %413, %411, %414 : vector<2x32xi1>, vector<2x32xf32>
    %416 = arith.index_cast %c5_i32 : i32 to index
    %c0_148 = arith.constant 0 : index
    %c0_149 = arith.constant 0 : index
    %417 = vector.load %arg5[%416, %c0_148, %c0_149] : memref<8x2x64xf32, #tpu.memory_space<vmem>>, vector<1x2x32xf32>
    %418 = vector.shape_cast %417 : vector<1x2x32xf32> to vector<2x32xf32>
    %419 = vector.shape_cast %415 : vector<2x32xf32> to vector<1x2x32xf32>
    tpu.vector_store %arg5[%416, %c0_148, %c0_149], %419 {strides = array<i32>} : memref<8x2x64xf32, #tpu.memory_space<vmem>>, vector<1x2x32xf32>,
    %420 = vector.broadcast %363 : i32 to vector<2x1xi32>
    %421 = arith.cmpi slt, %420, %14 : vector<2x1xi32>
    %422 = vector.extract_strided_slice %396 {offsets = [2, 0], sizes = [2, 32], strides = [1, 1]} : vector<4x32xf32> to vector<2x32xf32>
    %cst_150 = arith.constant 0.000000e+00 : f32
    %423 = vector.shape_cast %421 : vector<2x1xi1> to vector<2x1xi1>
    %424 = vector.broadcast %423 : vector<2x1xi1> to vector<2x32xi1>
    %425 = vector.broadcast %cst_150 : f32 to vector<2x32xf32>
    %426 = arith.select %424, %422, %425 : vector<2x32xi1>, vector<2x32xf32>
    %427 = arith.index_cast %363 : i32 to index
    %c0_151 = arith.constant 0 : index
    %c32_152 = arith.constant 32 : index
    %428 = vector.load %arg5[%427, %c0_151, %c32_152] : memref<8x2x64xf32, #tpu.memory_space<vmem>>, vector<1x2x32xf32>
    %429 = vector.shape_cast %428 : vector<1x2x32xf32> to vector<2x32xf32>
    %430 = vector.shape_cast %426 : vector<2x32xf32> to vector<1x2x32xf32>
    tpu.vector_store %arg5[%427, %c0_151, %c32_152], %430 {strides = array<i32>} : memref<8x2x64xf32, #tpu.memory_space<vmem>>, vector<1x2x32xf32>,
    %c6_i32 = arith.constant 6 : i32
    %c7_i32_153 = arith.constant 7 : i32
    %431 = arith.subi %c7_i32_153, %c6_i32 : i32
    %c0_154 = arith.constant 0 : index
    %c0_155 = arith.constant 0 : index
    %432 = vector.load %arg7[%c0_154, %c0_155] : memref<4x32xf32, #tpu.memory_space<vmem>>, vector<4x32xf32>
    %c0_156 = arith.constant 0 : index
    %c0_157 = arith.constant 0 : index
    %433 = vector.load %arg8[%c0_156, %c0_157] : memref<4x32xf32, #tpu.memory_space<vmem>>, vector<4x32xf32>
    %434 = vector.extract_strided_slice %432 {offsets = [0, 0], sizes = [2, 32], strides = [1, 1]} : vector<4x32xf32> to vector<2x32xf32>
    %cst_158 = arith.constant dense<0.000000e+00> : vector<2x128xf32>
    %435 = tpu.matmul %434, %20, %cst_158 {dimension_numbers = #tpu.dot_dimension_numbers<[1], [0], [0], [1], [0, 0, 1, 1], [], []>} : vector<2x32xf32>, vector<32x128xf32>, vector<2x128xf32> -> vector<2x128xf32>
    %436 = vector.extract_strided_slice %432 {offsets = [2, 0], sizes = [2, 32], strides = [1, 1]} : vector<4x32xf32> to vector<2x32xf32>
    %cst_159 = arith.constant dense<0.000000e+00> : vector<2x128xf32>
    %437 = tpu.matmul %436, %22, %cst_159 {dimension_numbers = #tpu.dot_dimension_numbers<[1], [0], [0], [1], [0, 0, 1, 1], [], []>} : vector<2x32xf32>, vector<32x128xf32>, vector<2x128xf32> -> vector<2x128xf32>
    %438 = arith.index_cast %c6_i32 : i32 to index
    %c0_160 = arith.constant 0 : index
    %c0_161 = arith.constant 0 : index
    %439 = vector.load %arg6[%438, %c0_160, %c0_161] : memref<8x2x256xf32, #tpu.memory_space<vmem>>, vector<1x2x256xf32>
    %440 = vector.shape_cast %439 : vector<1x2x256xf32> to vector<2x256xf32>
    %441 = arith.index_cast %431 : i32 to index
    %c0_162 = arith.constant 0 : index
    %c0_163 = arith.constant 0 : index
    %442 = vector.load %arg6[%441, %c0_162, %c0_163] : memref<8x2x256xf32, #tpu.memory_space<vmem>>, vector<1x2x256xf32>
    %443 = vector.shape_cast %442 : vector<1x2x256xf32> to vector<2x256xf32>
    %444 = vector.extract_strided_slice %440 {offsets = [0, 0], sizes = [2, 128], strides = [1, 1]} : vector<2x256xf32> to vector<2x128xf32>
    %445 = arith.addf %444, %435 : vector<2x128xf32>
    %446 = vector.extract_strided_slice %443 {offsets = [0, 128], sizes = [2, 128], strides = [1, 1]} : vector<2x256xf32> to vector<2x128xf32>
    %447 = arith.addf %446, %437 : vector<2x128xf32>
    %448 = tpu.concatenate %445, %447 in 0 : vector<2x128xf32>, vector<2x128xf32> -> vector<4x128xf32>
    %449 = vector.extract_strided_slice %448 {offsets = [0, 0], sizes = [4, 96], strides = [1, 1]} : vector<4x128xf32> to vector<4x96xf32>
    %450 = arith.negf %449 : vector<4x96xf32>
    %451 = math.exp %450 : vector<4x96xf32>
    %cst_164 = arith.constant 1.000000e+00 : f32
    %452 = vector.broadcast %cst_164 : f32 to vector<4x96xf32>
    %453 = arith.addf %452, %451 : vector<4x96xf32>
    %454 = arith.divf %452, %453 : vector<4x96xf32>
    %455 = vector.extract_strided_slice %448 {offsets = [0, 96], sizes = [4, 32], strides = [1, 1]} : vector<4x128xf32> to vector<4x32xf32>
    %456 = math.tanh %455 : vector<4x32xf32>
    %457 = vector.extract_strided_slice %454 {offsets = [0, 0], sizes = [4, 32], strides = [1, 1]} : vector<4x96xf32> to vector<4x32xf32>
    %458 = vector.extract_strided_slice %454 {offsets = [0, 32], sizes = [4, 32], strides = [1, 1]} : vector<4x96xf32> to vector<4x32xf32>
    %459 = vector.extract_strided_slice %454 {offsets = [0, 64], sizes = [4, 32], strides = [1, 1]} : vector<4x96xf32> to vector<4x32xf32>
    %460 = arith.mulf %458, %433 : vector<4x32xf32>
    %461 = arith.mulf %457, %456 : vector<4x32xf32>
    %462 = arith.addf %460, %461 : vector<4x32xf32>
    %463 = math.tanh %462 : vector<4x32xf32>
    %464 = arith.mulf %459, %463 : vector<4x32xf32>
    %465 = vector.broadcast %c6_i32 : i32 to vector<4x1xi32>
    %466 = vector.broadcast %431 : i32 to vector<4x1xi32>
    %467 = arith.select %18, %465, %466 : vector<4x1xi1>, vector<4x1xi32>
    %468 = arith.cmpi slt, %467, %15 : vector<4x1xi32>
    %469 = vector.shape_cast %468 : vector<4x1xi1> to vector<4x1xi1>
    %470 = vector.broadcast %469 : vector<4x1xi1> to vector<4x32xi1>
    %471 = arith.select %470, %464, %432 : vector<4x32xi1>, vector<4x32xf32>
    %c0_165 = arith.constant 0 : index
    %c0_166 = arith.constant 0 : index
    %472 = vector.load %arg7[%c0_165, %c0_166] : memref<4x32xf32, #tpu.memory_space<vmem>>, vector<4x32xf32>
    tpu.vector_store %arg7[%c0_165, %c0_166], %471 {strides = array<i32>} : memref<4x32xf32, #tpu.memory_space<vmem>>, vector<4x32xf32>,
    %473 = vector.shape_cast %468 : vector<4x1xi1> to vector<4x1xi1>
    %474 = vector.broadcast %473 : vector<4x1xi1> to vector<4x32xi1>
    %475 = arith.select %474, %462, %433 : vector<4x32xi1>, vector<4x32xf32>
    %c0_167 = arith.constant 0 : index
    %c0_168 = arith.constant 0 : index
    %476 = vector.load %arg8[%c0_167, %c0_168] : memref<4x32xf32, #tpu.memory_space<vmem>>, vector<4x32xf32>
    tpu.vector_store %arg8[%c0_167, %c0_168], %475 {strides = array<i32>} : memref<4x32xf32, #tpu.memory_space<vmem>>, vector<4x32xf32>,
    %477 = vector.broadcast %c6_i32 : i32 to vector<2x1xi32>
    %478 = arith.cmpi slt, %477, %14 : vector<2x1xi32>
    %479 = vector.extract_strided_slice %464 {offsets = [0, 0], sizes = [2, 32], strides = [1, 1]} : vector<4x32xf32> to vector<2x32xf32>
    %cst_169 = arith.constant 0.000000e+00 : f32
    %480 = vector.shape_cast %478 : vector<2x1xi1> to vector<2x1xi1>
    %481 = vector.broadcast %480 : vector<2x1xi1> to vector<2x32xi1>
    %482 = vector.broadcast %cst_169 : f32 to vector<2x32xf32>
    %483 = arith.select %481, %479, %482 : vector<2x32xi1>, vector<2x32xf32>
    %484 = arith.index_cast %c6_i32 : i32 to index
    %c0_170 = arith.constant 0 : index
    %c0_171 = arith.constant 0 : index
    %485 = vector.load %arg5[%484, %c0_170, %c0_171] : memref<8x2x64xf32, #tpu.memory_space<vmem>>, vector<1x2x32xf32>
    %486 = vector.shape_cast %485 : vector<1x2x32xf32> to vector<2x32xf32>
    %487 = vector.shape_cast %483 : vector<2x32xf32> to vector<1x2x32xf32>
    tpu.vector_store %arg5[%484, %c0_170, %c0_171], %487 {strides = array<i32>} : memref<8x2x64xf32, #tpu.memory_space<vmem>>, vector<1x2x32xf32>,
    %488 = vector.broadcast %431 : i32 to vector<2x1xi32>
    %489 = arith.cmpi slt, %488, %14 : vector<2x1xi32>
    %490 = vector.extract_strided_slice %464 {offsets = [2, 0], sizes = [2, 32], strides = [1, 1]} : vector<4x32xf32> to vector<2x32xf32>
    %cst_172 = arith.constant 0.000000e+00 : f32
    %491 = vector.shape_cast %489 : vector<2x1xi1> to vector<2x1xi1>
    %492 = vector.broadcast %491 : vector<2x1xi1> to vector<2x32xi1>
    %493 = vector.broadcast %cst_172 : f32 to vector<2x32xf32>
    %494 = arith.select %492, %490, %493 : vector<2x32xi1>, vector<2x32xf32>
    %495 = arith.index_cast %431 : i32 to index
    %c0_173 = arith.constant 0 : index
    %c32_174 = arith.constant 32 : index
    %496 = vector.load %arg5[%495, %c0_173, %c32_174] : memref<8x2x64xf32, #tpu.memory_space<vmem>>, vector<1x2x32xf32>
    %497 = vector.shape_cast %496 : vector<1x2x32xf32> to vector<2x32xf32>
    %498 = vector.shape_cast %494 : vector<2x32xf32> to vector<1x2x32xf32>
    tpu.vector_store %arg5[%495, %c0_173, %c32_174], %498 {strides = array<i32>} : memref<8x2x64xf32, #tpu.memory_space<vmem>>, vector<1x2x32xf32>,
    %c7_i32_175 = arith.constant 7 : i32
    %c7_i32_176 = arith.constant 7 : i32
    %499 = arith.subi %c7_i32_176, %c7_i32_175 : i32
    %c0_177 = arith.constant 0 : index
    %c0_178 = arith.constant 0 : index
    %500 = vector.load %arg7[%c0_177, %c0_178] : memref<4x32xf32, #tpu.memory_space<vmem>>, vector<4x32xf32>
    %c0_179 = arith.constant 0 : index
    %c0_180 = arith.constant 0 : index
    %501 = vector.load %arg8[%c0_179, %c0_180] : memref<4x32xf32, #tpu.memory_space<vmem>>, vector<4x32xf32>
    %502 = vector.extract_strided_slice %500 {offsets = [0, 0], sizes = [2, 32], strides = [1, 1]} : vector<4x32xf32> to vector<2x32xf32>
    %cst_181 = arith.constant dense<0.000000e+00> : vector<2x128xf32>
    %503 = tpu.matmul %502, %20, %cst_181 {dimension_numbers = #tpu.dot_dimension_numbers<[1], [0], [0], [1], [0, 0, 1, 1], [], []>} : vector<2x32xf32>, vector<32x128xf32>, vector<2x128xf32> -> vector<2x128xf32>
    %504 = vector.extract_strided_slice %500 {offsets = [2, 0], sizes = [2, 32], strides = [1, 1]} : vector<4x32xf32> to vector<2x32xf32>
    %cst_182 = arith.constant dense<0.000000e+00> : vector<2x128xf32>
    %505 = tpu.matmul %504, %22, %cst_182 {dimension_numbers = #tpu.dot_dimension_numbers<[1], [0], [0], [1], [0, 0, 1, 1], [], []>} : vector<2x32xf32>, vector<32x128xf32>, vector<2x128xf32> -> vector<2x128xf32>
    %506 = arith.index_cast %c7_i32_175 : i32 to index
    %c0_183 = arith.constant 0 : index
    %c0_184 = arith.constant 0 : index
    %507 = vector.load %arg6[%506, %c0_183, %c0_184] : memref<8x2x256xf32, #tpu.memory_space<vmem>>, vector<1x2x256xf32>
    %508 = vector.shape_cast %507 : vector<1x2x256xf32> to vector<2x256xf32>
    %509 = arith.index_cast %499 : i32 to index
    %c0_185 = arith.constant 0 : index
    %c0_186 = arith.constant 0 : index
    %510 = vector.load %arg6[%509, %c0_185, %c0_186] : memref<8x2x256xf32, #tpu.memory_space<vmem>>, vector<1x2x256xf32>
    %511 = vector.shape_cast %510 : vector<1x2x256xf32> to vector<2x256xf32>
    %512 = vector.extract_strided_slice %508 {offsets = [0, 0], sizes = [2, 128], strides = [1, 1]} : vector<2x256xf32> to vector<2x128xf32>
    %513 = arith.addf %512, %503 : vector<2x128xf32>
    %514 = vector.extract_strided_slice %511 {offsets = [0, 128], sizes = [2, 128], strides = [1, 1]} : vector<2x256xf32> to vector<2x128xf32>
    %515 = arith.addf %514, %505 : vector<2x128xf32>
    %516 = tpu.concatenate %513, %515 in 0 : vector<2x128xf32>, vector<2x128xf32> -> vector<4x128xf32>
    %517 = vector.extract_strided_slice %516 {offsets = [0, 0], sizes = [4, 96], strides = [1, 1]} : vector<4x128xf32> to vector<4x96xf32>
    %518 = arith.negf %517 : vector<4x96xf32>
    %519 = math.exp %518 : vector<4x96xf32>
    %cst_187 = arith.constant 1.000000e+00 : f32
    %520 = vector.broadcast %cst_187 : f32 to vector<4x96xf32>
    %521 = arith.addf %520, %519 : vector<4x96xf32>
    %522 = arith.divf %520, %521 : vector<4x96xf32>
    %523 = vector.extract_strided_slice %516 {offsets = [0, 96], sizes = [4, 32], strides = [1, 1]} : vector<4x128xf32> to vector<4x32xf32>
    %524 = math.tanh %523 : vector<4x32xf32>
    %525 = vector.extract_strided_slice %522 {offsets = [0, 0], sizes = [4, 32], strides = [1, 1]} : vector<4x96xf32> to vector<4x32xf32>
    %526 = vector.extract_strided_slice %522 {offsets = [0, 32], sizes = [4, 32], strides = [1, 1]} : vector<4x96xf32> to vector<4x32xf32>
    %527 = vector.extract_strided_slice %522 {offsets = [0, 64], sizes = [4, 32], strides = [1, 1]} : vector<4x96xf32> to vector<4x32xf32>
    %528 = arith.mulf %526, %501 : vector<4x32xf32>
    %529 = arith.mulf %525, %524 : vector<4x32xf32>
    %530 = arith.addf %528, %529 : vector<4x32xf32>
    %531 = math.tanh %530 : vector<4x32xf32>
    %532 = arith.mulf %527, %531 : vector<4x32xf32>
    %533 = vector.broadcast %c7_i32_175 : i32 to vector<4x1xi32>
    %534 = vector.broadcast %499 : i32 to vector<4x1xi32>
    %535 = arith.select %18, %533, %534 : vector<4x1xi1>, vector<4x1xi32>
    %536 = arith.cmpi slt, %535, %15 : vector<4x1xi32>
    %537 = vector.shape_cast %536 : vector<4x1xi1> to vector<4x1xi1>
    %538 = vector.broadcast %537 : vector<4x1xi1> to vector<4x32xi1>
    %539 = arith.select %538, %532, %500 : vector<4x32xi1>, vector<4x32xf32>
    %c0_188 = arith.constant 0 : index
    %c0_189 = arith.constant 0 : index
    %540 = vector.load %arg7[%c0_188, %c0_189] : memref<4x32xf32, #tpu.memory_space<vmem>>, vector<4x32xf32>
    tpu.vector_store %arg7[%c0_188, %c0_189], %539 {strides = array<i32>} : memref<4x32xf32, #tpu.memory_space<vmem>>, vector<4x32xf32>,
    %541 = vector.shape_cast %536 : vector<4x1xi1> to vector<4x1xi1>
    %542 = vector.broadcast %541 : vector<4x1xi1> to vector<4x32xi1>
    %543 = arith.select %542, %530, %501 : vector<4x32xi1>, vector<4x32xf32>
    %c0_190 = arith.constant 0 : index
    %c0_191 = arith.constant 0 : index
    %544 = vector.load %arg8[%c0_190, %c0_191] : memref<4x32xf32, #tpu.memory_space<vmem>>, vector<4x32xf32>
    tpu.vector_store %arg8[%c0_190, %c0_191], %543 {strides = array<i32>} : memref<4x32xf32, #tpu.memory_space<vmem>>, vector<4x32xf32>,
    %545 = vector.broadcast %c7_i32_175 : i32 to vector<2x1xi32>
    %546 = arith.cmpi slt, %545, %14 : vector<2x1xi32>
    %547 = vector.extract_strided_slice %532 {offsets = [0, 0], sizes = [2, 32], strides = [1, 1]} : vector<4x32xf32> to vector<2x32xf32>
    %cst_192 = arith.constant 0.000000e+00 : f32
    %548 = vector.shape_cast %546 : vector<2x1xi1> to vector<2x1xi1>
    %549 = vector.broadcast %548 : vector<2x1xi1> to vector<2x32xi1>
    %550 = vector.broadcast %cst_192 : f32 to vector<2x32xf32>
    %551 = arith.select %549, %547, %550 : vector<2x32xi1>, vector<2x32xf32>
    %552 = arith.index_cast %c7_i32_175 : i32 to index
    %c0_193 = arith.constant 0 : index
    %c0_194 = arith.constant 0 : index
    %553 = vector.load %arg5[%552, %c0_193, %c0_194] : memref<8x2x64xf32, #tpu.memory_space<vmem>>, vector<1x2x32xf32>
    %554 = vector.shape_cast %553 : vector<1x2x32xf32> to vector<2x32xf32>
    %555 = vector.shape_cast %551 : vector<2x32xf32> to vector<1x2x32xf32>
    tpu.vector_store %arg5[%552, %c0_193, %c0_194], %555 {strides = array<i32>} : memref<8x2x64xf32, #tpu.memory_space<vmem>>, vector<1x2x32xf32>,
    %556 = vector.broadcast %499 : i32 to vector<2x1xi32>
    %557 = arith.cmpi slt, %556, %14 : vector<2x1xi32>
    %558 = vector.extract_strided_slice %532 {offsets = [2, 0], sizes = [2, 32], strides = [1, 1]} : vector<4x32xf32> to vector<2x32xf32>
    %cst_195 = arith.constant 0.000000e+00 : f32
    %559 = vector.shape_cast %557 : vector<2x1xi1> to vector<2x1xi1>
    %560 = vector.broadcast %559 : vector<2x1xi1> to vector<2x32xi1>
    %561 = vector.broadcast %cst_195 : f32 to vector<2x32xf32>
    %562 = arith.select %560, %558, %561 : vector<2x32xi1>, vector<2x32xf32>
    %563 = arith.index_cast %499 : i32 to index
    %c0_196 = arith.constant 0 : index
    %c32_197 = arith.constant 32 : index
    %564 = vector.load %arg5[%563, %c0_196, %c32_197] : memref<8x2x64xf32, #tpu.memory_space<vmem>>, vector<1x2x32xf32>
    %565 = vector.shape_cast %564 : vector<1x2x32xf32> to vector<2x32xf32>
    %566 = vector.shape_cast %562 : vector<2x32xf32> to vector<1x2x32xf32>
    tpu.vector_store %arg5[%563, %c0_196, %c32_197], %566 {strides = array<i32>} : memref<8x2x64xf32, #tpu.memory_space<vmem>>, vector<1x2x32xf32>,
    %c8_i32 = arith.constant 8 : i32
    return
  }
}

</mosaic_0001>

<llo_original>
// kernel: tpu_custom_call.1
$region0: #{tpu_custom_call.1}
  #allocation0 [shape = 'u32[]', space=smem, size = 0x4, offset = 0x4, fixed_abs, tag = 'smem constant byte address 0x4 - core index']
  #allocation1 [shape = 'u32[144,128]{1,0:T(1,128)}', space=vmem, size = 0x12000, scoped, tag = 'internal scratch']
  #allocation2 [shape = 'f32[8,2,256]{2,1,0:T(2,128)}', space=vmem, size = 0x4000, scoped, tag = 'scratch operand']
  #allocation3 [shape = 'f32[4,32]{1,0:T(4,128)}', space=vmem, size = 0x800, scoped, tag = 'scratch operand']
  #allocation4 [shape = 'f32[4,32]{1,0:T(4,128)}', space=vmem, size = 0x800, scoped, tag = 'scratch operand']
  %s0 = inlined_call_operand.hbm [shape: f32[8,2,64], index: 0, kind: input, shape index: {}]
  %s1 = inlined_call_operand.hbm [shape: bf16[64,256], index: 1, kind: input, shape index: {}]
  %s2 = inlined_call_operand.hbm [shape: f32[2,32,128], index: 2, kind: input, shape index: {}]
  %s3 = inlined_call_operand.vmem [shape: f32[1,256], index: 3, kind: input, shape index: {}]
  %s4 = inlined_call_operand.vmem [shape: s32[2,1], index: 4, kind: input, shape index: {}]
  %s5 = inlined_call_operand.hbm [shape: f32[8,2,64], index: 5, kind: output, shape index: {}]
  %s6 = sld [smem:[#allocation0]]
  $region42: #{tpu_custom_call.1} parent=0
    _
  %s8 = ssub.s32 1, %s6
  %s9 = scalar_select 0, %s8, %s6
  $region1: #{tpu_custom_call.1} parent=0
    #allocation5 [shape = 'u8[8192]{0}', space=vmem, size = 0x2000, scoped, tag = 'input window, operand 0, single buffered']
    #allocation6 [shape = 's32[1]{0}', space=sflag, size = 0x4, scoped, tag = 'scoped memory for tpu_custom_call.1']
    #allocation7 [shape = 's32[1]{0}', space=sflag, size = 0x4, scoped, tag = 'scoped memory for tpu_custom_call.1']
    #allocation8 [shape = 'u8[32768]{0}', space=vmem, size = 0x8000, scoped, tag = 'input window, operand 1, single buffered']
    #allocation9 [shape = 's32[1]{0}', space=sflag, size = 0x4, scoped, tag = 'scoped memory for tpu_custom_call.1']
    #allocation10 [shape = 'u8[32768]{0}', space=vmem, size = 0x8000, scoped, tag = 'input window, operand 2, single buffered']
    #allocation11 [shape = 'u8[8192]{0}', space=vmem, size = 0x2000, scoped, tag = 'output window, operand 0, single buffered']
    %10 = vsyncpa [#allocation6], 0
    %11 = vsyncpa [#allocation9], 0
    %12 = vsyncpa [#allocation7], 0
    // Predicated region
    $region2: #{tpu_custom_call.1} parent=1 // pred_check
      _
    $region3: #{tpu_custom_call.1} parent=1 // pred_check_branch
      %14 = sbr.rel (0) target = $region5
    $region4: #{tpu_custom_call.1} parent=1 // pred_region
      %s16 = ssub.s32 256, 256
      %17 = vsyncadd [#allocation6], %s16
      %s18 = sshll.u32 [#allocation5], 4
      %s19 = int_to_ptr.vmem [resolvable:$true] %s18
      %24 = dma.hbm_to_vmem [thread:$0]  %s0, 256, %s19, [#allocation6], 32, 32, 2
    $region5: #{tpu_custom_call.1} parent=1 // pred_fallthru
      _
    // Predicated region
    $region6: #{tpu_custom_call.1} parent=1 // pred_check
      _
    $region7: #{tpu_custom_call.1} parent=1 // pred_check_branch
      %26 = sbr.rel (0) target = $region9
    $region8: #{tpu_custom_call.1} parent=1 // pred_region
      %s28 = ssub.s32 1024, 1024
      %29 = vsyncadd [#allocation9], %s28
      %s30 = sshll.u32 [#allocation8], 4
      %s31 = int_to_ptr.vmem [resolvable:$true] %s30
      %36 = dma.hbm_to_vmem [thread:$0]  %s1, 1024, %s31, [#allocation9], 128, 128, 8
    $region9: #{tpu_custom_call.1} parent=1 // pred_fallthru
      _
    // Predicated region
    $region10: #{tpu_custom_call.1} parent=1 // pred_check
      _
    $region11: #{tpu_custom_call.1} parent=1 // pred_check_branch
      %38 = sbr.rel (0) target = $region13
    $region12: #{tpu_custom_call.1} parent=1 // pred_region
      %s40 = ssub.s32 1024, 1024
      %41 = vsyncadd [#allocation9], %s40
      %s42 = sshll.u32 [#allocation10], 4
      %s43 = int_to_ptr.vmem [resolvable:$true] %s42
      %48 = dma.hbm_to_vmem [thread:$0]  %s2, 1024, %s43, [#allocation9], 128, 128, 8
    $region13: #{tpu_custom_call.1} parent=1 // pred_fallthru
      _
    // Predicated region
    $region14: #{tpu_custom_call.1} parent=1 // pred_check
      _
    $region15: #{tpu_custom_call.1} parent=1 // pred_check_branch
      %50 = sbr.rel (0) target = $region17
    $region16: #{tpu_custom_call.1} parent=1 // pred_region
      _
    $region17: #{tpu_custom_call.1} parent=1 // pred_fallthru
      _
    // Predicated region
    $region18: #{tpu_custom_call.1} parent=1 // pred_check
      _
    $region19: #{tpu_custom_call.1} parent=1 // pred_check_branch
      %52 = sbr.rel (0) target = $region21
    $region20: #{tpu_custom_call.1} parent=1 // pred_region
      _
    $region21: #{tpu_custom_call.1} parent=1 // pred_fallthru
      _
    // Predicated region
    $region22: #{tpu_custom_call.1} parent=1 // pred_check
      _
    $region23: #{tpu_custom_call.1} parent=1 // pred_check_branch
      %54 = sbr.rel (0) target = $region25
    $region24: #{tpu_custom_call.1} parent=1 // pred_region
      %55 = dma.done [#allocation6], 256
    $region25: #{tpu_custom_call.1} parent=1 // pred_fallthru
      _
    // Predicated region
    $region26: #{tpu_custom_call.1} parent=1 // pred_check
      _
    $region27: #{tpu_custom_call.1} parent=1 // pred_check_branch
      %57 = sbr.rel (0) target = $region29
    $region28: #{tpu_custom_call.1} parent=1 // pred_region
      %58 = dma.done [#allocation9], 1024
    $region29: #{tpu_custom_call.1} parent=1 // pred_fallthru
      _
    // Predicated region
    $region30: #{tpu_custom_call.1} parent=1 // pred_check
      _
    $region31: #{tpu_custom_call.1} parent=1 // pred_check_branch
      %60 = sbr.rel (0) target = $region33
    $region32: #{tpu_custom_call.1} parent=1 // pred_region
      %61 = dma.done [#allocation9], 1024
    $region33: #{tpu_custom_call.1} parent=1 // pred_fallthru
      _
    %v63 = vld [vmem:[#allocation5] sm:$0x3]
    %v64 = vld [vmem:[#allocation5 + $0x2] sm:$0x3]
    %v65 = vld [vmem:[#allocation5 + $0x4] sm:$0x3]
    %v66 = vld [vmem:[#allocation5 + $0x6] sm:$0x3]
    %v67 = vld [vmem:[#allocation5 + $0x8] sm:$0x3]
    %v68 = vld [vmem:[#allocation5 + $0xa] sm:$0x3]
    %v69 = vld [vmem:[#allocation5 + $0xc] sm:$0x3]
    %v70 = vld [vmem:[#allocation5 + $0xe] sm:$0x3]
    %v71 = vpack.c.bf16 %v63, %v63
    %v72 = vpack.c.bf16 %v64, %v64
    %v73 = vpack.c.bf16 %v65, %v65
    %v74 = vpack.c.bf16 %v66, %v66
    %v75 = vpack.c.bf16 %v67, %v67
    %v76 = vpack.c.bf16 %v68, %v68
    %v77 = vpack.c.bf16 %v69, %v69
    %v78 = vpack.c.bf16 %v70, %v70
    %v79 = vld [vmem:[#allocation8] sm:$0xff]
    %v80 = vld [vmem:[#allocation8 + $0x8] sm:$0xff]
    %v81 = vld [vmem:[#allocation8 + $0x10] sm:$0xff]
    %v82 = vld [vmem:[#allocation8 + $0x18] sm:$0xff]
    %v83 = vld [vmem:[#allocation8 + $0x20] sm:$0xff]
    %v84 = vld [vmem:[#allocation8 + $0x28] sm:$0xff]
    %v85 = vld [vmem:[#allocation8 + $0x30] sm:$0xff]
    %v86 = vld [vmem:[#allocation8 + $0x38] sm:$0xff]
    %v87 = vld [vmem:[%s3] sm:$0x3]
    %v89 = vlaneseq
    %v90 = vshrl.u32 %v89, 7
    %v91 = vsub.s32 0, %v90
    %v92 = vrot.slane %v87, %v91
    %v93 = vlaneseq
    %v94 = vshrl.u32 %v93, 7
    %v95 = vsub.s32 1, %v94
    %v96 = vrot.slane %v87, %v95
    %v107 = vcombine.low %v71, %v72
    %v108 = vcombine.low %v73, %v74
    %v109 = vcombine.low %v75, %v76
    %v110 = vcombine.low %v77, %v78
    %v112 = vunpack.c.l.s4 1966171168
    %v113 = vunpack.c.0.s8 %v112
    %v114 = vlaneseq
    %v115 = vshrl.u32 %v114, 7
    %v116 = vsub.s32 %v113, %v115
    %v117 = vrot.slane %v107, %v116
    %v119 = vunpack.c.l.s4 1966171168
    %v120 = vunpack.c.0.s8 %v119
    %v121 = vlaneseq
    %v122 = vshrl.u32 %v121, 7
    %v123 = vsub.s32 %v120, %v122
    %v124 = vrot.slane %v108, %v123
    %v126 = vunpack.c.l.s4 1966171168
    %v127 = vunpack.c.0.s8 %v126
    %v128 = vlaneseq
    %v129 = vshrl.u32 %v128, 7
    %v130 = vsub.s32 %v127, %v129
    %v131 = vrot.slane %v109, %v130
    %v133 = vunpack.c.l.s4 1966171168
    %v134 = vunpack.c.0.s8 %v133
    %v135 = vlaneseq
    %v136 = vshrl.u32 %v135, 7
    %v137 = vsub.s32 %v134, %v136
    %v138 = vrot.slane %v110, %v137
    %v139 = vcombine.low %v117, %v124
    %v140 = vcombine.low %v131, %v138
    %v142 = vunpack.c.l.s4 1966171168
    %v143 = vunpack.c.0.s8 %v142
    %v144 = vlaneseq
    %v145 = vshrl.u32 %v144, 7
    %v146 = vsub.s32 %v143, %v145
    %v147 = vrot.slane %v139, %v146
    %v149 = vunpack.c.l.s4 1966171168
    %v150 = vunpack.c.0.s8 %v149
    %v151 = vlaneseq
    %v152 = vshrl.u32 %v151, 7
    %v153 = vsub.s32 %v150, %v152
    %v154 = vrot.slane %v140, %v153
    %v155 = vcombine.low %v147, %v154
    %v164 = vunpack.c.l.b16 %v79
    %v165 = vunpack.c.h.b16 %v79
    %v166 = vunpack.c.l.b16 %v80
    %v167 = vunpack.c.h.b16 %v80
    %v168 = vunpack.c.l.b16 %v81
    %v169 = vunpack.c.h.b16 %v81
    %v170 = vunpack.c.l.b16 %v82
    %v171 = vunpack.c.h.b16 %v82
    %v172 = vunpack.c.l.b16 %v83
    %v173 = vunpack.c.h.b16 %v83
    %v174 = vunpack.c.l.b16 %v84
    %v175 = vunpack.c.h.b16 %v84
    %v176 = vunpack.c.l.b16 %v85
    %v177 = vunpack.c.h.b16 %v85
    %v178 = vunpack.c.l.b16 %v86
    %v179 = vunpack.c.h.b16 %v86
    %v180 = vpack.c.b16 %v166, %v164
    %v181 = vpack.c.b16 %v167, %v165
    %v182 = vpack.c.b16 %v170, %v168
    %v183 = vpack.c.b16 %v171, %v169
    %v184 = vpack.c.b16 %v174, %v172
    %v185 = vpack.c.b16 %v175, %v173
    %v186 = vpack.c.b16 %v178, %v176
    %v187 = vpack.c.b16 %v179, %v177
    %vm196 = vcmask 523264
    %v198 = vsel %vm196, %v155, 0
    %200 = vmatprep.subr.bf16.mxu0 %v181
    %201 = vmatpush1.bf16.msra.mxu0 %v180
    %202 = vmatprep.subr.bf16.mxu0 %v183
    %203 = vmatpush1.bf16.msra.mxu0 %v182
    %204 = vmatprep.subr.bf16.mxu0 %v185
    %205 = vmatpush1.bf16.msra.mxu0 %v184
    %206 = vmatprep.subr.bf16.mxu0 %v187
    %207 = vmatpush1.bf16.msra.mxu0 %v186
    %208 = vmatprep.subr.bf16.mxu0 0
    %209 = vmatpush1.bf16.msra.mxu0 0
    %210 = vmatprep.subr.bf16.mxu0 0
    %211 = vmatpush1.bf16.msra.mxu0 0
    %212 = vmatprep.subr.bf16.mxu0 0
    %213 = vmatpush1.bf16.msra.mxu0 0
    %214 = vmatprep.subr.bf16.mxu0 0
    %215 = vmatpush1.bf16.msra.mxu0 0
    %216 = vmatprep.subr.bf16.mxu0 0
    %217 = vmatpush1.bf16.msra.mxu0 0
    %218 = vmatprep.subr.bf16.mxu0 0
    %219 = vmatpush1.bf16.msra.mxu0 0
    %220 = vmatprep.subr.bf16.mxu0 0
    %221 = vmatpush1.bf16.msra.mxu0 0
    %222 = vmatprep.subr.bf16.mxu0 0
    %223 = vmatpush1.bf16.msra.mxu0 0
    %224 = vmatprep.subr.bf16.mxu0 0
    %225 = vmatpush1.bf16.msra.mxu0 0
    %226 = vmatprep.subr.bf16.mxu0 0
    %227 = vmatpush1.bf16.msra.mxu0 0
    %228 = vmatprep.subr.bf16.mxu0 0
    %229 = vmatpush1.bf16.msra.mxu0 0
    %230 = vmatprep.subr.bf16.mxu0 0
    %231 = vmatpush1.bf16.msra.mxu0 0
    %232 = vmatprep.mubr.bf16.mxu0 0
    %233 = vmatmul.mubr.bf16.gmra.mrb[0].mxu0 %v198
    %v234 = vpop.f32.mrb[0].mxu0
    %v235 = vadd.f32 %v92, %v234
    %v236 = vpop.f32.mrb[0].mxu0
    %v237 = vadd.f32 %v96, %v236
    %v238 = vpop.f32.mrb[0].mxu0
    %v239 = vadd.f32 %v92, %v238
    %v240 = vpop.f32.mrb[0].mxu0
    %v241 = vadd.f32 %v96, %v240
    %242 = vdwg.mxu0
    %v247 = vcombine.low %v235, %v237
    %v248 = vcombine.high %v235, %v237
    %v250 = vunpack.c.l.s4 1983009808
    %v251 = vunpack.c.0.s8 %v250
    %v252 = vlaneseq
    %v253 = vshrl.u32 %v252, 7
    %v254 = vsub.s32 %v251, %v253
    %v255 = vrot.slane %v247, %v254
    %v257 = vunpack.c.l.s4 1983009808
    %v258 = vunpack.c.0.s8 %v257
    %v259 = vlaneseq
    %v260 = vshrl.u32 %v259, 7
    %v261 = vsub.s32 %v258, %v260
    %v262 = vrot.slane %v248, %v261
    %v263 = vcombine.high %v255, %v255
    %v264 = vcombine.high %v262, %v262
    %v265 = vcombine.low %v239, %v241
    %v266 = vcombine.high %v239, %v241
    %v268 = vunpack.c.l.s4 1983009808
    %v269 = vunpack.c.0.s8 %v268
    %v270 = vlaneseq
    %v271 = vshrl.u32 %v270, 7
    %v272 = vsub.s32 %v269, %v271
    %v273 = vrot.slane %v265, %v272
    %v275 = vunpack.c.l.s4 1983009808
    %v276 = vunpack.c.0.s8 %v275
    %v277 = vlaneseq
    %v278 = vshrl.u32 %v277, 7
    %v279 = vsub.s32 %v276, %v278
    %v280 = vrot.slane %v266, %v279
    %v281 = vcombine.high %v273, %v273
    %v282 = vcombine.high %v280, %v280
    %291 = vst [vmem:[#allocation2] sm:$0xf] %v255
    %292 = vst [vmem:[#allocation2 + $0x4] sm:$0xf] %v263
    %293 = vst [vmem:[#allocation2 + $0x8] sm:$0xf] %v262
    %294 = vst [vmem:[#allocation2 + $0xc] sm:$0xf] %v264
    %295 = vst [vmem:[#allocation2 + $0x10] sm:$0xf] %v273
    %296 = vst [vmem:[#allocation2 + $0x14] sm:$0xf] %v281
    %297 = vst [vmem:[#allocation2 + $0x18] sm:$0xf] %v280
    %298 = vst [vmem:[#allocation2 + $0x1c] sm:$0xf] %v282
    %vm299 = vcmask 257024
    %300 = vst.msk [vmem:[#allocation3] sm:$0xf] %vm299, 0.0
    %301 = vst.msk [vmem:[#allocation4] sm:$0xf] %vm299, 0.0
    %v302 = vld [vmem:[%s4] sm:$0x3]
    %v303 = vrot.slane %v302, 6
    %vm304 = vcmask 1041408
    %v305 = vsel %vm304, %v302, %v303
    %v306 = vlaneseq
    %v307 = vshrl.u32 %v306, 7
    %vm308 = vcmp.lt.s32.totalorder %v307, 2
    %v309 = vld [vmem:[#allocation10] sm:$0xff]
    %v310 = vld [vmem:[#allocation10 + $0x8] sm:$0xff]
    %v311 = vld [vmem:[#allocation10 + $0x10] sm:$0xff]
    %v312 = vld [vmem:[#allocation10 + $0x18] sm:$0xff]
    %s313 = scalar_lea.vmem [#allocation10], 32
    %v314 = vld [vmem:[%s313] sm:$0xff]
    %v315 = vld [vmem:[%s313 + $0x8] sm:$0xff]
    %v316 = vld [vmem:[%s313 + $0x10] sm:$0xff]
    %v317 = vld [vmem:[%s313 + $0x18] sm:$0xff]
    %v318 = vld [vmem:[#allocation3] sm:$0xf]
    %v319 = vld [vmem:[#allocation4] sm:$0xf]
    %vm320 = vcmask 261120
    %v322 = vsel %vm320, %v318, 0
    %324 = vmatprep.subr.mxu0 0.0
    %325 = vmatpush1.msra.mxu0 %v309
    %326 = vmatprep.subr.mxu0 0.0
    %327 = vmatpush1.msra.mxu0 %v310
    %328 = vmatprep.subr.mxu0 0.0
    %329 = vmatpush1.msra.mxu0 %v311
    %330 = vmatprep.subr.mxu0 0.0
    %331 = vmatpush1.msra.mxu0 %v312
    %332 = vmatprep.subr.mxu0 0.0
    %333 = vmatpush1.msra.mxu0 0.0
    %334 = vmatprep.subr.mxu0 0.0
    %335 = vmatpush1.msra.mxu0 0.0
    %336 = vmatprep.subr.mxu0 0.0
    %337 = vmatpush1.msra.mxu0 0.0
    %338 = vmatprep.subr.mxu0 0.0
    %339 = vmatpush1.msra.mxu0 0.0
    %340 = vmatprep.subr.mxu0 0.0
    %341 = vmatpush1.msra.mxu0 0.0
    %342 = vmatprep.subr.mxu0 0.0
    %343 = vmatpush1.msra.mxu0 0.0
    %344 = vmatprep.subr.mxu0 0.0
    %345 = vmatpush1.msra.mxu0 0.0
    %346 = vmatprep.subr.mxu0 0.0
    %347 = vmatpush1.msra.mxu0 0.0
    %348 = vmatprep.subr.mxu0 0.0
    %349 = vmatpush1.msra.mxu0 0.0
    %350 = vmatprep.subr.mxu0 0.0
    %351 = vmatpush1.msra.mxu0 0.0
    %352 = vmatprep.subr.mxu0 0.0
    %353 = vmatpush1.msra.mxu0 0.0
    %354 = vmatprep.subr.mxu0 0.0
    %355 = vmatpush1.msra.mxu0 0.0
    %356 = vmatprep.subr.mxu0 0.0
    %357 = vmatpush1.msra.mxu0 0.0
    %358 = vmatprep.subr.mxu0 0.0
    %359 = vmatpush1.msra.mxu0 0.0
    %360 = vmatprep.subr.mxu0 0.0
    %361 = vmatpush1.msra.mxu0 0.0
    %362 = vmatprep.subr.mxu0 0.0
    %363 = vmatpush1.msra.mxu0 0.0
    %364 = vmatprep.subr.mxu0 0.0
    %365 = vmatpush1.msra.mxu0 0.0
    %366 = vmatprep.subr.mxu0 0.0
    %367 = vmatpush1.msra.mxu0 0.0
    %368 = vmatprep.subr.mxu0 0.0
    %369 = vmatpush1.msra.mxu0 0.0
    %370 = vmatprep.subr.mxu0 0.0
    %371 = vmatpush1.msra.mxu0 0.0
    %372 = vmatprep.subr.mxu0 0.0
    %373 = vmatpush1.msra.mxu0 0.0
    %374 = vmatprep.subr.mxu0 0.0
    %375 = vmatpush1.msra.mxu0 0.0
    %376 = vmatprep.subr.mxu0 0.0
    %377 = vmatpush1.msra.mxu0 0.0
    %378 = vmatprep.subr.mxu0 0.0
    %379 = vmatpush1.msra.mxu0 0.0
    %380 = vmatprep.subr.mxu0 0.0
    %381 = vmatpush1.msra.mxu0 0.0
    %382 = vmatprep.subr.mxu0 0.0
    %383 = vmatpush1.msra.mxu0 0.0
    %384 = vmatprep.subr.mxu0 0.0
    %385 = vmatpush1.msra.mxu0 0.0
    %386 = vmatprep.subr.mxu0 0.0
    %387 = vmatpush1.msra.mxu0 0.0
    %388 = vmatprep.mubr.f32.mxu0 0.0
    %389 = vmatmul.mubr.f32.gmra.mrb[0].mxu0 %v322
    %v390 = vpop.f32.mrb[0].mxu0
    %v391 = vadd.f32 0.0, %v390
    %v392 = vpop.f32.mrb[0].mxu0
    %393 = vdwg.mxu0
    %v394 = vrot.slane %v318, 2
    %v395 = vsel %vm320, %v394, 0
    %397 = vmatprep.subr.mxu0 0.0
    %398 = vmatpush1.msra.mxu0 %v314
    %399 = vmatprep.subr.mxu0 0.0
    %400 = vmatpush1.msra.mxu0 %v315
    %401 = vmatprep.subr.mxu0 0.0
    %402 = vmatpush1.msra.mxu0 %v316
    %403 = vmatprep.subr.mxu0 0.0
    %404 = vmatpush1.msra.mxu0 %v317
    %405 = vmatprep.subr.mxu0 0.0
    %406 = vmatpush1.msra.mxu0 0.0
    %407 = vmatprep.subr.mxu0 0.0
    %408 = vmatpush1.msra.mxu0 0.0
    %409 = vmatprep.subr.mxu0 0.0
    %410 = vmatpush1.msra.mxu0 0.0
    %411 = vmatprep.subr.mxu0 0.0
    %412 = vmatpush1.msra.mxu0 0.0
    %413 = vmatprep.subr.mxu0 0.0
    %414 = vmatpush1.msra.mxu0 0.0
    %415 = vmatprep.subr.mxu0 0.0
    %416 = vmatpush1.msra.mxu0 0.0
    %417 = vmatprep.subr.mxu0 0.0
    %418 = vmatpush1.msra.mxu0 0.0
    %419 = vmatprep.subr.mxu0 0.0
    %420 = vmatpush1.msra.mxu0 0.0
    %421 = vmatprep.subr.mxu0 0.0
    %422 = vmatpush1.msra.mxu0 0.0
    %423 = vmatprep.subr.mxu0 0.0
    %424 = vmatpush1.msra.mxu0 0.0
    %425 = vmatprep.subr.mxu0 0.0
    %426 = vmatpush1.msra.mxu0 0.0
    %427 = vmatprep.subr.mxu0 0.0
    %428 = vmatpush1.msra.mxu0 0.0
    %429 = vmatprep.subr.mxu0 0.0
    %430 = vmatpush1.msra.mxu0 0.0
    %431 = vmatprep.subr.mxu0 0.0
    %432 = vmatpush1.msra.mxu0 0.0
    %433 = vmatprep.subr.mxu0 0.0
    %434 = vmatpush1.msra.mxu0 0.0
    %435 = vmatprep.subr.mxu0 0.0
    %436 = vmatpush1.msra.mxu0 0.0
    %437 = vmatprep.subr.mxu0 0.0
    %438 = vmatpush1.msra.mxu0 0.0
    %439 = vmatprep.subr.mxu0 0.0
    %440 = vmatpush1.msra.mxu0 0.0
    %441 = vmatprep.subr.mxu0 0.0
    %442 = vmatpush1.msra.mxu0 0.0
    %443 = vmatprep.subr.mxu0 0.0
    %444 = vmatpush1.msra.mxu0 0.0
    %445 = vmatprep.subr.mxu0 0.0
    %446 = vmatpush1.msra.mxu0 0.0
    %447 = vmatprep.subr.mxu0 0.0
    %448 = vmatpush1.msra.mxu0 0.0
    %449 = vmatprep.subr.mxu0 0.0
    %450 = vmatpush1.msra.mxu0 0.0
    %451 = vmatprep.subr.mxu0 0.0
    %452 = vmatpush1.msra.mxu0 0.0
    %453 = vmatprep.subr.mxu0 0.0
    %454 = vmatpush1.msra.mxu0 0.0
    %455 = vmatprep.subr.mxu0 0.0
    %456 = vmatpush1.msra.mxu0 0.0
    %457 = vmatprep.subr.mxu0 0.0
    %458 = vmatpush1.msra.mxu0 0.0
    %459 = vmatprep.subr.mxu0 0.0
    %460 = vmatpush1.msra.mxu0 0.0
    %461 = vmatprep.mubr.f32.mxu0 0.0
    %462 = vmatmul.mubr.f32.gmra.mrb[0].mxu0 %v395
    %v463 = vpop.f32.mrb[0].mxu0
    %v464 = vadd.f32 0.0, %v463
    %v465 = vpop.f32.mrb[0].mxu0
    %466 = vdwg.mxu0
    %v467 = vld [vmem:[#allocation2] sm:$0xf]
    %s468 = scalar_lea.vmem [#allocation2], 28
    %v469 = vld [vmem:[%s468] sm:$0xf]
    %v470 = vadd.f32 %v467, %v391
    %v472 = vrot.slane %v469, 2
    %v474 = vadd.f32 %v472, %v464
    %v476 = vcombine.low %v474, %v474
    %v478 = vunpack.c.l.s4 1983009808
    %v479 = vunpack.c.0.s8 %v478
    %v480 = vlaneseq
    %v481 = vshrl.u32 %v480, 7
    %v482 = vsub.s32 %v479, %v481
    %v483 = vrot.slane %v476, %v482
    %v485 = vsel %vm304, %v470, %v483
    %v486 = vxor.u32 %v485, 2147483648
    %v487 = vmul.f32 %v486, 1.442695
    %v488 = vpow.pop %v487
    %v489 = vadd.f32 %v488, 1.0
    %v490 = vrcp.pop %v489
    %v491 = vmul.f32 1.0, %v490
    %v492 = vtanh.pop %v485
    %494 = vrot.lane.b32.xlu0 %v319, 32
    %v495 = vpop.permute.xlu0 %494
    %v497 = vmul.f32 %v491, %v495
    %499 = vrot.lane.b32.xlu0 %v492, 32
    %v500 = vpop.permute.xlu0 %499
    %v502 = vmul.f32 %v491, %v500
    %504 = vrot.lane.b32.xlu0 %v502, 32
    %v505 = vpop.permute.xlu0 %504
    %v507 = vadd.f32 %v497, %v505
    %v508 = vtanh.pop %v507
    %510 = vrot.lane.b32.xlu0 %v508, 32
    %v511 = vpop.permute.xlu0 %510
    %v513 = vmul.f32 %v491, %v511
    %v514 = vsel %vm308, 0, 7
    %vm515 = vcmp.lt.s32.totalorder %v514, %v305
    %v516 = vsel %vm515, 1, 0
    %517 = vset.pattern.permute.xlu0 0
    %518 = vperm.xlu0 %517, %v516
    %v519 = vpop.permute.xlu0 %518
    %vm520 = vcmp.eq.s32.totalorder %v519, 1
    %521 = vrot.lane.b32.xlu0 %v318, 64
    %v522 = vpop.permute.xlu0 %521
    %v524 = vsel %vm520, %v513, %v522
    %526 = vrot.lane.b32.xlu0 %v524, 64
    %v527 = vpop.permute.xlu0 %526
    %529 = vst.msk [vmem:[#allocation3] sm:$0xf] %vm299, %v527
    %v530 = vsel %vm520, %v507, %v495
    %532 = vrot.lane.b32.xlu0 %v530, 96
    %v533 = vpop.permute.xlu0 %532
    %535 = vst.msk [vmem:[#allocation4] sm:$0xf] %vm299, %v533
    %vm536 = vcmp.gt.s32.totalorder %v302, 0
    %v537 = vsel %vm536, 1, 0
    %538 = vset.pattern.permute.xlu0 0
    %539 = vperm.xlu0 %538, %v537
    %v540 = vpop.permute.xlu0 %539
    %vm541 = vcmp.eq.s32.totalorder %v540, 1
    %v542 = vsel %vm541, %v513, 0.0
    %544 = vrot.lane.b32.xlu0 %v542, 64
    %v545 = vpop.permute.xlu0 %544
    %vm547 = vcmask 254976
    %548 = vst.msk [vmem:[#allocation11] sm:$0x3] %vm547, %v545
    %vm549 = vcmp.gt.s32.totalorder %v302, 7
    %v550 = vsel %vm549, 1, 0
    %551 = vset.pattern.permute.xlu0 0
    %552 = vperm.xlu0 %551, %v550
    %v553 = vpop.permute.xlu0 %552
    %vm554 = vcmp.eq.s32.totalorder %v553, 1
    %v556 = vrot.slane %v513, 2
    %557 = vrot.lane.b32.xlu0 %v556, 64
    %v558 = vpop.permute.xlu0 %557
    %v560 = vsel %vm554, %v558, 0.0
    %562 = vrot.lane.b32.xlu0 %v560, 32
    %v563 = vpop.permute.xlu0 %562
    %s565 = scalar_lea.vmem [#allocation11], 14
    %vm566 = vcmask 517376
    %567 = vst.msk [vmem:[%s565] sm:$0x3] %vm566, %v563
    %v568 = vld [vmem:[#allocation3] sm:$0xf]
    %v569 = vld [vmem:[#allocation4] sm:$0xf]
    %v571 = vsel %vm320, %v568, 0
    %573 = vmatprep.subr.mxu0 0.0
    %574 = vmatpush1.msra.mxu0 %v309
    %575 = vmatprep.subr.mxu0 0.0
    %576 = vmatpush1.msra.mxu0 %v310
    %577 = vmatprep.subr.mxu0 0.0
    %578 = vmatpush1.msra.mxu0 %v311
    %579 = vmatprep.subr.mxu0 0.0
    %580 = vmatpush1.msra.mxu0 %v312
    %581 = vmatprep.subr.mxu0 0.0
    %582 = vmatpush1.msra.mxu0 0.0
    %583 = vmatprep.subr.mxu0 0.0
    %584 = vmatpush1.msra.mxu0 0.0
    %585 = vmatprep.subr.mxu0 0.0
    %586 = vmatpush1.msra.mxu0 0.0
    %587 = vmatprep.subr.mxu0 0.0
    %588 = vmatpush1.msra.mxu0 0.0
    %589 = vmatprep.subr.mxu0 0.0
    %590 = vmatpush1.msra.mxu0 0.0
    %591 = vmatprep.subr.mxu0 0.0
    %592 = vmatpush1.msra.mxu0 0.0
    %593 = vmatprep.subr.mxu0 0.0
    %594 = vmatpush1.msra.mxu0 0.0
    %595 = vmatprep.subr.mxu0 0.0
    %596 = vmatpush1.msra.mxu0 0.0
    %597 = vmatprep.subr.mxu0 0.0
    %598 = vmatpush1.msra.mxu0 0.0
    %599 = vmatprep.subr.mxu0 0.0
    %600 = vmatpush1.msra.mxu0 0.0
    %601 = vmatprep.subr.mxu0 0.0
    %602 = vmatpush1.msra.mxu0 0.0
    %603 = vmatprep.subr.mxu0 0.0
    %604 = vmatpush1.msra.mxu0 0.0
    %605 = vmatprep.subr.mxu0 0.0
    %606 = vmatpush1.msra.mxu0 0.0
    %607 = vmatprep.subr.mxu0 0.0
    %608 = vmatpush1.msra.mxu0 0.0
    %609 = vmatprep.subr.mxu0 0.0
    %610 = vmatpush1.msra.mxu0 0.0
    %611 = vmatprep.subr.mxu0 0.0
    %612 = vmatpush1.msra.mxu0 0.0
    %613 = vmatprep.subr.mxu0 0.0
    %614 = vmatpush1.msra.mxu0 0.0
    %615 = vmatprep.subr.mxu0 0.0
    %616 = vmatpush1.msra.mxu0 0.0
    %617 = vmatprep.subr.mxu0 0.0
    %618 = vmatpush1.msra.mxu0 0.0
    %619 = vmatprep.subr.mxu0 0.0
    %620 = vmatpush1.msra.mxu0 0.0
    %621 = vmatprep.subr.mxu0 0.0
    %622 = vmatpush1.msra.mxu0 0.0
    %623 = vmatprep.subr.mxu0 0.0
    %624 = vmatpush1.msra.mxu0 0.0
    %625 = vmatprep.subr.mxu0 0.0
    %626 = vmatpush1.msra.mxu0 0.0
    %627 = vmatprep.subr.mxu0 0.0
    %628 = vmatpush1.msra.mxu0 0.0
    %629 = vmatprep.subr.mxu0 0.0
    %630 = vmatpush1.msra.mxu0 0.0
    %631 = vmatprep.subr.mxu0 0.0
    %632 = vmatpush1.msra.mxu0 0.0
    %633 = vmatprep.subr.mxu0 0.0
    %634 = vmatpush1.msra.mxu0 0.0
    %635 = vmatprep.subr.mxu0 0.0
    %636 = vmatpush1.msra.mxu0 0.0
    %637 = vmatprep.mubr.f32.mxu0 0.0
    %638 = vmatmul.mubr.f32.gmra.mrb[0].mxu0 %v571
    %v639 = vpop.f32.mrb[0].mxu0
    %v640 = vadd.f32 0.0, %v639
    %v641 = vpop.f32.mrb[0].mxu0
    %642 = vdwg.mxu0
    %v643 = vrot.slane %v568, 2
    %v644 = vsel %vm320, %v643, 0
    %646 = vmatprep.subr.mxu0 0.0
    %647 = vmatpush1.msra.mxu0 %v314
    %648 = vmatprep.subr.mxu0 0.0
    %649 = vmatpush1.msra.mxu0 %v315
    %650 = vmatprep.subr.mxu0 0.0
    %651 = vmatpush1.msra.mxu0 %v316
    %652 = vmatprep.subr.mxu0 0.0
    %653 = vmatpush1.msra.mxu0 %v317
    %654 = vmatprep.subr.mxu0 0.0
    %655 = vmatpush1.msra.mxu0 0.0
    %656 = vmatprep.subr.mxu0 0.0
    %657 = vmatpush1.msra.mxu0 0.0
    %658 = vmatprep.subr.mxu0 0.0
    %659 = vmatpush1.msra.mxu0 0.0
    %660 = vmatprep.subr.mxu0 0.0
    %661 = vmatpush1.msra.mxu0 0.0
    %662 = vmatprep.subr.mxu0 0.0
    %663 = vmatpush1.msra.mxu0 0.0
    %664 = vmatprep.subr.mxu0 0.0
    %665 = vmatpush1.msra.mxu0 0.0
    %666 = vmatprep.subr.mxu0 0.0
    %667 = vmatpush1.msra.mxu0 0.0
    %668 = vmatprep.subr.mxu0 0.0
    %669 = vmatpush1.msra.mxu0 0.0
    %670 = vmatprep.subr.mxu0 0.0
    %671 = vmatpush1.msra.mxu0 0.0
    %672 = vmatprep.subr.mxu0 0.0
    %673 = vmatpush1.msra.mxu0 0.0
    %674 = vmatprep.subr.mxu0 0.0
    %675 = vmatpush1.msra.mxu0 0.0
    %676 = vmatprep.subr.mxu0 0.0
    %677 = vmatpush1.msra.mxu0 0.0
    %678 = vmatprep.subr.mxu0 0.0
    %679 = vmatpush1.msra.mxu0 0.0
    %680 = vmatprep.subr.mxu0 0.0
    %681 = vmatpush1.msra.mxu0 0.0
    %682 = vmatprep.subr.mxu0 0.0
    %683 = vmatpush1.msra.mxu0 0.0
    %684 = vmatprep.subr.mxu0 0.0
    %685 = vmatpush1.msra.mxu0 0.0
    %686 = vmatprep.subr.mxu0 0.0
    %687 = vmatpush1.msra.mxu0 0.0
    %688 = vmatprep.subr.mxu0 0.0
    %689 = vmatpush1.msra.mxu0 0.0
    %690 = vmatprep.subr.mxu0 0.0
    %691 = vmatpush1.msra.mxu0 0.0
    %692 = vmatprep.subr.mxu0 0.0
    %693 = vmatpush1.msra.mxu0 0.0
    %694 = vmatprep.subr.mxu0 0.0
    %695 = vmatpush1.msra.mxu0 0.0
    %696 = vmatprep.subr.mxu0 0.0
    %697 = vmatpush1.msra.mxu0 0.0
    %698 = vmatprep.subr.mxu0 0.0
    %699 = vmatpush1.msra.mxu0 0.0
    %700 = vmatprep.subr.mxu0 0.0
    %701 = vmatpush1.msra.mxu0 0.0
    %702 = vmatprep.subr.mxu0 0.0
    %703 = vmatpush1.msra.mxu0 0.0
    %704 = vmatprep.subr.mxu0 0.0
    %705 = vmatpush1.msra.mxu0 0.0
    %706 = vmatprep.subr.mxu0 0.0
    %707 = vmatpush1.msra.mxu0 0.0
    %708 = vmatprep.subr.mxu0 0.0
    %709 = vmatpush1.msra.mxu0 0.0
    %710 = vmatprep.mubr.f32.mxu0 0.0
    %711 = vmatmul.mubr.f32.gmra.mrb[0].mxu0 %v644
    %v712 = vpop.f32.mrb[0].mxu0
    %v713 = vadd.f32 0.0, %v712
    %v714 = vpop.f32.mrb[0].mxu0
    %715 = vdwg.mxu0
    %s716 = scalar_lea.vmem [#allocation2], 4
    %v717 = vld [vmem:[%s716] sm:$0xf]
    %s718 = scalar_lea.vmem [#allocation2], 24
    %v719 = vld [vmem:[%s718] sm:$0xf]
    %v720 = vadd.f32 %v717, %v640
    %v722 = vrot.slane %v719, 2
    %v724 = vadd.f32 %v722, %v713
    %v726 = vcombine.low %v724, %v724
    %v728 = vunpack.c.l.s4 1983009808
    %v729 = vunpack.c.0.s8 %v728
    %v730 = vlaneseq
    %v731 = vshrl.u32 %v730, 7
    %v732 = vsub.s32 %v729, %v731
    %v733 = vrot.slane %v726, %v732
    %v735 = vsel %vm304, %v720, %v733
    %v736 = vxor.u32 %v735, 2147483648
    %v737 = vmul.f32 %v736, 1.442695
    %v738 = vpow.pop %v737
    %v739 = vadd.f32 %v738, 1.0
    %v740 = vrcp.pop %v739
    %v741 = vmul.f32 1.0, %v740
    %v742 = vtanh.pop %v735
    %744 = vrot.lane.b32.xlu0 %v569, 32
    %v745 = vpop.permute.xlu0 %744
    %v747 = vmul.f32 %v741, %v745
    %749 = vrot.lane.b32.xlu0 %v742, 32
    %v750 = vpop.permute.xlu0 %749
    %v752 = vmul.f32 %v741, %v750
    %754 = vrot.lane.b32.xlu0 %v752, 32
    %v755 = vpop.permute.xlu0 %754
    %v757 = vadd.f32 %v747, %v755
    %v758 = vtanh.pop %v757
    %760 = vrot.lane.b32.xlu0 %v758, 32
    %v761 = vpop.permute.xlu0 %760
    %v763 = vmul.f32 %v741, %v761
    %v764 = vsel %vm308, 1, 6
    %vm765 = vcmp.lt.s32.totalorder %v764, %v305
    %v766 = vsel %vm765, 1, 0
    %767 = vset.pattern.permute.xlu0 0
    %768 = vperm.xlu0 %767, %v766
    %v769 = vpop.permute.xlu0 %768
    %vm770 = vcmp.eq.s32.totalorder %v769, 1
    %771 = vrot.lane.b32.xlu0 %v568, 64
    %v772 = vpop.permute.xlu0 %771
    %v774 = vsel %vm770, %v763, %v772
    %776 = vrot.lane.b32.xlu0 %v774, 64
    %v777 = vpop.permute.xlu0 %776
    %779 = vst.msk [vmem:[#allocation3] sm:$0xf] %vm299, %v777
    %v780 = vsel %vm770, %v757, %v745
    %782 = vrot.lane.b32.xlu0 %v780, 96
    %v783 = vpop.permute.xlu0 %782
    %785 = vst.msk [vmem:[#allocation4] sm:$0xf] %vm299, %v783
    %vm786 = vcmp.gt.s32.totalorder %v302, 1
    %v787 = vsel %vm786, 1, 0
    %788 = vset.pattern.permute.xlu0 0
    %789 = vperm.xlu0 %788, %v787
    %v790 = vpop.permute.xlu0 %789
    %vm791 = vcmp.eq.s32.totalorder %v790, 1
    %v792 = vsel %vm791, %v763, 0.0
    %794 = vrot.lane.b32.xlu0 %v792, 64
    %v795 = vpop.permute.xlu0 %794
    %s797 = scalar_lea.vmem [#allocation11], 2
    %798 = vst.msk [vmem:[%s797] sm:$0x3] %vm547, %v795
    %vm799 = vcmp.gt.s32.totalorder %v302, 6
    %v800 = vsel %vm799, 1, 0
    %801 = vset.pattern.permute.xlu0 0
    %802 = vperm.xlu0 %801, %v800
    %v803 = vpop.permute.xlu0 %802
    %vm804 = vcmp.eq.s32.totalorder %v803, 1
    %v806 = vrot.slane %v763, 2
    %807 = vrot.lane.b32.xlu0 %v806, 64
    %v808 = vpop.permute.xlu0 %807
    %v810 = vsel %vm804, %v808, 0.0
    %812 = vrot.lane.b32.xlu0 %v810, 32
    %v813 = vpop.permute.xlu0 %812
    %s815 = scalar_lea.vmem [#allocation11], 12
    %816 = vst.msk [vmem:[%s815] sm:$0x3] %vm566, %v813
    %v817 = vld [vmem:[#allocation3] sm:$0xf]
    %v818 = vld [vmem:[#allocation4] sm:$0xf]
    %v820 = vsel %vm320, %v817, 0
    %822 = vmatprep.subr.mxu0 0.0
    %823 = vmatpush1.msra.mxu0 %v309
    %824 = vmatprep.subr.mxu0 0.0
    %825 = vmatpush1.msra.mxu0 %v310
    %826 = vmatprep.subr.mxu0 0.0
    %827 = vmatpush1.msra.mxu0 %v311
    %828 = vmatprep.subr.mxu0 0.0
    %829 = vmatpush1.msra.mxu0 %v312
    %830 = vmatprep.subr.mxu0 0.0
    %831 = vmatpush1.msra.mxu0 0.0
    %832 = vmatprep.subr.mxu0 0.0
    %833 = vmatpush1.msra.mxu0 0.0
    %834 = vmatprep.subr.mxu0 0.0
    %835 = vmatpush1.msra.mxu0 0.0
    %836 = vmatprep.subr.mxu0 0.0
    %837 = vmatpush1.msra.mxu0 0.0
    %838 = vmatprep.subr.mxu0 0.0
    %839 = vmatpush1.msra.mxu0 0.0
    %840 = vmatprep.subr.mxu0 0.0
    %841 = vmatpush1.msra.mxu0 0.0
    %842 = vmatprep.subr.mxu0 0.0
    %843 = vmatpush1.msra.mxu0 0.0
    %844 = vmatprep.subr.mxu0 0.0
    %845 = vmatpush1.msra.mxu0 0.0
    %846 = vmatprep.subr.mxu0 0.0
    %847 = vmatpush1.msra.mxu0 0.0
    %848 = vmatprep.subr.mxu0 0.0
    %849 = vmatpush1.msra.mxu0 0.0
    %850 = vmatprep.subr.mxu0 0.0
    %851 = vmatpush1.msra.mxu0 0.0
    %852 = vmatprep.subr.mxu0 0.0
    %853 = vmatpush1.msra.mxu0 0.0
    %854 = vmatprep.subr.mxu0 0.0
    %855 = vmatpush1.msra.mxu0 0.0
    %856 = vmatprep.subr.mxu0 0.0
    %857 = vmatpush1.msra.mxu0 0.0
    %858 = vmatprep.subr.mxu0 0.0
    %859 = vmatpush1.msra.mxu0 0.0
    %860 = vmatprep.subr.mxu0 0.0
    %861 = vmatpush1.msra.mxu0 0.0
    %862 = vmatprep.subr.mxu0 0.0
    %863 = vmatpush1.msra.mxu0 0.0
    %864 = vmatprep.subr.mxu0 0.0
    %865 = vmatpush1.msra.mxu0 0.0
    %866 = vmatprep.subr.mxu0 0.0
    %867 = vmatpush1.msra.mxu0 0.0
    %868 = vmatprep.subr.mxu0 0.0
    %869 = vmatpush1.msra.mxu0 0.0
    %870 = vmatprep.subr.mxu0 0.0
    %871 = vmatpush1.msra.mxu0 0.0
    %872 = vmatprep.subr.mxu0 0.0
    %873 = vmatpush1.msra.mxu0 0.0
    %874 = vmatprep.subr.mxu0 0.0
    %875 = vmatpush1.msra.mxu0 0.0
    %876 = vmatprep.subr.mxu0 0.0
    %877 = vmatpush1.msra.mxu0 0.0
    %878 = vmatprep.subr.mxu0 0.0
    %879 = vmatpush1.msra.mxu0 0.0
    %880 = vmatprep.subr.mxu0 0.0
    %881 = vmatpush1.msra.mxu0 0.0
    %882 = vmatprep.subr.mxu0 0.0
    %883 = vmatpush1.msra.mxu0 0.0
    %884 = vmatprep.subr.mxu0 0.0
    %885 = vmatpush1.msra.mxu0 0.0
    %886 = vmatprep.mubr.f32.mxu0 0.0
    %887 = vmatmul.mubr.f32.gmra.mrb[0].mxu0 %v820
    %v888 = vpop.f32.mrb[0].mxu0
    %v889 = vadd.f32 0.0, %v888
    %v890 = vpop.f32.mrb[0].mxu0
    %891 = vdwg.mxu0
    %v892 = vrot.slane %v817, 2
    %v893 = vsel %vm320, %v892, 0
    %895 = vmatprep.subr.mxu0 0.0
    %896 = vmatpush1.msra.mxu0 %v314
    %897 = vmatprep.subr.mxu0 0.0
    %898 = vmatpush1.msra.mxu0 %v315
    %899 = vmatprep.subr.mxu0 0.0
    %900 = vmatpush1.msra.mxu0 %v316
    %901 = vmatprep.subr.mxu0 0.0
    %902 = vmatpush1.msra.mxu0 %v317
    %903 = vmatprep.subr.mxu0 0.0
    %904 = vmatpush1.msra.mxu0 0.0
    %905 = vmatprep.subr.mxu0 0.0
    %906 = vmatpush1.msra.mxu0 0.0
    %907 = vmatprep.subr.mxu0 0.0
    %908 = vmatpush1.msra.mxu0 0.0
    %909 = vmatprep.subr.mxu0 0.0
    %910 = vmatpush1.msra.mxu0 0.0
    %911 = vmatprep.subr.mxu0 0.0
    %912 = vmatpush1.msra.mxu0 0.0
    %913 = vmatprep.subr.mxu0 0.0
    %914 = vmatpush1.msra.mxu0 0.0
    %915 = vmatprep.subr.mxu0 0.0
    %916 = vmatpush1.msra.mxu0 0.0
    %917 = vmatprep.subr.mxu0 0.0
    %918 = vmatpush1.msra.mxu0 0.0
    %919 = vmatprep.subr.mxu0 0.0
    %920 = vmatpush1.msra.mxu0 0.0
    %921 = vmatprep.subr.mxu0 0.0
    %922 = vmatpush1.msra.mxu0 0.0
    %923 = vmatprep.subr.mxu0 0.0
    %924 = vmatpush1.msra.mxu0 0.0
    %925 = vmatprep.subr.mxu0 0.0
    %926 = vmatpush1.msra.mxu0 0.0
    %927 = vmatprep.subr.mxu0 0.0
    %928 = vmatpush1.msra.mxu0 0.0
    %929 = vmatprep.subr.mxu0 0.0
    %930 = vmatpush1.msra.mxu0 0.0
    %931 = vmatprep.subr.mxu0 0.0
    %932 = vmatpush1.msra.mxu0 0.0
    %933 = vmatprep.subr.mxu0 0.0
    %934 = vmatpush1.msra.mxu0 0.0
    %935 = vmatprep.subr.mxu0 0.0
    %936 = vmatpush1.msra.mxu0 0.0
    %937 = vmatprep.subr.mxu0 0.0
    %938 = vmatpush1.msra.mxu0 0.0
    %939 = vmatprep.subr.mxu0 0.0
    %940 = vmatpush1.msra.mxu0 0.0
    %941 = vmatprep.subr.mxu0 0.0
    %942 = vmatpush1.msra.mxu0 0.0
    %943 = vmatprep.subr.mxu0 0.0
    %944 = vmatpush1.msra.mxu0 0.0
    %945 = vmatprep.subr.mxu0 0.0
    %946 = vmatpush1.msra.mxu0 0.0
    %947 = vmatprep.subr.mxu0 0.0
    %948 = vmatpush1.msra.mxu0 0.0
    %949 = vmatprep.subr.mxu0 0.0
    %950 = vmatpush1.msra.mxu0 0.0
    %951 = vmatprep.subr.mxu0 0.0
    %952 = vmatpush1.msra.mxu0 0.0
    %953 = vmatprep.subr.mxu0 0.0
    %954 = vmatpush1.msra.mxu0 0.0
    %955 = vmatprep.subr.mxu0 0.0
    %956 = vmatpush1.msra.mxu0 0.0
    %957 = vmatprep.subr.mxu0 0.0
    %958 = vmatpush1.msra.mxu0 0.0
    %959 = vmatprep.mubr.f32.mxu0 0.0
    %960 = vmatmul.mubr.f32.gmra.mrb[0].mxu0 %v893
    %v961 = vpop.f32.mrb[0].mxu0
    %v962 = vadd.f32 0.0, %v961
    %v963 = vpop.f32.mrb[0].mxu0
    %964 = vdwg.mxu0
    %s965 = scalar_lea.vmem [#allocation2], 8
    %v966 = vld [vmem:[%s965] sm:$0xf]
    %s967 = scalar_lea.vmem [#allocation2], 20
    %v968 = vld [vmem:[%s967] sm:$0xf]
    %v969 = vadd.f32 %v966, %v889
    %v971 = vrot.slane %v968, 2
    %v973 = vadd.f32 %v971, %v962
    %v975 = vcombine.low %v973, %v973
    %v977 = vunpack.c.l.s4 1983009808
    %v978 = vunpack.c.0.s8 %v977
    %v979 = vlaneseq
    %v980 = vshrl.u32 %v979, 7
    %v981 = vsub.s32 %v978, %v980
    %v982 = vrot.slane %v975, %v981
    %v984 = vsel %vm304, %v969, %v982
    %v985 = vxor.u32 %v984, 2147483648
    %v986 = vmul.f32 %v985, 1.442695
    %v987 = vpow.pop %v986
    %v988 = vadd.f32 %v987, 1.0
    %v989 = vrcp.pop %v988
    %v990 = vmul.f32 1.0, %v989
    %v991 = vtanh.pop %v984
    %993 = vrot.lane.b32.xlu0 %v818, 32
    %v994 = vpop.permute.xlu0 %993
    %v996 = vmul.f32 %v990, %v994
    %998 = vrot.lane.b32.xlu0 %v991, 32
    %v999 = vpop.permute.xlu0 %998
    %v1001 = vmul.f32 %v990, %v999
    %1003 = vrot.lane.b32.xlu0 %v1001, 32
    %v1004 = vpop.permute.xlu0 %1003
    %v1006 = vadd.f32 %v996, %v1004
    %v1007 = vtanh.pop %v1006
    %1009 = vrot.lane.b32.xlu0 %v1007, 32
    %v1010 = vpop.permute.xlu0 %1009
    %v1012 = vmul.f32 %v990, %v1010
    %v1013 = vsel %vm308, 2, 5
    %vm1014 = vcmp.lt.s32.totalorder %v1013, %v305
    %v1015 = vsel %vm1014, 1, 0
    %1016 = vset.pattern.permute.xlu0 0
    %1017 = vperm.xlu0 %1016, %v1015
    %v1018 = vpop.permute.xlu0 %1017
    %vm1019 = vcmp.eq.s32.totalorder %v1018, 1
    %1020 = vrot.lane.b32.xlu0 %v817, 64
    %v1021 = vpop.permute.xlu0 %1020
    %v1023 = vsel %vm1019, %v1012, %v1021
    %1025 = vrot.lane.b32.xlu0 %v1023, 64
    %v1026 = vpop.permute.xlu0 %1025
    %1028 = vst.msk [vmem:[#allocation3] sm:$0xf] %vm299, %v1026
    %v1029 = vsel %vm1019, %v1006, %v994
    %1031 = vrot.lane.b32.xlu0 %v1029, 96
    %v1032 = vpop.permute.xlu0 %1031
    %1034 = vst.msk [vmem:[#allocation4] sm:$0xf] %vm299, %v1032
    %vm1035 = vcmp.gt.s32.totalorder %v302, 2
    %v1036 = vsel %vm1035, 1, 0
    %1037 = vset.pattern.permute.xlu0 0
    %1038 = vperm.xlu0 %1037, %v1036
    %v1039 = vpop.permute.xlu0 %1038
    %vm1040 = vcmp.eq.s32.totalorder %v1039, 1
    %v1041 = vsel %vm1040, %v1012, 0.0
    %1043 = vrot.lane.b32.xlu0 %v1041, 64
    %v1044 = vpop.permute.xlu0 %1043
    %s1046 = scalar_lea.vmem [#allocation11], 4
    %1047 = vst.msk [vmem:[%s1046] sm:$0x3] %vm547, %v1044
    %vm1048 = vcmp.gt.s32.totalorder %v302, 5
    %v1049 = vsel %vm1048, 1, 0
    %1050 = vset.pattern.permute.xlu0 0
    %1051 = vperm.xlu0 %1050, %v1049
    %v1052 = vpop.permute.xlu0 %1051
    %vm1053 = vcmp.eq.s32.totalorder %v1052, 1
    %v1055 = vrot.slane %v1012, 2
    %1056 = vrot.lane.b32.xlu0 %v1055, 64
    %v1057 = vpop.permute.xlu0 %1056
    %v1059 = vsel %vm1053, %v1057, 0.0
    %1061 = vrot.lane.b32.xlu0 %v1059, 32
    %v1062 = vpop.permute.xlu0 %1061
    %s1064 = scalar_lea.vmem [#allocation11], 10
    %1065 = vst.msk [vmem:[%s1064] sm:$0x3] %vm566, %v1062
    %v1066 = vld [vmem:[#allocation3] sm:$0xf]
    %v1067 = vld [vmem:[#allocation4] sm:$0xf]
    %v1069 = vsel %vm320, %v1066, 0
    %1071 = vmatprep.subr.mxu0 0.0
    %1072 = vmatpush1.msra.mxu0 %v309
    %1073 = vmatprep.subr.mxu0 0.0
    %1074 = vmatpush1.msra.mxu0 %v310
    %1075 = vmatprep.subr.mxu0 0.0
    %1076 = vmatpush1.msra.mxu0 %v311
    %1077 = vmatprep.subr.mxu0 0.0
    %1078 = vmatpush1.msra.mxu0 %v312
    %1079 = vmatprep.subr.mxu0 0.0
    %1080 = vmatpush1.msra.mxu0 0.0
    %1081 = vmatprep.subr.mxu0 0.0
    %1082 = vmatpush1.msra.mxu0 0.0
    %1083 = vmatprep.subr.mxu0 0.0
    %1084 = vmatpush1.msra.mxu0 0.0
    %1085 = vmatprep.subr.mxu0 0.0
    %1086 = vmatpush1.msra.mxu0 0.0
    %1087 = vmatprep.subr.mxu0 0.0
    %1088 = vmatpush1.msra.mxu0 0.0
    %1089 = vmatprep.subr.mxu0 0.0
    %1090 = vmatpush1.msra.mxu0 0.0
    %1091 = vmatprep.subr.mxu0 0.0
    %1092 = vmatpush1.msra.mxu0 0.0
    %1093 = vmatprep.subr.mxu0 0.0
    %1094 = vmatpush1.msra.mxu0 0.0
    %1095 = vmatprep.subr.mxu0 0.0
    %1096 = vmatpush1.msra.mxu0 0.0
    %1097 = vmatprep.subr.mxu0 0.0
    %1098 = vmatpush1.msra.mxu0 0.0
    %1099 = vmatprep.subr.mxu0 0.0
    %1100 = vmatpush1.msra.mxu0 0.0
    %1101 = vmatprep.subr.mxu0 0.0
    %1102 = vmatpush1.msra.mxu0 0.0
    %1103 = vmatprep.subr.mxu0 0.0
    %1104 = vmatpush1.msra.mxu0 0.0
    %1105 = vmatprep.subr.mxu0 0.0
    %1106 = vmatpush1.msra.mxu0 0.0
    %1107 = vmatprep.subr.mxu0 0.0
    %1108 = vmatpush1.msra.mxu0 0.0
    %1109 = vmatprep.subr.mxu0 0.0
    %1110 = vmatpush1.msra.mxu0 0.0
    %1111 = vmatprep.subr.mxu0 0.0
    %1112 = vmatpush1.msra.mxu0 0.0
    %1113 = vmatprep.subr.mxu0 0.0
    %1114 = vmatpush1.msra.mxu0 0.0
    %1115 = vmatprep.subr.mxu0 0.0
    %1116 = vmatpush1.msra.mxu0 0.0
    %1117 = vmatprep.subr.mxu0 0.0
    %1118 = vmatpush1.msra.mxu0 0.0
    %1119 = vmatprep.subr.mxu0 0.0
    %1120 = vmatpush1.msra.mxu0 0.0
    %1121 = vmatprep.subr.mxu0 0.0
    %1122 = vmatpush1.msra.mxu0 0.0
    %1123 = vmatprep.subr.mxu0 0.0
    %1124 = vmatpush1.msra.mxu0 0.0
    %1125 = vmatprep.subr.mxu0 0.0
    %1126 = vmatpush1.msra.mxu0 0.0
    %1127 = vmatprep.subr.mxu0 0.0
    %1128 = vmatpush1.msra.mxu0 0.0
    %1129 = vmatprep.subr.mxu0 0.0
    %1130 = vmatpush1.msra.mxu0 0.0
    %1131 = vmatprep.subr.mxu0 0.0
    %1132 = vmatpush1.msra.mxu0 0.0
    %1133 = vmatprep.subr.mxu0 0.0
    %1134 = vmatpush1.msra.mxu0 0.0
    %1135 = vmatprep.mubr.f32.mxu0 0.0
    %1136 = vmatmul.mubr.f32.gmra.mrb[0].mxu0 %v1069
    %v1137 = vpop.f32.mrb[0].mxu0
    %v1138 = vadd.f32 0.0, %v1137
    %v1139 = vpop.f32.mrb[0].mxu0
    %1140 = vdwg.mxu0
    %v1141 = vrot.slane %v1066, 2
    %v1142 = vsel %vm320, %v1141, 0
    %1144 = vmatprep.subr.mxu0 0.0
    %1145 = vmatpush1.msra.mxu0 %v314
    %1146 = vmatprep.subr.mxu0 0.0
    %1147 = vmatpush1.msra.mxu0 %v315
    %1148 = vmatprep.subr.mxu0 0.0
    %1149 = vmatpush1.msra.mxu0 %v316
    %1150 = vmatprep.subr.mxu0 0.0
    %1151 = vmatpush1.msra.mxu0 %v317
    %1152 = vmatprep.subr.mxu0 0.0
    %1153 = vmatpush1.msra.mxu0 0.0
    %1154 = vmatprep.subr.mxu0 0.0
    %1155 = vmatpush1.msra.mxu0 0.0
    %1156 = vmatprep.subr.mxu0 0.0
    %1157 = vmatpush1.msra.mxu0 0.0
    %1158 = vmatprep.subr.mxu0 0.0
    %1159 = vmatpush1.msra.mxu0 0.0
    %1160 = vmatprep.subr.mxu0 0.0
    %1161 = vmatpush1.msra.mxu0 0.0
    %1162 = vmatprep.subr.mxu0 0.0
    %1163 = vmatpush1.msra.mxu0 0.0
    %1164 = vmatprep.subr.mxu0 0.0
    %1165 = vmatpush1.msra.mxu0 0.0
    %1166 = vmatprep.subr.mxu0 0.0
    %1167 = vmatpush1.msra.mxu0 0.0
    %1168 = vmatprep.subr.mxu0 0.0
    %1169 = vmatpush1.msra.mxu0 0.0
    %1170 = vmatprep.subr.mxu0 0.0
    %1171 = vmatpush1.msra.mxu0 0.0
    %1172 = vmatprep.subr.mxu0 0.0
    %1173 = vmatpush1.msra.mxu0 0.0
    %1174 = vmatprep.subr.mxu0 0.0
    %1175 = vmatpush1.msra.mxu0 0.0
    %1176 = vmatprep.subr.mxu0 0.0
    %1177 = vmatpush1.msra.mxu0 0.0
    %1178 = vmatprep.subr.mxu0 0.0
    %1179 = vmatpush1.msra.mxu0 0.0
    %1180 = vmatprep.subr.mxu0 0.0
    %1181 = vmatpush1.msra.mxu0 0.0
    %1182 = vmatprep.subr.mxu0 0.0
    %1183 = vmatpush1.msra.mxu0 0.0
    %1184 = vmatprep.subr.mxu0 0.0
    %1185 = vmatpush1.msra.mxu0 0.0
    %1186 = vmatprep.subr.mxu0 0.0
    %1187 = vmatpush1.msra.mxu0 0.0
    %1188 = vmatprep.subr.mxu0 0.0
    %1189 = vmatpush1.msra.mxu0 0.0
    %1190 = vmatprep.subr.mxu0 0.0
    %1191 = vmatpush1.msra.mxu0 0.0
    %1192 = vmatprep.subr.mxu0 0.0
    %1193 = vmatpush1.msra.mxu0 0.0
    %1194 = vmatprep.subr.mxu0 0.0
    %1195 = vmatpush1.msra.mxu0 0.0
    %1196 = vmatprep.subr.mxu0 0.0
    %1197 = vmatpush1.msra.mxu0 0.0
    %1198 = vmatprep.subr.mxu0 0.0
    %1199 = vmatpush1.msra.mxu0 0.0
    %1200 = vmatprep.subr.mxu0 0.0
    %1201 = vmatpush1.msra.mxu0 0.0
    %1202 = vmatprep.subr.mxu0 0.0
    %1203 = vmatpush1.msra.mxu0 0.0
    %1204 = vmatprep.subr.mxu0 0.0
    %1205 = vmatpush1.msra.mxu0 0.0
    %1206 = vmatprep.subr.mxu0 0.0
    %1207 = vmatpush1.msra.mxu0 0.0
    %1208 = vmatprep.mubr.f32.mxu0 0.0
    %1209 = vmatmul.mubr.f32.gmra.mrb[0].mxu0 %v1142
    %v1210 = vpop.f32.mrb[0].mxu0
    %v1211 = vadd.f32 0.0, %v1210
    %v1212 = vpop.f32.mrb[0].mxu0
    %1213 = vdwg.mxu0
    %s1214 = scalar_lea.vmem [#allocation2], 12
    %v1215 = vld [vmem:[%s1214] sm:$0xf]
    %s1216 = scalar_lea.vmem [#allocation2], 16
    %v1217 = vld [vmem:[%s1216] sm:$0xf]
    %v1218 = vadd.f32 %v1215, %v1138
    %v1220 = vrot.slane %v1217, 2
    %v1222 = vadd.f32 %v1220, %v1211
    %v1224 = vcombine.low %v1222, %v1222
    %v1226 = vunpack.c.l.s4 1983009808
    %v1227 = vunpack.c.0.s8 %v1226
    %v1228 = vlaneseq
    %v1229 = vshrl.u32 %v1228, 7
    %v1230 = vsub.s32 %v1227, %v1229
    %v1231 = vrot.slane %v1224, %v1230
    %v1233 = vsel %vm304, %v1218, %v1231
    %v1234 = vxor.u32 %v1233, 2147483648
    %v1235 = vmul.f32 %v1234, 1.442695
    %v1236 = vpow.pop %v1235
    %v1237 = vadd.f32 %v1236, 1.0
    %v1238 = vrcp.pop %v1237
    %v1239 = vmul.f32 1.0, %v1238
    %v1240 = vtanh.pop %v1233
    %1242 = vrot.lane.b32.xlu0 %v1067, 32
    %v1243 = vpop.permute.xlu0 %1242
    %v1245 = vmul.f32 %v1239, %v1243
    %1247 = vrot.lane.b32.xlu0 %v1240, 32
    %v1248 = vpop.permute.xlu0 %1247
    %v1250 = vmul.f32 %v1239, %v1248
    %1252 = vrot.lane.b32.xlu0 %v1250, 32
    %v1253 = vpop.permute.xlu0 %1252
    %v1255 = vadd.f32 %v1245, %v1253
    %v1256 = vtanh.pop %v1255
    %1258 = vrot.lane.b32.xlu0 %v1256, 32
    %v1259 = vpop.permute.xlu0 %1258
    %v1261 = vmul.f32 %v1239, %v1259
    %v1262 = vsel %vm308, 3, 4
    %vm1263 = vcmp.lt.s32.totalorder %v1262, %v305
    %v1264 = vsel %vm1263, 1, 0
    %1265 = vset.pattern.permute.xlu0 0
    %1266 = vperm.xlu0 %1265, %v1264
    %v1267 = vpop.permute.xlu0 %1266
    %vm1268 = vcmp.eq.s32.totalorder %v1267, 1
    %1269 = vrot.lane.b32.xlu0 %v1066, 64
    %v1270 = vpop.permute.xlu0 %1269
    %v1272 = vsel %vm1268, %v1261, %v1270
    %1274 = vrot.lane.b32.xlu0 %v1272, 64
    %v1275 = vpop.permute.xlu0 %1274
    %1277 = vst.msk [vmem:[#allocation3] sm:$0xf] %vm299, %v1275
    %v1278 = vsel %vm1268, %v1255, %v1243
    %1280 = vrot.lane.b32.xlu0 %v1278, 96
    %v1281 = vpop.permute.xlu0 %1280
    %1283 = vst.msk [vmem:[#allocation4] sm:$0xf] %vm299, %v1281
    %vm1284 = vcmp.gt.s32.totalorder %v302, 3
    %v1285 = vsel %vm1284, 1, 0
    %1286 = vset.pattern.permute.xlu0 0
    %1287 = vperm.xlu0 %1286, %v1285
    %v1288 = vpop.permute.xlu0 %1287
    %vm1289 = vcmp.eq.s32.totalorder %v1288, 1
    %v1290 = vsel %vm1289, %v1261, 0.0
    %1292 = vrot.lane.b32.xlu0 %v1290, 64
    %v1293 = vpop.permute.xlu0 %1292
    %s1295 = scalar_lea.vmem [#allocation11], 6
    %1296 = vst.msk [vmem:[%s1295] sm:$0x3] %vm547, %v1293
    %vm1297 = vcmp.gt.s32.totalorder %v302, 4
    %v1298 = vsel %vm1297, 1, 0
    %1299 = vset.pattern.permute.xlu0 0
    %1300 = vperm.xlu0 %1299, %v1298
    %v1301 = vpop.permute.xlu0 %1300
    %vm1302 = vcmp.eq.s32.totalorder %v1301, 1
    %v1304 = vrot.slane %v1261, 2
    %1305 = vrot.lane.b32.xlu0 %v1304, 64
    %v1306 = vpop.permute.xlu0 %1305
    %v1308 = vsel %vm1302, %v1306, 0.0
    %1310 = vrot.lane.b32.xlu0 %v1308, 32
    %v1311 = vpop.permute.xlu0 %1310
    %s1313 = scalar_lea.vmem [#allocation11], 8
    %1314 = vst.msk [vmem:[%s1313] sm:$0x3] %vm566, %v1311
    %v1315 = vld [vmem:[#allocation3] sm:$0xf]
    %v1316 = vld [vmem:[#allocation4] sm:$0xf]
    %v1318 = vsel %vm320, %v1315, 0
    %1320 = vmatprep.subr.mxu0 0.0
    %1321 = vmatpush1.msra.mxu0 %v309
    %1322 = vmatprep.subr.mxu0 0.0
    %1323 = vmatpush1.msra.mxu0 %v310
    %1324 = vmatprep.subr.mxu0 0.0
    %1325 = vmatpush1.msra.mxu0 %v311
    %1326 = vmatprep.subr.mxu0 0.0
    %1327 = vmatpush1.msra.mxu0 %v312
    %1328 = vmatprep.subr.mxu0 0.0
    %1329 = vmatpush1.msra.mxu0 0.0
    %1330 = vmatprep.subr.mxu0 0.0
    %1331 = vmatpush1.msra.mxu0 0.0
    %1332 = vmatprep.subr.mxu0 0.0
    %1333 = vmatpush1.msra.mxu0 0.0
    %1334 = vmatprep.subr.mxu0 0.0
    %1335 = vmatpush1.msra.mxu0 0.0
    %1336 = vmatprep.subr.mxu0 0.0
    %1337 = vmatpush1.msra.mxu0 0.0
    %1338 = vmatprep.subr.mxu0 0.0
    %1339 = vmatpush1.msra.mxu0 0.0
    %1340 = vmatprep.subr.mxu0 0.0
    %1341 = vmatpush1.msra.mxu0 0.0
    %1342 = vmatprep.subr.mxu0 0.0
    %1343 = vmatpush1.msra.mxu0 0.0
    %1344 = vmatprep.subr.mxu0 0.0
    %1345 = vmatpush1.msra.mxu0 0.0
    %1346 = vmatprep.subr.mxu0 0.0
    %1347 = vmatpush1.msra.mxu0 0.0
    %1348 = vmatprep.subr.mxu0 0.0
    %1349 = vmatpush1.msra.mxu0 0.0
    %1350 = vmatprep.subr.mxu0 0.0
    %1351 = vmatpush1.msra.mxu0 0.0
    %1352 = vmatprep.subr.mxu0 0.0
    %1353 = vmatpush1.msra.mxu0 0.0
    %1354 = vmatprep.subr.mxu0 0.0
    %1355 = vmatpush1.msra.mxu0 0.0
    %1356 = vmatprep.subr.mxu0 0.0
    %1357 = vmatpush1.msra.mxu0 0.0
    %1358 = vmatprep.subr.mxu0 0.0
    %1359 = vmatpush1.msra.mxu0 0.0
    %1360 = vmatprep.subr.mxu0 0.0
    %1361 = vmatpush1.msra.mxu0 0.0
    %1362 = vmatprep.subr.mxu0 0.0
    %1363 = vmatpush1.msra.mxu0 0.0
    %1364 = vmatprep.subr.mxu0 0.0
    %1365 = vmatpush1.msra.mxu0 0.0
    %1366 = vmatprep.subr.mxu0 0.0
    %1367 = vmatpush1.msra.mxu0 0.0
    %1368 = vmatprep.subr.mxu0 0.0
    %1369 = vmatpush1.msra.mxu0 0.0
    %1370 = vmatprep.subr.mxu0 0.0
    %1371 = vmatpush1.msra.mxu0 0.0
    %1372 = vmatprep.subr.mxu0 0.0
    %1373 = vmatpush1.msra.mxu0 0.0
    %1374 = vmatprep.subr.mxu0 0.0
    %1375 = vmatpush1.msra.mxu0 0.0
    %1376 = vmatprep.subr.mxu0 0.0
    %1377 = vmatpush1.msra.mxu0 0.0
    %1378 = vmatprep.subr.mxu0 0.0
    %1379 = vmatpush1.msra.mxu0 0.0
    %1380 = vmatprep.subr.mxu0 0.0
    %1381 = vmatpush1.msra.mxu0 0.0
    %1382 = vmatprep.subr.mxu0 0.0
    %1383 = vmatpush1.msra.mxu0 0.0
    %1384 = vmatprep.mubr.f32.mxu0 0.0
    %1385 = vmatmul.mubr.f32.gmra.mrb[0].mxu0 %v1318
    %v1386 = vpop.f32.mrb[0].mxu0
    %v1387 = vadd.f32 0.0, %v1386
    %v1388 = vpop.f32.mrb[0].mxu0
    %1389 = vdwg.mxu0
    %v1390 = vrot.slane %v1315, 2
    %v1391 = vsel %vm320, %v1390, 0
    %1393 = vmatprep.subr.mxu0 0.0
    %1394 = vmatpush1.msra.mxu0 %v314
    %1395 = vmatprep.subr.mxu0 0.0
    %1396 = vmatpush1.msra.mxu0 %v315
    %1397 = vmatprep.subr.mxu0 0.0
    %1398 = vmatpush1.msra.mxu0 %v316
    %1399 = vmatprep.subr.mxu0 0.0
    %1400 = vmatpush1.msra.mxu0 %v317
    %1401 = vmatprep.subr.mxu0 0.0
    %1402 = vmatpush1.msra.mxu0 0.0
    %1403 = vmatprep.subr.mxu0 0.0
    %1404 = vmatpush1.msra.mxu0 0.0
    %1405 = vmatprep.subr.mxu0 0.0
    %1406 = vmatpush1.msra.mxu0 0.0
    %1407 = vmatprep.subr.mxu0 0.0
    %1408 = vmatpush1.msra.mxu0 0.0
    %1409 = vmatprep.subr.mxu0 0.0
    %1410 = vmatpush1.msra.mxu0 0.0
    %1411 = vmatprep.subr.mxu0 0.0
    %1412 = vmatpush1.msra.mxu0 0.0
    %1413 = vmatprep.subr.mxu0 0.0
    %1414 = vmatpush1.msra.mxu0 0.0
    %1415 = vmatprep.subr.mxu0 0.0
    %1416 = vmatpush1.msra.mxu0 0.0
    %1417 = vmatprep.subr.mxu0 0.0
    %1418 = vmatpush1.msra.mxu0 0.0
    %1419 = vmatprep.subr.mxu0 0.0
    %1420 = vmatpush1.msra.mxu0 0.0
    %1421 = vmatprep.subr.mxu0 0.0
    %1422 = vmatpush1.msra.mxu0 0.0
    %1423 = vmatprep.subr.mxu0 0.0
    %1424 = vmatpush1.msra.mxu0 0.0
    %1425 = vmatprep.subr.mxu0 0.0
    %1426 = vmatpush1.msra.mxu0 0.0
    %1427 = vmatprep.subr.mxu0 0.0
    %1428 = vmatpush1.msra.mxu0 0.0
    %1429 = vmatprep.subr.mxu0 0.0
    %1430 = vmatpush1.msra.mxu0 0.0
    %1431 = vmatprep.subr.mxu0 0.0
    %1432 = vmatpush1.msra.mxu0 0.0
    %1433 = vmatprep.subr.mxu0 0.0
    %1434 = vmatpush1.msra.mxu0 0.0
    %1435 = vmatprep.subr.mxu0 0.0
    %1436 = vmatpush1.msra.mxu0 0.0
    %1437 = vmatprep.subr.mxu0 0.0
    %1438 = vmatpush1.msra.mxu0 0.0
    %1439 = vmatprep.subr.mxu0 0.0
    %1440 = vmatpush1.msra.mxu0 0.0
    %1441 = vmatprep.subr.mxu0 0.0
    %1442 = vmatpush1.msra.mxu0 0.0
    %1443 = vmatprep.subr.mxu0 0.0
    %1444 = vmatpush1.msra.mxu0 0.0
    %1445 = vmatprep.subr.mxu0 0.0
    %1446 = vmatpush1.msra.mxu0 0.0
    %1447 = vmatprep.subr.mxu0 0.0
    %1448 = vmatpush1.msra.mxu0 0.0
    %1449 = vmatprep.subr.mxu0 0.0
    %1450 = vmatpush1.msra.mxu0 0.0
    %1451 = vmatprep.subr.mxu0 0.0
    %1452 = vmatpush1.msra.mxu0 0.0
    %1453 = vmatprep.subr.mxu0 0.0
    %1454 = vmatpush1.msra.mxu0 0.0
    %1455 = vmatprep.subr.mxu0 0.0
    %1456 = vmatpush1.msra.mxu0 0.0
    %1457 = vmatprep.mubr.f32.mxu0 0.0
    %1458 = vmatmul.mubr.f32.gmra.mrb[0].mxu0 %v1391
    %v1459 = vpop.f32.mrb[0].mxu0
    %v1460 = vadd.f32 0.0, %v1459
    %v1461 = vpop.f32.mrb[0].mxu0
    %1462 = vdwg.mxu0
    %v1463 = vld [vmem:[%s1216] sm:$0xf]
    %v1464 = vld [vmem:[%s1214] sm:$0xf]
    %v1465 = vadd.f32 %v1463, %v1387
    %v1467 = vrot.slane %v1464, 2
    %v1469 = vadd.f32 %v1467, %v1460
    %v1471 = vcombine.low %v1469, %v1469
    %v1473 = vunpack.c.l.s4 1983009808
    %v1474 = vunpack.c.0.s8 %v1473
    %v1475 = vlaneseq
    %v1476 = vshrl.u32 %v1475, 7
    %v1477 = vsub.s32 %v1474, %v1476
    %v1478 = vrot.slane %v1471, %v1477
    %v1480 = vsel %vm304, %v1465, %v1478
    %v1481 = vxor.u32 %v1480, 2147483648
    %v1482 = vmul.f32 %v1481, 1.442695
    %v1483 = vpow.pop %v1482
    %v1484 = vadd.f32 %v1483, 1.0
    %v1485 = vrcp.pop %v1484
    %v1486 = vmul.f32 1.0, %v1485
    %v1487 = vtanh.pop %v1480
    %1489 = vrot.lane.b32.xlu0 %v1316, 32
    %v1490 = vpop.permute.xlu0 %1489
    %v1492 = vmul.f32 %v1486, %v1490
    %1494 = vrot.lane.b32.xlu0 %v1487, 32
    %v1495 = vpop.permute.xlu0 %1494
    %v1497 = vmul.f32 %v1486, %v1495
    %1499 = vrot.lane.b32.xlu0 %v1497, 32
    %v1500 = vpop.permute.xlu0 %1499
    %v1502 = vadd.f32 %v1492, %v1500
    %v1503 = vtanh.pop %v1502
    %1505 = vrot.lane.b32.xlu0 %v1503, 32
    %v1506 = vpop.permute.xlu0 %1505
    %v1508 = vmul.f32 %v1486, %v1506
    %v1509 = vsel %vm308, 4, 3
    %vm1510 = vcmp.lt.s32.totalorder %v1509, %v305
    %v1511 = vsel %vm1510, 1, 0
    %1512 = vset.pattern.permute.xlu0 0
    %1513 = vperm.xlu0 %1512, %v1511
    %v1514 = vpop.permute.xlu0 %1513
    %vm1515 = vcmp.eq.s32.totalorder %v1514, 1
    %1516 = vrot.lane.b32.xlu0 %v1315, 64
    %v1517 = vpop.permute.xlu0 %1516
    %v1519 = vsel %vm1515, %v1508, %v1517
    %1521 = vrot.lane.b32.xlu0 %v1519, 64
    %v1522 = vpop.permute.xlu0 %1521
    %1524 = vst.msk [vmem:[#allocation3] sm:$0xf] %vm299, %v1522
    %v1525 = vsel %vm1515, %v1502, %v1490
    %1527 = vrot.lane.b32.xlu0 %v1525, 96
    %v1528 = vpop.permute.xlu0 %1527
    %1530 = vst.msk [vmem:[#allocation4] sm:$0xf] %vm299, %v1528
    %v1531 = vsel %vm1302, %v1508, 0.0
    %1533 = vrot.lane.b32.xlu0 %v1531, 64
    %v1534 = vpop.permute.xlu0 %1533
    %1536 = vst.msk [vmem:[%s1313] sm:$0x3] %vm547, %v1534
    %v1538 = vrot.slane %v1508, 2
    %1539 = vrot.lane.b32.xlu0 %v1538, 64
    %v1540 = vpop.permute.xlu0 %1539
    %v1542 = vsel %vm1289, %v1540, 0.0
    %1544 = vrot.lane.b32.xlu0 %v1542, 32
    %v1545 = vpop.permute.xlu0 %1544
    %1547 = vst.msk [vmem:[%s1295] sm:$0x3] %vm566, %v1545
    %v1548 = vld [vmem:[#allocation3] sm:$0xf]
    %v1549 = vld [vmem:[#allocation4] sm:$0xf]
    %v1551 = vsel %vm320, %v1548, 0
    %1553 = vmatprep.subr.mxu0 0.0
    %1554 = vmatpush1.msra.mxu0 %v309
    %1555 = vmatprep.subr.mxu0 0.0
    %1556 = vmatpush1.msra.mxu0 %v310
    %1557 = vmatprep.subr.mxu0 0.0
    %1558 = vmatpush1.msra.mxu0 %v311
    %1559 = vmatprep.subr.mxu0 0.0
    %1560 = vmatpush1.msra.mxu0 %v312
    %1561 = vmatprep.subr.mxu0 0.0
    %1562 = vmatpush1.msra.mxu0 0.0
    %1563 = vmatprep.subr.mxu0 0.0
    %1564 = vmatpush1.msra.mxu0 0.0
    %1565 = vmatprep.subr.mxu0 0.0
    %1566 = vmatpush1.msra.mxu0 0.0
    %1567 = vmatprep.subr.mxu0 0.0
    %1568 = vmatpush1.msra.mxu0 0.0
    %1569 = vmatprep.subr.mxu0 0.0
    %1570 = vmatpush1.msra.mxu0 0.0
    %1571 = vmatprep.subr.mxu0 0.0
    %1572 = vmatpush1.msra.mxu0 0.0
    %1573 = vmatprep.subr.mxu0 0.0
    %1574 = vmatpush1.msra.mxu0 0.0
    %1575 = vmatprep.subr.mxu0 0.0
    %1576 = vmatpush1.msra.mxu0 0.0
    %1577 = vmatprep.subr.mxu0 0.0
    %1578 = vmatpush1.msra.mxu0 0.0
    %1579 = vmatprep.subr.mxu0 0.0
    %1580 = vmatpush1.msra.mxu0 0.0
    %1581 = vmatprep.subr.mxu0 0.0
    %1582 = vmatpush1.msra.mxu0 0.0
    %1583 = vmatprep.subr.mxu0 0.0
    %1584 = vmatpush1.msra.mxu0 0.0
    %1585 = vmatprep.subr.mxu0 0.0
    %1586 = vmatpush1.msra.mxu0 0.0
    %1587 = vmatprep.subr.mxu0 0.0
    %1588 = vmatpush1.msra.mxu0 0.0
    %1589 = vmatprep.subr.mxu0 0.0
    %1590 = vmatpush1.msra.mxu0 0.0
    %1591 = vmatprep.subr.mxu0 0.0
    %1592 = vmatpush1.msra.mxu0 0.0
    %1593 = vmatprep.subr.mxu0 0.0
    %1594 = vmatpush1.msra.mxu0 0.0
    %1595 = vmatprep.subr.mxu0 0.0
    %1596 = vmatpush1.msra.mxu0 0.0
    %1597 = vmatprep.subr.mxu0 0.0
    %1598 = vmatpush1.msra.mxu0 0.0
    %1599 = vmatprep.subr.mxu0 0.0
    %1600 = vmatpush1.msra.mxu0 0.0
    %1601 = vmatprep.subr.mxu0 0.0
    %1602 = vmatpush1.msra.mxu0 0.0
    %1603 = vmatprep.subr.mxu0 0.0
    %1604 = vmatpush1.msra.mxu0 0.0
    %1605 = vmatprep.subr.mxu0 0.0
    %1606 = vmatpush1.msra.mxu0 0.0
    %1607 = vmatprep.subr.mxu0 0.0
    %1608 = vmatpush1.msra.mxu0 0.0
    %1609 = vmatprep.subr.mxu0 0.0
    %1610 = vmatpush1.msra.mxu0 0.0
    %1611 = vmatprep.subr.mxu0 0.0
    %1612 = vmatpush1.msra.mxu0 0.0
    %1613 = vmatprep.subr.mxu0 0.0
    %1614 = vmatpush1.msra.mxu0 0.0
    %1615 = vmatprep.subr.mxu0 0.0
    %1616 = vmatpush1.msra.mxu0 0.0
    %1617 = vmatprep.mubr.f32.mxu0 0.0
    %1618 = vmatmul.mubr.f32.gmra.mrb[0].mxu0 %v1551
    %v1619 = vpop.f32.mrb[0].mxu0
    %v1620 = vadd.f32 0.0, %v1619
    %v1621 = vpop.f32.mrb[0].mxu0
    %1622 = vdwg.mxu0
    %v1623 = vrot.slane %v1548, 2
    %v1624 = vsel %vm320, %v1623, 0
    %1626 = vmatprep.subr.mxu0 0.0
    %1627 = vmatpush1.msra.mxu0 %v314
    %1628 = vmatprep.subr.mxu0 0.0
    %1629 = vmatpush1.msra.mxu0 %v315
    %1630 = vmatprep.subr.mxu0 0.0
    %1631 = vmatpush1.msra.mxu0 %v316
    %1632 = vmatprep.subr.mxu0 0.0
    %1633 = vmatpush1.msra.mxu0 %v317
    %1634 = vmatprep.subr.mxu0 0.0
    %1635 = vmatpush1.msra.mxu0 0.0
    %1636 = vmatprep.subr.mxu0 0.0
    %1637 = vmatpush1.msra.mxu0 0.0
    %1638 = vmatprep.subr.mxu0 0.0
    %1639 = vmatpush1.msra.mxu0 0.0
    %1640 = vmatprep.subr.mxu0 0.0
    %1641 = vmatpush1.msra.mxu0 0.0
    %1642 = vmatprep.subr.mxu0 0.0
    %1643 = vmatpush1.msra.mxu0 0.0
    %1644 = vmatprep.subr.mxu0 0.0
    %1645 = vmatpush1.msra.mxu0 0.0
    %1646 = vmatprep.subr.mxu0 0.0
    %1647 = vmatpush1.msra.mxu0 0.0
    %1648 = vmatprep.subr.mxu0 0.0
    %1649 = vmatpush1.msra.mxu0 0.0
    %1650 = vmatprep.subr.mxu0 0.0
    %1651 = vmatpush1.msra.mxu0 0.0
    %1652 = vmatprep.subr.mxu0 0.0
    %1653 = vmatpush1.msra.mxu0 0.0
    %1654 = vmatprep.subr.mxu0 0.0
    %1655 = vmatpush1.msra.mxu0 0.0
    %1656 = vmatprep.subr.mxu0 0.0
    %1657 = vmatpush1.msra.mxu0 0.0
    %1658 = vmatprep.subr.mxu0 0.0
    %1659 = vmatpush1.msra.mxu0 0.0
    %1660 = vmatprep.subr.mxu0 0.0
    %1661 = vmatpush1.msra.mxu0 0.0
    %1662 = vmatprep.subr.mxu0 0.0
    %1663 = vmatpush1.msra.mxu0 0.0
    %1664 = vmatprep.subr.mxu0 0.0
    %1665 = vmatpush1.msra.mxu0 0.0
    %1666 = vmatprep.subr.mxu0 0.0
    %1667 = vmatpush1.msra.mxu0 0.0
    %1668 = vmatprep.subr.mxu0 0.0
    %1669 = vmatpush1.msra.mxu0 0.0
    %1670 = vmatprep.subr.mxu0 0.0
    %1671 = vmatpush1.msra.mxu0 0.0
    %1672 = vmatprep.subr.mxu0 0.0
    %1673 = vmatpush1.msra.mxu0 0.0
    %1674 = vmatprep.subr.mxu0 0.0
    %1675 = vmatpush1.msra.mxu0 0.0
    %1676 = vmatprep.subr.mxu0 0.0
    %1677 = vmatpush1.msra.mxu0 0.0
    %1678 = vmatprep.subr.mxu0 0.0
    %1679 = vmatpush1.msra.mxu0 0.0
    %1680 = vmatprep.subr.mxu0 0.0
    %1681 = vmatpush1.msra.mxu0 0.0
    %1682 = vmatprep.subr.mxu0 0.0
    %1683 = vmatpush1.msra.mxu0 0.0
    %1684 = vmatprep.subr.mxu0 0.0
    %1685 = vmatpush1.msra.mxu0 0.0
    %1686 = vmatprep.subr.mxu0 0.0
    %1687 = vmatpush1.msra.mxu0 0.0
    %1688 = vmatprep.subr.mxu0 0.0
    %1689 = vmatpush1.msra.mxu0 0.0
    %1690 = vmatprep.mubr.f32.mxu0 0.0
    %1691 = vmatmul.mubr.f32.gmra.mrb[0].mxu0 %v1624
    %v1692 = vpop.f32.mrb[0].mxu0
    %v1693 = vadd.f32 0.0, %v1692
    %v1694 = vpop.f32.mrb[0].mxu0
    %1695 = vdwg.mxu0
    %v1696 = vld [vmem:[%s967] sm:$0xf]
    %v1697 = vld [vmem:[%s965] sm:$0xf]
    %v1698 = vadd.f32 %v1696, %v1620
    %v1700 = vrot.slane %v1697, 2
    %v1702 = vadd.f32 %v1700, %v1693
    %v1704 = vcombine.low %v1702, %v1702
    %v1706 = vunpack.c.l.s4 1983009808
    %v1707 = vunpack.c.0.s8 %v1706
    %v1708 = vlaneseq
    %v1709 = vshrl.u32 %v1708, 7
    %v1710 = vsub.s32 %v1707, %v1709
    %v1711 = vrot.slane %v1704, %v1710
    %v1713 = vsel %vm304, %v1698, %v1711
    %v1714 = vxor.u32 %v1713, 2147483648
    %v1715 = vmul.f32 %v1714, 1.442695
    %v1716 = vpow.pop %v1715
    %v1717 = vadd.f32 %v1716, 1.0
    %v1718 = vrcp.pop %v1717
    %v1719 = vmul.f32 1.0, %v1718
    %v1720 = vtanh.pop %v1713
    %1722 = vrot.lane.b32.xlu0 %v1549, 32
    %v1723 = vpop.permute.xlu0 %1722
    %v1725 = vmul.f32 %v1719, %v1723
    %1727 = vrot.lane.b32.xlu0 %v1720, 32
    %v1728 = vpop.permute.xlu0 %1727
    %v1730 = vmul.f32 %v1719, %v1728
    %1732 = vrot.lane.b32.xlu0 %v1730, 32
    %v1733 = vpop.permute.xlu0 %1732
    %v1735 = vadd.f32 %v1725, %v1733
    %v1736 = vtanh.pop %v1735
    %1738 = vrot.lane.b32.xlu0 %v1736, 32
    %v1739 = vpop.permute.xlu0 %1738
    %v1741 = vmul.f32 %v1719, %v1739
    %v1742 = vsel %vm308, 5, 2
    %vm1743 = vcmp.lt.s32.totalorder %v1742, %v305
    %v1744 = vsel %vm1743, 1, 0
    %1745 = vset.pattern.permute.xlu0 0
    %1746 = vperm.xlu0 %1745, %v1744
    %v1747 = vpop.permute.xlu0 %1746
    %vm1748 = vcmp.eq.s32.totalorder %v1747, 1
    %1749 = vrot.lane.b32.xlu0 %v1548, 64
    %v1750 = vpop.permute.xlu0 %1749
    %v1752 = vsel %vm1748, %v1741, %v1750
    %1754 = vrot.lane.b32.xlu0 %v1752, 64
    %v1755 = vpop.permute.xlu0 %1754
    %1757 = vst.msk [vmem:[#allocation3] sm:$0xf] %vm299, %v1755
    %v1758 = vsel %vm1748, %v1735, %v1723
    %1760 = vrot.lane.b32.xlu0 %v1758, 96
    %v1761 = vpop.permute.xlu0 %1760
    %1763 = vst.msk [vmem:[#allocation4] sm:$0xf] %vm299, %v1761
    %v1764 = vsel %vm1053, %v1741, 0.0
    %1766 = vrot.lane.b32.xlu0 %v1764, 64
    %v1767 = vpop.permute.xlu0 %1766
    %1769 = vst.msk [vmem:[%s1064] sm:$0x3] %vm547, %v1767
    %v1771 = vrot.slane %v1741, 2
    %1772 = vrot.lane.b32.xlu0 %v1771, 64
    %v1773 = vpop.permute.xlu0 %1772
    %v1775 = vsel %vm1040, %v1773, 0.0
    %1777 = vrot.lane.b32.xlu0 %v1775, 32
    %v1778 = vpop.permute.xlu0 %1777
    %1780 = vst.msk [vmem:[%s1046] sm:$0x3] %vm566, %v1778
    %v1781 = vld [vmem:[#allocation3] sm:$0xf]
    %v1782 = vld [vmem:[#allocation4] sm:$0xf]
    %v1784 = vsel %vm320, %v1781, 0
    %1786 = vmatprep.subr.mxu0 0.0
    %1787 = vmatpush1.msra.mxu0 %v309
    %1788 = vmatprep.subr.mxu0 0.0
    %1789 = vmatpush1.msra.mxu0 %v310
    %1790 = vmatprep.subr.mxu0 0.0
    %1791 = vmatpush1.msra.mxu0 %v311
    %1792 = vmatprep.subr.mxu0 0.0
    %1793 = vmatpush1.msra.mxu0 %v312
    %1794 = vmatprep.subr.mxu0 0.0
    %1795 = vmatpush1.msra.mxu0 0.0
    %1796 = vmatprep.subr.mxu0 0.0
    %1797 = vmatpush1.msra.mxu0 0.0
    %1798 = vmatprep.subr.mxu0 0.0
    %1799 = vmatpush1.msra.mxu0 0.0
    %1800 = vmatprep.subr.mxu0 0.0
    %1801 = vmatpush1.msra.mxu0 0.0
    %1802 = vmatprep.subr.mxu0 0.0
    %1803 = vmatpush1.msra.mxu0 0.0
    %1804 = vmatprep.subr.mxu0 0.0
    %1805 = vmatpush1.msra.mxu0 0.0
    %1806 = vmatprep.subr.mxu0 0.0
    %1807 = vmatpush1.msra.mxu0 0.0
    %1808 = vmatprep.subr.mxu0 0.0
    %1809 = vmatpush1.msra.mxu0 0.0
    %1810 = vmatprep.subr.mxu0 0.0
    %1811 = vmatpush1.msra.mxu0 0.0
    %1812 = vmatprep.subr.mxu0 0.0
    %1813 = vmatpush1.msra.mxu0 0.0
    %1814 = vmatprep.subr.mxu0 0.0
    %1815 = vmatpush1.msra.mxu0 0.0
    %1816 = vmatprep.subr.mxu0 0.0
    %1817 = vmatpush1.msra.mxu0 0.0
    %1818 = vmatprep.subr.mxu0 0.0
    %1819 = vmatpush1.msra.mxu0 0.0
    %1820 = vmatprep.subr.mxu0 0.0
    %1821 = vmatpush1.msra.mxu0 0.0
    %1822 = vmatprep.subr.mxu0 0.0
    %1823 = vmatpush1.msra.mxu0 0.0
    %1824 = vmatprep.subr.mxu0 0.0
    %1825 = vmatpush1.msra.mxu0 0.0
    %1826 = vmatprep.subr.mxu0 0.0
    %1827 = vmatpush1.msra.mxu0 0.0
    %1828 = vmatprep.subr.mxu0 0.0
    %1829 = vmatpush1.msra.mxu0 0.0
    %1830 = vmatprep.subr.mxu0 0.0
    %1831 = vmatpush1.msra.mxu0 0.0
    %1832 = vmatprep.subr.mxu0 0.0
    %1833 = vmatpush1.msra.mxu0 0.0
    %1834 = vmatprep.subr.mxu0 0.0
    %1835 = vmatpush1.msra.mxu0 0.0
    %1836 = vmatprep.subr.mxu0 0.0
    %1837 = vmatpush1.msra.mxu0 0.0
    %1838 = vmatprep.subr.mxu0 0.0
    %1839 = vmatpush1.msra.mxu0 0.0
    %1840 = vmatprep.subr.mxu0 0.0
    %1841 = vmatpush1.msra.mxu0 0.0
    %1842 = vmatprep.subr.mxu0 0.0
    %1843 = vmatpush1.msra.mxu0 0.0
    %1844 = vmatprep.subr.mxu0 0.0
    %1845 = vmatpush1.msra.mxu0 0.0
    %1846 = vmatprep.subr.mxu0 0.0
    %1847 = vmatpush1.msra.mxu0 0.0
    %1848 = vmatprep.subr.mxu0 0.0
    %1849 = vmatpush1.msra.mxu0 0.0
    %1850 = vmatprep.mubr.f32.mxu0 0.0
    %1851 = vmatmul.mubr.f32.gmra.mrb[0].mxu0 %v1784
    %v1852 = vpop.f32.mrb[0].mxu0
    %v1853 = vadd.f32 0.0, %v1852
    %v1854 = vpop.f32.mrb[0].mxu0
    %1855 = vdwg.mxu0
    %v1856 = vrot.slane %v1781, 2
    %v1857 = vsel %vm320, %v1856, 0
    %1859 = vmatprep.subr.mxu0 0.0
    %1860 = vmatpush1.msra.mxu0 %v314
    %1861 = vmatprep.subr.mxu0 0.0
    %1862 = vmatpush1.msra.mxu0 %v315
    %1863 = vmatprep.subr.mxu0 0.0
    %1864 = vmatpush1.msra.mxu0 %v316
    %1865 = vmatprep.subr.mxu0 0.0
    %1866 = vmatpush1.msra.mxu0 %v317
    %1867 = vmatprep.subr.mxu0 0.0
    %1868 = vmatpush1.msra.mxu0 0.0
    %1869 = vmatprep.subr.mxu0 0.0
    %1870 = vmatpush1.msra.mxu0 0.0
    %1871 = vmatprep.subr.mxu0 0.0
    %1872 = vmatpush1.msra.mxu0 0.0
    %1873 = vmatprep.subr.mxu0 0.0
    %1874 = vmatpush1.msra.mxu0 0.0
    %1875 = vmatprep.subr.mxu0 0.0
    %1876 = vmatpush1.msra.mxu0 0.0
    %1877 = vmatprep.subr.mxu0 0.0
    %1878 = vmatpush1.msra.mxu0 0.0
    %1879 = vmatprep.subr.mxu0 0.0
    %1880 = vmatpush1.msra.mxu0 0.0
    %1881 = vmatprep.subr.mxu0 0.0
    %1882 = vmatpush1.msra.mxu0 0.0
    %1883 = vmatprep.subr.mxu0 0.0
    %1884 = vmatpush1.msra.mxu0 0.0
    %1885 = vmatprep.subr.mxu0 0.0
    %1886 = vmatpush1.msra.mxu0 0.0
    %1887 = vmatprep.subr.mxu0 0.0
    %1888 = vmatpush1.msra.mxu0 0.0
    %1889 = vmatprep.subr.mxu0 0.0
    %1890 = vmatpush1.msra.mxu0 0.0
    %1891 = vmatprep.subr.mxu0 0.0
    %1892 = vmatpush1.msra.mxu0 0.0
    %1893 = vmatprep.subr.mxu0 0.0
    %1894 = vmatpush1.msra.mxu0 0.0
    %1895 = vmatprep.subr.mxu0 0.0
    %1896 = vmatpush1.msra.mxu0 0.0
    %1897 = vmatprep.subr.mxu0 0.0
    %1898 = vmatpush1.msra.mxu0 0.0
    %1899 = vmatprep.subr.mxu0 0.0
    %1900 = vmatpush1.msra.mxu0 0.0
    %1901 = vmatprep.subr.mxu0 0.0
    %1902 = vmatpush1.msra.mxu0 0.0
    %1903 = vmatprep.subr.mxu0 0.0
    %1904 = vmatpush1.msra.mxu0 0.0
    %1905 = vmatprep.subr.mxu0 0.0
    %1906 = vmatpush1.msra.mxu0 0.0
    %1907 = vmatprep.subr.mxu0 0.0
    %1908 = vmatpush1.msra.mxu0 0.0
    %1909 = vmatprep.subr.mxu0 0.0
    %1910 = vmatpush1.msra.mxu0 0.0
    %1911 = vmatprep.subr.mxu0 0.0
    %1912 = vmatpush1.msra.mxu0 0.0
    %1913 = vmatprep.subr.mxu0 0.0
    %1914 = vmatpush1.msra.mxu0 0.0
    %1915 = vmatprep.subr.mxu0 0.0
    %1916 = vmatpush1.msra.mxu0 0.0
    %1917 = vmatprep.subr.mxu0 0.0
    %1918 = vmatpush1.msra.mxu0 0.0
    %1919 = vmatprep.subr.mxu0 0.0
    %1920 = vmatpush1.msra.mxu0 0.0
    %1921 = vmatprep.subr.mxu0 0.0
    %1922 = vmatpush1.msra.mxu0 0.0
    %1923 = vmatprep.mubr.f32.mxu0 0.0
    %1924 = vmatmul.mubr.f32.gmra.mrb[0].mxu0 %v1857
    %v1925 = vpop.f32.mrb[0].mxu0
    %v1926 = vadd.f32 0.0, %v1925
    %v1927 = vpop.f32.mrb[0].mxu0
    %1928 = vdwg.mxu0
    %v1929 = vld [vmem:[%s718] sm:$0xf]
    %v1930 = vld [vmem:[%s716] sm:$0xf]
    %v1931 = vadd.f32 %v1929, %v1853
    %v1933 = vrot.slane %v1930, 2
    %v1935 = vadd.f32 %v1933, %v1926
    %v1937 = vcombine.low %v1935, %v1935
    %v1939 = vunpack.c.l.s4 1983009808
    %v1940 = vunpack.c.0.s8 %v1939
    %v1941 = vlaneseq
    %v1942 = vshrl.u32 %v1941, 7
    %v1943 = vsub.s32 %v1940, %v1942
    %v1944 = vrot.slane %v1937, %v1943
    %v1946 = vsel %vm304, %v1931, %v1944
    %v1947 = vxor.u32 %v1946, 2147483648
    %v1948 = vmul.f32 %v1947, 1.442695
    %v1949 = vpow.pop %v1948
    %v1950 = vadd.f32 %v1949, 1.0
    %v1951 = vrcp.pop %v1950
    %v1952 = vmul.f32 1.0, %v1951
    %v1953 = vtanh.pop %v1946
    %1955 = vrot.lane.b32.xlu0 %v1782, 32
    %v1956 = vpop.permute.xlu0 %1955
    %v1958 = vmul.f32 %v1952, %v1956
    %1960 = vrot.lane.b32.xlu0 %v1953, 32
    %v1961 = vpop.permute.xlu0 %1960
    %v1963 = vmul.f32 %v1952, %v1961
    %1965 = vrot.lane.b32.xlu0 %v1963, 32
    %v1966 = vpop.permute.xlu0 %1965
    %v1968 = vadd.f32 %v1958, %v1966
    %v1969 = vtanh.pop %v1968
    %1971 = vrot.lane.b32.xlu0 %v1969, 32
    %v1972 = vpop.permute.xlu0 %1971
    %v1974 = vmul.f32 %v1952, %v1972
    %v1975 = vsel %vm308, 6, 1
    %vm1976 = vcmp.lt.s32.totalorder %v1975, %v305
    %v1977 = vsel %vm1976, 1, 0
    %1978 = vset.pattern.permute.xlu0 0
    %1979 = vperm.xlu0 %1978, %v1977
    %v1980 = vpop.permute.xlu0 %1979
    %vm1981 = vcmp.eq.s32.totalorder %v1980, 1
    %1982 = vrot.lane.b32.xlu0 %v1781, 64
    %v1983 = vpop.permute.xlu0 %1982
    %v1985 = vsel %vm1981, %v1974, %v1983
    %1987 = vrot.lane.b32.xlu0 %v1985, 64
    %v1988 = vpop.permute.xlu0 %1987
    %1990 = vst.msk [vmem:[#allocation3] sm:$0xf] %vm299, %v1988
    %v1991 = vsel %vm1981, %v1968, %v1956
    %1993 = vrot.lane.b32.xlu0 %v1991, 96
    %v1994 = vpop.permute.xlu0 %1993
    %1996 = vst.msk [vmem:[#allocation4] sm:$0xf] %vm299, %v1994
    %v1997 = vsel %vm804, %v1974, 0.0
    %1999 = vrot.lane.b32.xlu0 %v1997, 64
    %v2000 = vpop.permute.xlu0 %1999
    %2002 = vst.msk [vmem:[%s815] sm:$0x3] %vm547, %v2000
    %v2004 = vrot.slane %v1974, 2
    %2005 = vrot.lane.b32.xlu0 %v2004, 64
    %v2006 = vpop.permute.xlu0 %2005
    %v2008 = vsel %vm791, %v2006, 0.0
    %2010 = vrot.lane.b32.xlu0 %v2008, 32
    %v2011 = vpop.permute.xlu0 %2010
    %2013 = vst.msk [vmem:[%s797] sm:$0x3] %vm566, %v2011
    %v2014 = vld [vmem:[#allocation3] sm:$0xf]
    %v2015 = vld [vmem:[#allocation4] sm:$0xf]
    %v2017 = vsel %vm320, %v2014, 0
    %2019 = vmatprep.subr.mxu0 0.0
    %2020 = vmatpush1.msra.mxu0 %v309
    %2021 = vmatprep.subr.mxu0 0.0
    %2022 = vmatpush1.msra.mxu0 %v310
    %2023 = vmatprep.subr.mxu0 0.0
    %2024 = vmatpush1.msra.mxu0 %v311
    %2025 = vmatprep.subr.mxu0 0.0
    %2026 = vmatpush1.msra.mxu0 %v312
    %2027 = vmatprep.subr.mxu0 0.0
    %2028 = vmatpush1.msra.mxu0 0.0
    %2029 = vmatprep.subr.mxu0 0.0
    %2030 = vmatpush1.msra.mxu0 0.0
    %2031 = vmatprep.subr.mxu0 0.0
    %2032 = vmatpush1.msra.mxu0 0.0
    %2033 = vmatprep.subr.mxu0 0.0
    %2034 = vmatpush1.msra.mxu0 0.0
    %2035 = vmatprep.subr.mxu0 0.0
    %2036 = vmatpush1.msra.mxu0 0.0
    %2037 = vmatprep.subr.mxu0 0.0
    %2038 = vmatpush1.msra.mxu0 0.0
    %2039 = vmatprep.subr.mxu0 0.0
    %2040 = vmatpush1.msra.mxu0 0.0
    %2041 = vmatprep.subr.mxu0 0.0
    %2042 = vmatpush1.msra.mxu0 0.0
    %2043 = vmatprep.subr.mxu0 0.0
    %2044 = vmatpush1.msra.mxu0 0.0
    %2045 = vmatprep.subr.mxu0 0.0
    %2046 = vmatpush1.msra.mxu0 0.0
    %2047 = vmatprep.subr.mxu0 0.0
    %2048 = vmatpush1.msra.mxu0 0.0
    %2049 = vmatprep.subr.mxu0 0.0
    %2050 = vmatpush1.msra.mxu0 0.0
    %2051 = vmatprep.subr.mxu0 0.0
    %2052 = vmatpush1.msra.mxu0 0.0
    %2053 = vmatprep.subr.mxu0 0.0
    %2054 = vmatpush1.msra.mxu0 0.0
    %2055 = vmatprep.subr.mxu0 0.0
    %2056 = vmatpush1.msra.mxu0 0.0
    %2057 = vmatprep.subr.mxu0 0.0
    %2058 = vmatpush1.msra.mxu0 0.0
    %2059 = vmatprep.subr.mxu0 0.0
    %2060 = vmatpush1.msra.mxu0 0.0
    %2061 = vmatprep.subr.mxu0 0.0
    %2062 = vmatpush1.msra.mxu0 0.0
    %2063 = vmatprep.subr.mxu0 0.0
    %2064 = vmatpush1.msra.mxu0 0.0
    %2065 = vmatprep.subr.mxu0 0.0
    %2066 = vmatpush1.msra.mxu0 0.0
    %2067 = vmatprep.subr.mxu0 0.0
    %2068 = vmatpush1.msra.mxu0 0.0
    %2069 = vmatprep.subr.mxu0 0.0
    %2070 = vmatpush1.msra.mxu0 0.0
    %2071 = vmatprep.subr.mxu0 0.0
    %2072 = vmatpush1.msra.mxu0 0.0
    %2073 = vmatprep.subr.mxu0 0.0
    %2074 = vmatpush1.msra.mxu0 0.0
    %2075 = vmatprep.subr.mxu0 0.0
    %2076 = vmatpush1.msra.mxu0 0.0
    %2077 = vmatprep.subr.mxu0 0.0
    %2078 = vmatpush1.msra.mxu0 0.0
    %2079 = vmatprep.subr.mxu0 0.0
    %2080 = vmatpush1.msra.mxu0 0.0
    %2081 = vmatprep.subr.mxu0 0.0
    %2082 = vmatpush1.msra.mxu0 0.0
    %2083 = vmatprep.mubr.f32.mxu0 0.0
    %2084 = vmatmul.mubr.f32.gmra.mrb[0].mxu0 %v2017
    %v2085 = vpop.f32.mrb[0].mxu0
    %v2086 = vadd.f32 0.0, %v2085
    %v2087 = vpop.f32.mrb[0].mxu0
    %2088 = vdwg.mxu0
    %v2089 = vrot.slane %v2014, 2
    %v2090 = vsel %vm320, %v2089, 0
    %2092 = vmatprep.subr.mxu0 0.0
    %2093 = vmatpush1.msra.mxu0 %v314
    %2094 = vmatprep.subr.mxu0 0.0
    %2095 = vmatpush1.msra.mxu0 %v315
    %2096 = vmatprep.subr.mxu0 0.0
    %2097 = vmatpush1.msra.mxu0 %v316
    %2098 = vmatprep.subr.mxu0 0.0
    %2099 = vmatpush1.msra.mxu0 %v317
    %2100 = vmatprep.subr.mxu0 0.0
    %2101 = vmatpush1.msra.mxu0 0.0
    %2102 = vmatprep.subr.mxu0 0.0
    %2103 = vmatpush1.msra.mxu0 0.0
    %2104 = vmatprep.subr.mxu0 0.0
    %2105 = vmatpush1.msra.mxu0 0.0
    %2106 = vmatprep.subr.mxu0 0.0
    %2107 = vmatpush1.msra.mxu0 0.0
    %2108 = vmatprep.subr.mxu0 0.0
    %2109 = vmatpush1.msra.mxu0 0.0
    %2110 = vmatprep.subr.mxu0 0.0
    %2111 = vmatpush1.msra.mxu0 0.0
    %2112 = vmatprep.subr.mxu0 0.0
    %2113 = vmatpush1.msra.mxu0 0.0
    %2114 = vmatprep.subr.mxu0 0.0
    %2115 = vmatpush1.msra.mxu0 0.0
    %2116 = vmatprep.subr.mxu0 0.0
    %2117 = vmatpush1.msra.mxu0 0.0
    %2118 = vmatprep.subr.mxu0 0.0
    %2119 = vmatpush1.msra.mxu0 0.0
    %2120 = vmatprep.subr.mxu0 0.0
    %2121 = vmatpush1.msra.mxu0 0.0
    %2122 = vmatprep.subr.mxu0 0.0
    %2123 = vmatpush1.msra.mxu0 0.0
    %2124 = vmatprep.subr.mxu0 0.0
    %2125 = vmatpush1.msra.mxu0 0.0
    %2126 = vmatprep.subr.mxu0 0.0
    %2127 = vmatpush1.msra.mxu0 0.0
    %2128 = vmatprep.subr.mxu0 0.0
    %2129 = vmatpush1.msra.mxu0 0.0
    %2130 = vmatprep.subr.mxu0 0.0
    %2131 = vmatpush1.msra.mxu0 0.0
    %2132 = vmatprep.subr.mxu0 0.0
    %2133 = vmatpush1.msra.mxu0 0.0
    %2134 = vmatprep.subr.mxu0 0.0
    %2135 = vmatpush1.msra.mxu0 0.0
    %2136 = vmatprep.subr.mxu0 0.0
    %2137 = vmatpush1.msra.mxu0 0.0
    %2138 = vmatprep.subr.mxu0 0.0
    %2139 = vmatpush1.msra.mxu0 0.0
    %2140 = vmatprep.subr.mxu0 0.0
    %2141 = vmatpush1.msra.mxu0 0.0
    %2142 = vmatprep.subr.mxu0 0.0
    %2143 = vmatpush1.msra.mxu0 0.0
    %2144 = vmatprep.subr.mxu0 0.0
    %2145 = vmatpush1.msra.mxu0 0.0
    %2146 = vmatprep.subr.mxu0 0.0
    %2147 = vmatpush1.msra.mxu0 0.0
    %2148 = vmatprep.subr.mxu0 0.0
    %2149 = vmatpush1.msra.mxu0 0.0
    %2150 = vmatprep.subr.mxu0 0.0
    %2151 = vmatpush1.msra.mxu0 0.0
    %2152 = vmatprep.subr.mxu0 0.0
    %2153 = vmatpush1.msra.mxu0 0.0
    %2154 = vmatprep.subr.mxu0 0.0
    %2155 = vmatpush1.msra.mxu0 0.0
    %2156 = vmatprep.mubr.f32.mxu0 0.0
    %2157 = vmatmul.mubr.f32.gmra.mrb[0].mxu0 %v2090
    %v2158 = vpop.f32.mrb[0].mxu0
    %v2159 = vadd.f32 0.0, %v2158
    %v2160 = vpop.f32.mrb[0].mxu0
    %2161 = vdwg.mxu0
    %v2162 = vld [vmem:[%s468] sm:$0xf]
    %v2163 = vld [vmem:[#allocation2] sm:$0xf]
    %v2164 = vadd.f32 %v2162, %v2086
    %v2166 = vrot.slane %v2163, 2
    %v2168 = vadd.f32 %v2166, %v2159
    %v2170 = vcombine.low %v2168, %v2168
    %v2172 = vunpack.c.l.s4 1983009808
    %v2173 = vunpack.c.0.s8 %v2172
    %v2174 = vlaneseq
    %v2175 = vshrl.u32 %v2174, 7
    %v2176 = vsub.s32 %v2173, %v2175
    %v2177 = vrot.slane %v2170, %v2176
    %v2179 = vsel %vm304, %v2164, %v2177
    %v2180 = vxor.u32 %v2179, 2147483648
    %v2181 = vmul.f32 %v2180, 1.442695
    %v2182 = vpow.pop %v2181
    %v2183 = vadd.f32 %v2182, 1.0
    %v2184 = vrcp.pop %v2183
    %v2185 = vmul.f32 1.0, %v2184
    %v2186 = vtanh.pop %v2179
    %2188 = vrot.lane.b32.xlu0 %v2015, 32
    %v2189 = vpop.permute.xlu0 %2188
    %v2191 = vmul.f32 %v2185, %v2189
    %2193 = vrot.lane.b32.xlu0 %v2186, 32
    %v2194 = vpop.permute.xlu0 %2193
    %v2196 = vmul.f32 %v2185, %v2194
    %2198 = vrot.lane.b32.xlu0 %v2196, 32
    %v2199 = vpop.permute.xlu0 %2198
    %v2201 = vadd.f32 %v2191, %v2199
    %v2202 = vtanh.pop %v2201
    %2204 = vrot.lane.b32.xlu0 %v2202, 32
    %v2205 = vpop.permute.xlu0 %2204
    %v2207 = vmul.f32 %v2185, %v2205
    %v2208 = vsel %vm308, 7, 0
    %vm2209 = vcmp.lt.s32.totalorder %v2208, %v305
    %v2210 = vsel %vm2209, 1, 0
    %2211 = vset.pattern.permute.xlu0 0
    %2212 = vperm.xlu0 %2211, %v2210
    %v2213 = vpop.permute.xlu0 %2212
    %vm2214 = vcmp.eq.s32.totalorder %v2213, 1
    %2215 = vrot.lane.b32.xlu0 %v2014, 64
    %v2216 = vpop.permute.xlu0 %2215
    %v2218 = vsel %vm2214, %v2207, %v2216
    %2220 = vrot.lane.b32.xlu0 %v2218, 64
    %v2221 = vpop.permute.xlu0 %2220
    %2223 = vst.msk [vmem:[#allocation3] sm:$0xf] %vm299, %v2221
    %v2224 = vsel %vm2214, %v2201, %v2189
    %2226 = vrot.lane.b32.xlu0 %v2224, 96
    %v2227 = vpop.permute.xlu0 %2226
    %2229 = vst.msk [vmem:[#allocation4] sm:$0xf] %vm299, %v2227
    %v2230 = vsel %vm554, %v2207, 0.0
    %2232 = vrot.lane.b32.xlu0 %v2230, 64
    %v2233 = vpop.permute.xlu0 %2232
    %2235 = vst.msk [vmem:[%s565] sm:$0x3] %vm547, %v2233
    %v2237 = vrot.slane %v2207, 2
    %2238 = vrot.lane.b32.xlu0 %v2237, 64
    %v2239 = vpop.permute.xlu0 %2238
    %v2241 = vsel %vm541, %v2239, 0.0
    %2243 = vrot.lane.b32.xlu0 %v2241, 32
    %v2244 = vpop.permute.xlu0 %2243
    %2246 = vst.msk [vmem:[#allocation11] sm:$0x3] %vm566, %v2244
    // Predicated region
    $region34: #{tpu_custom_call.1} parent=1 // pred_check
      _
    $region35: #{tpu_custom_call.1} parent=1 // pred_check_branch
      %2248 = sbr.rel (0) target = $region37
    $region36: #{tpu_custom_call.1} parent=1 // pred_region
      %s2250 = ssub.s32 256, 256
      %2251 = vsyncadd [#allocation7], %s2250
      %s2252 = sshll.u32 [#allocation11], 4
      %s2253 = int_to_ptr.vmem [resolvable:$true] %s2252
      %2258 = dma.vmem_to_hbm [thread:$0]  %s2253, 256, %s5, [#allocation7], 32, 32, 2
    $region37: #{tpu_custom_call.1} parent=1 // pred_fallthru
      _
    // Predicated region
    $region38: #{tpu_custom_call.1} parent=1 // pred_check
      _
    $region39: #{tpu_custom_call.1} parent=1 // pred_check_branch
      %2260 = sbr.rel (0) target = $region41
    $region40: #{tpu_custom_call.1} parent=1 // pred_region
      %2261 = dma.done [#allocation7], 256
    $region41: #{tpu_custom_call.1} parent=1 // pred_fallthru
      _
    %2262 = vsyncpa [#allocation6], 1
    %2263 = vsyncpa [#allocation9], 1
    %2264 = vsyncpa [#allocation7], 1

</llo_original>
